<compile_context>
chip_gen: v7x
topology: tpu7x:2x2x1
jax: 0.10.0
libtpu: 0.0.40
codegen_flags: <defaults>
</compile_context>

<pallas_src>
import jax
import jax.numpy as jnp
from jax.experimental import pallas as pl
from jax.experimental.pallas import tpu as pltpu

INPUT_SIZE = 3
HIDDEN = 100
OUTPUT = 3

IN_PAD = 128
H_PAD = 128
OUT_PAD = 128
G_PAD = 4 * H_PAD          # 512  (gate pre-activations per layer)
W_IN_COLS = G_PAD + OUT_PAD  # 640  (W_ih0 | W_lin packed along lanes)

# PyTorch gate row order is (i, f, g, o); kernel uses (i, f, o, g) so one
# sigmoid covers a contiguous 3*H_PAD slab and tanh covers the trailing H_PAD.
GATE_ORDER = (0, 1, 3, 2)


# ----------------------------- Pallas kernel ------------------------------ #
def lstm_kernel(x_ref, w_in_ref, w_step_ref, bias_ref, hc_ref, out_ref, gx_ref):
    T = x_ref.shape[0]  # static

    b0 = bias_ref[0:1, :]                      # (1, G_PAD) f32
    b1 = bias_ref[1:2, :]                      # (1, G_PAD) f32

    # ---- Batched layer-0 input projection: one (T,128)x(128,512) MXU issue.
    x_bf = x_ref[...].astype(jnp.bfloat16)
    gx_ref[...] = (jnp.dot(x_bf, w_in_ref[:, :G_PAD],
                           preferred_element_type=jnp.float32) + b0)

    def activate(gates, c):
        # Gate layout (i, f, o, g): one contiguous sigmoid + one tanh region.
        sfo = jax.nn.sigmoid(gates[:, :3 * H_PAD])
        g = jnp.tanh(gates[:, 3 * H_PAD:])
        i = sfo[:, 0:H_PAD]
        f = sfo[:, H_PAD:2 * H_PAD]
        o = sfo[:, 2 * H_PAD:3 * H_PAD]
        c_new = f * c + i * g
        h_new = o * jnp.tanh(c_new)
        return h_new, c_new

    h0 = hc_ref[0:1, :]
    c0 = hc_ref[1:2, :]
    h1 = hc_ref[2:3, :]
    c1 = hc_ref[3:4, :]

    # ---- Wavefront recurrence: step s computes layer-0 time s (s < T) and
    # layer-1 time s-1 (s >= 1) from ONE fused matmul:
    #   [h0_{s-1} | h1_{s-2}] @ [[W_hh0 | W_ih1], [0 | W_hh1]]
    # The loop is a Python loop (fully unrolled at trace time; T is tiny) so
    # the scheduler sees every step and the boundary steps are resolved
    # statically.
    for s in range(T + 1):
        lhs = jnp.concatenate([h0, h1], axis=1).astype(jnp.bfloat16)  # (1, 256)
        fused = jnp.dot(lhs, w_step_ref[...],
                        preferred_element_type=jnp.float32)           # (1, 1024)
        if s < T:                                    # layer-0, time s
            gates0 = gx_ref[s:s + 1, :] + fused[:, :G_PAD]
            h0, c0 = activate(gates0, c0)
        if s >= 1:                                   # layer-1, time s-1
            gates1 = b1 + fused[:, G_PAD:]
            h1, c1 = activate(gates1, c1)

    # ---- Linear head on the last layer-1 hidden state.
    out_ref[...] = (jnp.dot(h1.astype(jnp.bfloat16), w_in_ref[:, G_PAD:],
                            preferred_element_type=jnp.float32)
                    + bias_ref[2:3, 0:OUT_PAD])


# --------------------- one-time parameter packing ------------------------- #
def _pad_gate_weight(w, in_dim, in_pad):
    # w: (4*HIDDEN, in_dim) in PyTorch gate order (i,f,g,o) -> (in_pad, 4*H_PAD)
    # with gate blocks reordered to (i,f,o,g), zero-padded, transposed.
    blocks = []
    for g in GATE_ORDER:
        blk = w[g * HIDDEN:(g + 1) * HIDDEN, :]
        blk = jnp.pad(blk, ((0, H_PAD - HIDDEN), (0, in_pad - in_dim)))
        blocks.append(blk)
    wp = jnp.concatenate(blocks, axis=0)           # (4*H_PAD, in_pad)
    return wp.T.astype(jnp.float32)                # (in_pad, 4*H_PAD)


def _pad_gate_bias(b_ih, b_hh):
    b = b_ih + b_hh
    blocks = [jnp.pad(b[g * HIDDEN:(g + 1) * HIDDEN], (0, H_PAD - HIDDEN))
              for g in GATE_ORDER]
    return jnp.concatenate(blocks).astype(jnp.float32)  # (4*H_PAD,)


def pack_params(params):
    """Pad / reorder / transpose / bf16-cast all weights ONCE (not per call)."""
    (wih0, whh0, bih0, bhh0,
     wih1, whh1, bih1, bhh1,
     wlin, blin) = params

    wih0_p = _pad_gate_weight(wih0, INPUT_SIZE, IN_PAD)   # (128, 512)
    whh0_p = _pad_gate_weight(whh0, HIDDEN, H_PAD)        # (128, 512)
    wih1_p = _pad_gate_weight(wih1, HIDDEN, H_PAD)        # (128, 512)
    whh1_p = _pad_gate_weight(whh1, HIDDEN, H_PAD)        # (128, 512)
    wlin_p = jnp.pad(wlin.T.astype(jnp.float32),
                     ((0, H_PAD - HIDDEN), (0, OUT_PAD - OUTPUT)))  # (128, 128)

    # w_in = [ W_ih0^T | W_lin^T ]  -> (128, 640) bf16
    w_in = jnp.concatenate([wih0_p, wlin_p], axis=1).astype(jnp.bfloat16)

    # w_step = [[ W_hh0^T , W_ih1^T ], [ 0 , W_hh1^T ]]  -> (256, 1024) bf16
    top = jnp.concatenate([whh0_p, wih1_p], axis=1)                 # (128, 1024)
    bot = jnp.concatenate([jnp.zeros_like(whh1_p), whh1_p], axis=1)  # (128, 1024)
    w_step = jnp.concatenate([top, bot], axis=0).astype(jnp.bfloat16)

    # bias slab: row0 = b0, row1 = b1, row2[:OUT_PAD] = blin  -> (3, 512) f32
    b0 = _pad_gate_bias(bih0, bhh0)
    b1 = _pad_gate_bias(bih1, bhh1)
    blin_p = jnp.pad(blin.astype(jnp.float32), (0, G_PAD - OUTPUT))
    biases = jnp.stack([b0, b1, blin_p]).astype(jnp.float32)

    return (w_in, w_step, biases)


# ------------------------------ forward call ------------------------------- #
@jax.jit
def lstm_forward(packed, input_seq, h0, c0):
    """packed = pack_params(params); input_seq: (T, INPUT_SIZE);
    h0, c0: (2, 1, HIDDEN).  Returns (OUTPUT,) — prediction for the last step."""
    w_in, w_step, biases = packed
    T = input_seq.shape[0]

    x_pad = jnp.pad(input_seq.astype(jnp.float32),
                    ((0, 0), (0, IN_PAD - INPUT_SIZE)))            # (T, 128)

    # rows: h_init layer0, c_init layer0, h_init layer1, c_init layer1
    hc = jnp.stack([h0[0, 0], c0[0, 0], h0[1, 0], c0[1, 0]])
    hc = jnp.pad(hc, ((0, 0), (0, H_PAD - HIDDEN))).astype(jnp.float32)  # (4,128)

    vmem = pl.BlockSpec(memory_space=pltpu.MemorySpace.VMEM)
    out = pl.pallas_call(
        lstm_kernel,
        out_shape=jax.ShapeDtypeStruct((1, OUT_PAD), jnp.float32),
        in_specs=[vmem] * 5,
        out_specs=vmem,
        scratch_shapes=[
            pltpu.VMEM((T, G_PAD), jnp.float32),   # hoisted layer-0 gate pre-acts
        ],
    )(x_pad, w_in, w_step, biases, hc)

    return out[0, :OUTPUT]


# ----------------------------- pure-JAX reference -------------------------- #
def ref_forward(params, input_seq, h0, c0):
    (wih0, whh0, bih0, bhh0,
     wih1, whh1, bih1, bhh1,
     wlin, blin) = params

    def cell(x_t, h, c, wih, whh, bih, bhh):
        gates = x_t @ wih.T + h @ whh.T + bih + bhh
        i = jax.nn.sigmoid(gates[0:HIDDEN])
        f = jax.nn.sigmoid(gates[HIDDEN:2 * HIDDEN])
        g = jnp.tanh(gates[2 * HIDDEN:3 * HIDDEN])
        o = jax.nn.sigmoid(gates[3 * HIDDEN:4 * HIDDEN])
        c_new = f * c + i * g
        h_new = o * jnp.tanh(c_new)
        return h_new, c_new

    h = [h0[0, 0], h0[1, 0]]
    c = [c0[0, 0], c0[1, 0]]
    last = None
    for t in range(input_seq.shape[0]):
        x_t = input_seq[t]
        h[0], c[0] = cell(x_t, h[0], c[0], wih0, whh0, bih0, bhh0)
        h[1], c[1] = cell(h[0], h[1], c[1], wih1, whh1, bih1, bhh1)
        last = h[1]
    return last @ wlin.T + blin


# ---------------------------------- main ----------------------------------- #
if __name__ == "__main__":
    key = jax.random.PRNGKey(0)
    keys = jax.random.split(key, 14)
    s = 1.0 / jnp.sqrt(HIDDEN)

    params = (
        jax.random.uniform(keys[0], (4 * HIDDEN, INPUT_SIZE), jnp.float32, -s, s),  # wih0
        jax.random.uniform(keys[1], (4 * HIDDEN, HIDDEN), jnp.float32, -s, s),      # whh0
        jax.random.uniform(keys[2], (4 * HIDDEN,), jnp.float32, -s, s),             # bih0
        jax.random.uniform(keys[3], (4 * HIDDEN,), jnp.float32, -s, s),             # bhh0
        jax.random.uniform(keys[4], (4 * HIDDEN, HIDDEN), jnp.float32, -s, s),      # wih1
        jax.random.uniform(keys[5], (4 * HIDDEN, HIDDEN), jnp.float32, -s, s),      # whh1
        jax.random.uniform(keys[6], (4 * HIDDEN,), jnp.float32, -s, s),             # bih1
        jax.random.uniform(keys[7], (4 * HIDDEN,), jnp.float32, -s, s),             # bhh1
        jax.random.uniform(keys[8], (OUTPUT, HIDDEN), jnp.float32, -s, s),          # wlin
        jax.random.uniform(keys[9], (OUTPUT,), jnp.float32, -s, s),                 # blin
    )

    T = 8
    input_seq = jax.random.normal(keys[10], (T, INPUT_SIZE), jnp.float32)
    # self.hidden_cell is provided externally in the PyTorch module.
    h0 = 0.1 * jax.random.normal(keys[11], (2, 1, HIDDEN), jnp.float32)
    c0 = 0.1 * jax.random.normal(keys[12], (2, 1, HIDDEN), jnp.float32)

    packed = pack_params(params)               # one-time weight packing
    pred = lstm_forward(packed, input_seq, h0, c0)
    jax.block_until_ready(pred)

    ref = ref_forward(params, input_seq, h0, c0)
    assert pred.shape == (OUTPUT,)
    # bf16 matmul operands with f32 accumulation -> small drift vs f32 reference.
    assert jnp.allclose(pred, ref, atol=1e-2, rtol=1e-2), (pred, ref)

    print("KERNEL_OK")
</pallas_src>

<mosaic_0001>
module attributes {stable_mosaic.version = 11 : i64} {
  func.func @lstm_kernel(%arg0: memref<8x128xf32, #tpu.memory_space<vmem>>, %arg1: memref<128x640xbf16, #tpu.memory_space<vmem>>, %arg2: memref<256x1024xbf16, #tpu.memory_space<vmem>>, %arg3: memref<3x512xf32, #tpu.memory_space<vmem>>, %arg4: memref<4x128xf32, #tpu.memory_space<vmem>>, %arg5: memref<1x128xf32, #tpu.memory_space<vmem>>, %arg6: memref<8x512xf32, #tpu.memory_space<vmem>>) attributes {dimension_semantics = [], scalar_prefetch = 0 : i64, scratch_operands = 1 : i64, tpu.core_type = #tpu.core_type<tc>} {
    %c0 = arith.constant 0 : index
    %c0_0 = arith.constant 0 : index
    %0 = vector.load %arg3[%c0, %c0_0] : memref<3x512xf32, #tpu.memory_space<vmem>>, vector<1x512xf32>
    %c1 = arith.constant 1 : index
    %c0_1 = arith.constant 0 : index
    %1 = vector.load %arg3[%c1, %c0_1] : memref<3x512xf32, #tpu.memory_space<vmem>>, vector<1x512xf32>
    %c0_2 = arith.constant 0 : index
    %c0_3 = arith.constant 0 : index
    %2 = vector.load %arg0[%c0_2, %c0_3] : memref<8x128xf32, #tpu.memory_space<vmem>>, vector<8x128xf32>
    %3 = arith.truncf %2 : vector<8x128xf32> to vector<8x128xbf16>
    %c0_4 = arith.constant 0 : index
    %c0_5 = arith.constant 0 : index
    %4 = vector.load %arg1[%c0_4, %c0_5] : memref<128x640xbf16, #tpu.memory_space<vmem>>, vector<128x512xbf16>
    %cst = arith.constant dense<0.000000e+00> : vector<8x512xf32>
    %5 = tpu.matmul %3, %4, %cst {dimension_numbers = #tpu.dot_dimension_numbers<[1], [0], [0], [1], [0, 0, 1, 1], [], []>} : vector<8x128xbf16>, vector<128x512xbf16>, vector<8x512xf32> -> vector<8x512xf32>
    %6 = vector.broadcast %0 : vector<1x512xf32> to vector<8x512xf32>
    %7 = arith.addf %5, %6 : vector<8x512xf32>
    %c0_6 = arith.constant 0 : index
    %c0_7 = arith.constant 0 : index
    %8 = vector.load %arg6[%c0_6, %c0_7] : memref<8x512xf32, #tpu.memory_space<vmem>>, vector<8x512xf32>
    tpu.vector_store %arg6[%c0_6, %c0_7], %7 {strides = array<i32>} : memref<8x512xf32, #tpu.memory_space<vmem>>, vector<8x512xf32>,
    %c0_8 = arith.constant 0 : index
    %c0_9 = arith.constant 0 : index
    %9 = vector.load %arg4[%c0_8, %c0_9] : memref<4x128xf32, #tpu.memory_space<vmem>>, vector<1x128xf32>
    %c1_10 = arith.constant 1 : index
    %c0_11 = arith.constant 0 : index
    %10 = vector.load %arg4[%c1_10, %c0_11] : memref<4x128xf32, #tpu.memory_space<vmem>>, vector<1x128xf32>
    %c2 = arith.constant 2 : index
    %c0_12 = arith.constant 0 : index
    %11 = vector.load %arg4[%c2, %c0_12] : memref<4x128xf32, #tpu.memory_space<vmem>>, vector<1x128xf32>
    %c3 = arith.constant 3 : index
    %c0_13 = arith.constant 0 : index
    %12 = vector.load %arg4[%c3, %c0_13] : memref<4x128xf32, #tpu.memory_space<vmem>>, vector<1x128xf32>
    %13 = tpu.concatenate %9, %11 in 1 : vector<1x128xf32>, vector<1x128xf32> -> vector<1x256xf32>
    %14 = arith.truncf %13 : vector<1x256xf32> to vector<1x256xbf16>
    %c0_14 = arith.constant 0 : index
    %c0_15 = arith.constant 0 : index
    %15 = vector.load %arg2[%c0_14, %c0_15] : memref<256x1024xbf16, #tpu.memory_space<vmem>>, vector<256x1024xbf16>
    %cst_16 = arith.constant dense<0.000000e+00> : vector<1x1024xf32>
    %16 = tpu.matmul %14, %15, %cst_16 {dimension_numbers = #tpu.dot_dimension_numbers<[1], [0], [0], [1], [0, 0, 1, 1], [], []>} : vector<1x256xbf16>, vector<256x1024xbf16>, vector<1x1024xf32> -> vector<1x1024xf32>
    %c0_17 = arith.constant 0 : index
    %c0_18 = arith.constant 0 : index
    %17 = vector.load %arg6[%c0_17, %c0_18] : memref<8x512xf32, #tpu.memory_space<vmem>>, vector<1x512xf32>
    %18 = vector.extract_strided_slice %16 {offsets = [0, 0], sizes = [1, 512], strides = [1, 1]} : vector<1x1024xf32> to vector<1x512xf32>
    %19 = arith.addf %17, %18 : vector<1x512xf32>
    %20 = vector.extract_strided_slice %19 {offsets = [0, 0], sizes = [1, 384], strides = [1, 1]} : vector<1x512xf32> to vector<1x384xf32>
    %21 = arith.negf %20 : vector<1x384xf32>
    %22 = math.exp %21 : vector<1x384xf32>
    %cst_19 = arith.constant 1.000000e+00 : f32
    %23 = vector.broadcast %cst_19 : f32 to vector<1x384xf32>
    %24 = arith.addf %23, %22 : vector<1x384xf32>
    %25 = arith.divf %23, %24 : vector<1x384xf32>
    %26 = vector.extract_strided_slice %19 {offsets = [0, 384], sizes = [1, 128], strides = [1, 1]} : vector<1x512xf32> to vector<1x128xf32>
    %27 = math.tanh %26 : vector<1x128xf32>
    %28 = vector.extract_strided_slice %25 {offsets = [0, 0], sizes = [1, 128], strides = [1, 1]} : vector<1x384xf32> to vector<1x128xf32>
    %29 = vector.extract_strided_slice %25 {offsets = [0, 128], sizes = [1, 128], strides = [1, 1]} : vector<1x384xf32> to vector<1x128xf32>
    %30 = vector.extract_strided_slice %25 {offsets = [0, 256], sizes = [1, 128], strides = [1, 1]} : vector<1x384xf32> to vector<1x128xf32>
    %31 = arith.mulf %29, %10 : vector<1x128xf32>
    %32 = arith.mulf %28, %27 : vector<1x128xf32>
    %33 = arith.addf %31, %32 : vector<1x128xf32>
    %34 = math.tanh %33 : vector<1x128xf32>
    %35 = arith.mulf %30, %34 : vector<1x128xf32>
    %36 = tpu.concatenate %35, %11 in 1 : vector<1x128xf32>, vector<1x128xf32> -> vector<1x256xf32>
    %37 = arith.truncf %36 : vector<1x256xf32> to vector<1x256xbf16>
    %c0_20 = arith.constant 0 : index
    %c0_21 = arith.constant 0 : index
    %38 = vector.load %arg2[%c0_20, %c0_21] : memref<256x1024xbf16, #tpu.memory_space<vmem>>, vector<256x1024xbf16>
    %cst_22 = arith.constant dense<0.000000e+00> : vector<1x1024xf32>
    %39 = tpu.matmul %37, %38, %cst_22 {dimension_numbers = #tpu.dot_dimension_numbers<[1], [0], [0], [1], [0, 0, 1, 1], [], []>} : vector<1x256xbf16>, vector<256x1024xbf16>, vector<1x1024xf32> -> vector<1x1024xf32>
    %c1_23 = arith.constant 1 : index
    %c0_24 = arith.constant 0 : index
    %40 = vector.load %arg6[%c1_23, %c0_24] : memref<8x512xf32, #tpu.memory_space<vmem>>, vector<1x512xf32>
    %41 = vector.extract_strided_slice %39 {offsets = [0, 0], sizes = [1, 512], strides = [1, 1]} : vector<1x1024xf32> to vector<1x512xf32>
    %42 = arith.addf %40, %41 : vector<1x512xf32>
    %43 = vector.extract_strided_slice %42 {offsets = [0, 0], sizes = [1, 384], strides = [1, 1]} : vector<1x512xf32> to vector<1x384xf32>
    %44 = arith.negf %43 : vector<1x384xf32>
    %45 = math.exp %44 : vector<1x384xf32>
    %cst_25 = arith.constant 1.000000e+00 : f32
    %46 = vector.broadcast %cst_25 : f32 to vector<1x384xf32>
    %47 = arith.addf %46, %45 : vector<1x384xf32>
    %48 = arith.divf %46, %47 : vector<1x384xf32>
    %49 = vector.extract_strided_slice %42 {offsets = [0, 384], sizes = [1, 128], strides = [1, 1]} : vector<1x512xf32> to vector<1x128xf32>
    %50 = math.tanh %49 : vector<1x128xf32>
    %51 = vector.extract_strided_slice %48 {offsets = [0, 0], sizes = [1, 128], strides = [1, 1]} : vector<1x384xf32> to vector<1x128xf32>
    %52 = vector.extract_strided_slice %48 {offsets = [0, 128], sizes = [1, 128], strides = [1, 1]} : vector<1x384xf32> to vector<1x128xf32>
    %53 = vector.extract_strided_slice %48 {offsets = [0, 256], sizes = [1, 128], strides = [1, 1]} : vector<1x384xf32> to vector<1x128xf32>
    %54 = arith.mulf %52, %33 : vector<1x128xf32>
    %55 = arith.mulf %51, %50 : vector<1x128xf32>
    %56 = arith.addf %54, %55 : vector<1x128xf32>
    %57 = math.tanh %56 : vector<1x128xf32>
    %58 = arith.mulf %53, %57 : vector<1x128xf32>
    %59 = vector.extract_strided_slice %39 {offsets = [0, 512], sizes = [1, 512], strides = [1, 1]} : vector<1x1024xf32> to vector<1x512xf32>
    %60 = arith.addf %1, %59 : vector<1x512xf32>
    %61 = vector.extract_strided_slice %60 {offsets = [0, 0], sizes = [1, 384], strides = [1, 1]} : vector<1x512xf32> to vector<1x384xf32>
    %62 = arith.negf %61 : vector<1x384xf32>
    %63 = math.exp %62 : vector<1x384xf32>
    %cst_26 = arith.constant 1.000000e+00 : f32
    %64 = vector.broadcast %cst_26 : f32 to vector<1x384xf32>
    %65 = arith.addf %64, %63 : vector<1x384xf32>
    %66 = arith.divf %64, %65 : vector<1x384xf32>
    %67 = vector.extract_strided_slice %60 {offsets = [0, 384], sizes = [1, 128], strides = [1, 1]} : vector<1x512xf32> to vector<1x128xf32>
    %68 = math.tanh %67 : vector<1x128xf32>
    %69 = vector.extract_strided_slice %66 {offsets = [0, 0], sizes = [1, 128], strides = [1, 1]} : vector<1x384xf32> to vector<1x128xf32>
    %70 = vector.extract_strided_slice %66 {offsets = [0, 128], sizes = [1, 128], strides = [1, 1]} : vector<1x384xf32> to vector<1x128xf32>
    %71 = vector.extract_strided_slice %66 {offsets = [0, 256], sizes = [1, 128], strides = [1, 1]} : vector<1x384xf32> to vector<1x128xf32>
    %72 = arith.mulf %70, %12 : vector<1x128xf32>
    %73 = arith.mulf %69, %68 : vector<1x128xf32>
    %74 = arith.addf %72, %73 : vector<1x128xf32>
    %75 = math.tanh %74 : vector<1x128xf32>
    %76 = arith.mulf %71, %75 : vector<1x128xf32>
    %77 = tpu.concatenate %58, %76 in 1 : vector<1x128xf32>, vector<1x128xf32> -> vector<1x256xf32>
    %78 = arith.truncf %77 : vector<1x256xf32> to vector<1x256xbf16>
    %c0_27 = arith.constant 0 : index
    %c0_28 = arith.constant 0 : index
    %79 = vector.load %arg2[%c0_27, %c0_28] : memref<256x1024xbf16, #tpu.memory_space<vmem>>, vector<256x1024xbf16>
    %cst_29 = arith.constant dense<0.000000e+00> : vector<1x1024xf32>
    %80 = tpu.matmul %78, %79, %cst_29 {dimension_numbers = #tpu.dot_dimension_numbers<[1], [0], [0], [1], [0, 0, 1, 1], [], []>} : vector<1x256xbf16>, vector<256x1024xbf16>, vector<1x1024xf32> -> vector<1x1024xf32>
    %c2_30 = arith.constant 2 : index
    %c0_31 = arith.constant 0 : index
    %81 = vector.load %arg6[%c2_30, %c0_31] : memref<8x512xf32, #tpu.memory_space<vmem>>, vector<1x512xf32>
    %82 = vector.extract_strided_slice %80 {offsets = [0, 0], sizes = [1, 512], strides = [1, 1]} : vector<1x1024xf32> to vector<1x512xf32>
    %83 = arith.addf %81, %82 : vector<1x512xf32>
    %84 = vector.extract_strided_slice %83 {offsets = [0, 0], sizes = [1, 384], strides = [1, 1]} : vector<1x512xf32> to vector<1x384xf32>
    %85 = arith.negf %84 : vector<1x384xf32>
    %86 = math.exp %85 : vector<1x384xf32>
    %cst_32 = arith.constant 1.000000e+00 : f32
    %87 = vector.broadcast %cst_32 : f32 to vector<1x384xf32>
    %88 = arith.addf %87, %86 : vector<1x384xf32>
    %89 = arith.divf %87, %88 : vector<1x384xf32>
    %90 = vector.extract_strided_slice %83 {offsets = [0, 384], sizes = [1, 128], strides = [1, 1]} : vector<1x512xf32> to vector<1x128xf32>
    %91 = math.tanh %90 : vector<1x128xf32>
    %92 = vector.extract_strided_slice %89 {offsets = [0, 0], sizes = [1, 128], strides = [1, 1]} : vector<1x384xf32> to vector<1x128xf32>
    %93 = vector.extract_strided_slice %89 {offsets = [0, 128], sizes = [1, 128], strides = [1, 1]} : vector<1x384xf32> to vector<1x128xf32>
    %94 = vector.extract_strided_slice %89 {offsets = [0, 256], sizes = [1, 128], strides = [1, 1]} : vector<1x384xf32> to vector<1x128xf32>
    %95 = arith.mulf %93, %56 : vector<1x128xf32>
    %96 = arith.mulf %92, %91 : vector<1x128xf32>
    %97 = arith.addf %95, %96 : vector<1x128xf32>
    %98 = math.tanh %97 : vector<1x128xf32>
    %99 = arith.mulf %94, %98 : vector<1x128xf32>
    %100 = vector.extract_strided_slice %80 {offsets = [0, 512], sizes = [1, 512], strides = [1, 1]} : vector<1x1024xf32> to vector<1x512xf32>
    %101 = arith.addf %1, %100 : vector<1x512xf32>
    %102 = vector.extract_strided_slice %101 {offsets = [0, 0], sizes = [1, 384], strides = [1, 1]} : vector<1x512xf32> to vector<1x384xf32>
    %103 = arith.negf %102 : vector<1x384xf32>
    %104 = math.exp %103 : vector<1x384xf32>
    %cst_33 = arith.constant 1.000000e+00 : f32
    %105 = vector.broadcast %cst_33 : f32 to vector<1x384xf32>
    %106 = arith.addf %105, %104 : vector<1x384xf32>
    %107 = arith.divf %105, %106 : vector<1x384xf32>
    %108 = vector.extract_strided_slice %101 {offsets = [0, 384], sizes = [1, 128], strides = [1, 1]} : vector<1x512xf32> to vector<1x128xf32>
    %109 = math.tanh %108 : vector<1x128xf32>
    %110 = vector.extract_strided_slice %107 {offsets = [0, 0], sizes = [1, 128], strides = [1, 1]} : vector<1x384xf32> to vector<1x128xf32>
    %111 = vector.extract_strided_slice %107 {offsets = [0, 128], sizes = [1, 128], strides = [1, 1]} : vector<1x384xf32> to vector<1x128xf32>
    %112 = vector.extract_strided_slice %107 {offsets = [0, 256], sizes = [1, 128], strides = [1, 1]} : vector<1x384xf32> to vector<1x128xf32>
    %113 = arith.mulf %111, %74 : vector<1x128xf32>
    %114 = arith.mulf %110, %109 : vector<1x128xf32>
    %115 = arith.addf %113, %114 : vector<1x128xf32>
    %116 = math.tanh %115 : vector<1x128xf32>
    %117 = arith.mulf %112, %116 : vector<1x128xf32>
    %118 = tpu.concatenate %99, %117 in 1 : vector<1x128xf32>, vector<1x128xf32> -> vector<1x256xf32>
    %119 = arith.truncf %118 : vector<1x256xf32> to vector<1x256xbf16>
    %c0_34 = arith.constant 0 : index
    %c0_35 = arith.constant 0 : index
    %120 = vector.load %arg2[%c0_34, %c0_35] : memref<256x1024xbf16, #tpu.memory_space<vmem>>, vector<256x1024xbf16>
    %cst_36 = arith.constant dense<0.000000e+00> : vector<1x1024xf32>
    %121 = tpu.matmul %119, %120, %cst_36 {dimension_numbers = #tpu.dot_dimension_numbers<[1], [0], [0], [1], [0, 0, 1, 1], [], []>} : vector<1x256xbf16>, vector<256x1024xbf16>, vector<1x1024xf32> -> vector<1x1024xf32>
    %c3_37 = arith.constant 3 : index
    %c0_38 = arith.constant 0 : index
    %122 = vector.load %arg6[%c3_37, %c0_38] : memref<8x512xf32, #tpu.memory_space<vmem>>, vector<1x512xf32>
    %123 = vector.extract_strided_slice %121 {offsets = [0, 0], sizes = [1, 512], strides = [1, 1]} : vector<1x1024xf32> to vector<1x512xf32>
    %124 = arith.addf %122, %123 : vector<1x512xf32>
    %125 = vector.extract_strided_slice %124 {offsets = [0, 0], sizes = [1, 384], strides = [1, 1]} : vector<1x512xf32> to vector<1x384xf32>
    %126 = arith.negf %125 : vector<1x384xf32>
    %127 = math.exp %126 : vector<1x384xf32>
    %cst_39 = arith.constant 1.000000e+00 : f32
    %128 = vector.broadcast %cst_39 : f32 to vector<1x384xf32>
    %129 = arith.addf %128, %127 : vector<1x384xf32>
    %130 = arith.divf %128, %129 : vector<1x384xf32>
    %131 = vector.extract_strided_slice %124 {offsets = [0, 384], sizes = [1, 128], strides = [1, 1]} : vector<1x512xf32> to vector<1x128xf32>
    %132 = math.tanh %131 : vector<1x128xf32>
    %133 = vector.extract_strided_slice %130 {offsets = [0, 0], sizes = [1, 128], strides = [1, 1]} : vector<1x384xf32> to vector<1x128xf32>
    %134 = vector.extract_strided_slice %130 {offsets = [0, 128], sizes = [1, 128], strides = [1, 1]} : vector<1x384xf32> to vector<1x128xf32>
    %135 = vector.extract_strided_slice %130 {offsets = [0, 256], sizes = [1, 128], strides = [1, 1]} : vector<1x384xf32> to vector<1x128xf32>
    %136 = arith.mulf %134, %97 : vector<1x128xf32>
    %137 = arith.mulf %133, %132 : vector<1x128xf32>
    %138 = arith.addf %136, %137 : vector<1x128xf32>
    %139 = math.tanh %138 : vector<1x128xf32>
    %140 = arith.mulf %135, %139 : vector<1x128xf32>
    %141 = vector.extract_strided_slice %121 {offsets = [0, 512], sizes = [1, 512], strides = [1, 1]} : vector<1x1024xf32> to vector<1x512xf32>
    %142 = arith.addf %1, %141 : vector<1x512xf32>
    %143 = vector.extract_strided_slice %142 {offsets = [0, 0], sizes = [1, 384], strides = [1, 1]} : vector<1x512xf32> to vector<1x384xf32>
    %144 = arith.negf %143 : vector<1x384xf32>
    %145 = math.exp %144 : vector<1x384xf32>
    %cst_40 = arith.constant 1.000000e+00 : f32
    %146 = vector.broadcast %cst_40 : f32 to vector<1x384xf32>
    %147 = arith.addf %146, %145 : vector<1x384xf32>
    %148 = arith.divf %146, %147 : vector<1x384xf32>
    %149 = vector.extract_strided_slice %142 {offsets = [0, 384], sizes = [1, 128], strides = [1, 1]} : vector<1x512xf32> to vector<1x128xf32>
    %150 = math.tanh %149 : vector<1x128xf32>
    %151 = vector.extract_strided_slice %148 {offsets = [0, 0], sizes = [1, 128], strides = [1, 1]} : vector<1x384xf32> to vector<1x128xf32>
    %152 = vector.extract_strided_slice %148 {offsets = [0, 128], sizes = [1, 128], strides = [1, 1]} : vector<1x384xf32> to vector<1x128xf32>
    %153 = vector.extract_strided_slice %148 {offsets = [0, 256], sizes = [1, 128], strides = [1, 1]} : vector<1x384xf32> to vector<1x128xf32>
    %154 = arith.mulf %152, %115 : vector<1x128xf32>
    %155 = arith.mulf %151, %150 : vector<1x128xf32>
    %156 = arith.addf %154, %155 : vector<1x128xf32>
    %157 = math.tanh %156 : vector<1x128xf32>
    %158 = arith.mulf %153, %157 : vector<1x128xf32>
    %159 = tpu.concatenate %140, %158 in 1 : vector<1x128xf32>, vector<1x128xf32> -> vector<1x256xf32>
    %160 = arith.truncf %159 : vector<1x256xf32> to vector<1x256xbf16>
    %c0_41 = arith.constant 0 : index
    %c0_42 = arith.constant 0 : index
    %161 = vector.load %arg2[%c0_41, %c0_42] : memref<256x1024xbf16, #tpu.memory_space<vmem>>, vector<256x1024xbf16>
    %cst_43 = arith.constant dense<0.000000e+00> : vector<1x1024xf32>
    %162 = tpu.matmul %160, %161, %cst_43 {dimension_numbers = #tpu.dot_dimension_numbers<[1], [0], [0], [1], [0, 0, 1, 1], [], []>} : vector<1x256xbf16>, vector<256x1024xbf16>, vector<1x1024xf32> -> vector<1x1024xf32>
    %c4 = arith.constant 4 : index
    %c0_44 = arith.constant 0 : index
    %163 = vector.load %arg6[%c4, %c0_44] : memref<8x512xf32, #tpu.memory_space<vmem>>, vector<1x512xf32>
    %164 = vector.extract_strided_slice %162 {offsets = [0, 0], sizes = [1, 512], strides = [1, 1]} : vector<1x1024xf32> to vector<1x512xf32>
    %165 = arith.addf %163, %164 : vector<1x512xf32>
    %166 = vector.extract_strided_slice %165 {offsets = [0, 0], sizes = [1, 384], strides = [1, 1]} : vector<1x512xf32> to vector<1x384xf32>
    %167 = arith.negf %166 : vector<1x384xf32>
    %168 = math.exp %167 : vector<1x384xf32>
    %cst_45 = arith.constant 1.000000e+00 : f32
    %169 = vector.broadcast %cst_45 : f32 to vector<1x384xf32>
    %170 = arith.addf %169, %168 : vector<1x384xf32>
    %171 = arith.divf %169, %170 : vector<1x384xf32>
    %172 = vector.extract_strided_slice %165 {offsets = [0, 384], sizes = [1, 128], strides = [1, 1]} : vector<1x512xf32> to vector<1x128xf32>
    %173 = math.tanh %172 : vector<1x128xf32>
    %174 = vector.extract_strided_slice %171 {offsets = [0, 0], sizes = [1, 128], strides = [1, 1]} : vector<1x384xf32> to vector<1x128xf32>
    %175 = vector.extract_strided_slice %171 {offsets = [0, 128], sizes = [1, 128], strides = [1, 1]} : vector<1x384xf32> to vector<1x128xf32>
    %176 = vector.extract_strided_slice %171 {offsets = [0, 256], sizes = [1, 128], strides = [1, 1]} : vector<1x384xf32> to vector<1x128xf32>
    %177 = arith.mulf %175, %138 : vector<1x128xf32>
    %178 = arith.mulf %174, %173 : vector<1x128xf32>
    %179 = arith.addf %177, %178 : vector<1x128xf32>
    %180 = math.tanh %179 : vector<1x128xf32>
    %181 = arith.mulf %176, %180 : vector<1x128xf32>
    %182 = vector.extract_strided_slice %162 {offsets = [0, 512], sizes = [1, 512], strides = [1, 1]} : vector<1x1024xf32> to vector<1x512xf32>
    %183 = arith.addf %1, %182 : vector<1x512xf32>
    %184 = vector.extract_strided_slice %183 {offsets = [0, 0], sizes = [1, 384], strides = [1, 1]} : vector<1x512xf32> to vector<1x384xf32>
    %185 = arith.negf %184 : vector<1x384xf32>
    %186 = math.exp %185 : vector<1x384xf32>
    %cst_46 = arith.constant 1.000000e+00 : f32
    %187 = vector.broadcast %cst_46 : f32 to vector<1x384xf32>
    %188 = arith.addf %187, %186 : vector<1x384xf32>
    %189 = arith.divf %187, %188 : vector<1x384xf32>
    %190 = vector.extract_strided_slice %183 {offsets = [0, 384], sizes = [1, 128], strides = [1, 1]} : vector<1x512xf32> to vector<1x128xf32>
    %191 = math.tanh %190 : vector<1x128xf32>
    %192 = vector.extract_strided_slice %189 {offsets = [0, 0], sizes = [1, 128], strides = [1, 1]} : vector<1x384xf32> to vector<1x128xf32>
    %193 = vector.extract_strided_slice %189 {offsets = [0, 128], sizes = [1, 128], strides = [1, 1]} : vector<1x384xf32> to vector<1x128xf32>
    %194 = vector.extract_strided_slice %189 {offsets = [0, 256], sizes = [1, 128], strides = [1, 1]} : vector<1x384xf32> to vector<1x128xf32>
    %195 = arith.mulf %193, %156 : vector<1x128xf32>
    %196 = arith.mulf %192, %191 : vector<1x128xf32>
    %197 = arith.addf %195, %196 : vector<1x128xf32>
    %198 = math.tanh %197 : vector<1x128xf32>
    %199 = arith.mulf %194, %198 : vector<1x128xf32>
    %200 = tpu.concatenate %181, %199 in 1 : vector<1x128xf32>, vector<1x128xf32> -> vector<1x256xf32>
    %201 = arith.truncf %200 : vector<1x256xf32> to vector<1x256xbf16>
    %c0_47 = arith.constant 0 : index
    %c0_48 = arith.constant 0 : index
    %202 = vector.load %arg2[%c0_47, %c0_48] : memref<256x1024xbf16, #tpu.memory_space<vmem>>, vector<256x1024xbf16>
    %cst_49 = arith.constant dense<0.000000e+00> : vector<1x1024xf32>
    %203 = tpu.matmul %201, %202, %cst_49 {dimension_numbers = #tpu.dot_dimension_numbers<[1], [0], [0], [1], [0, 0, 1, 1], [], []>} : vector<1x256xbf16>, vector<256x1024xbf16>, vector<1x1024xf32> -> vector<1x1024xf32>
    %c5 = arith.constant 5 : index
    %c0_50 = arith.constant 0 : index
    %204 = vector.load %arg6[%c5, %c0_50] : memref<8x512xf32, #tpu.memory_space<vmem>>, vector<1x512xf32>
    %205 = vector.extract_strided_slice %203 {offsets = [0, 0], sizes = [1, 512], strides = [1, 1]} : vector<1x1024xf32> to vector<1x512xf32>
    %206 = arith.addf %204, %205 : vector<1x512xf32>
    %207 = vector.extract_strided_slice %206 {offsets = [0, 0], sizes = [1, 384], strides = [1, 1]} : vector<1x512xf32> to vector<1x384xf32>
    %208 = arith.negf %207 : vector<1x384xf32>
    %209 = math.exp %208 : vector<1x384xf32>
    %cst_51 = arith.constant 1.000000e+00 : f32
    %210 = vector.broadcast %cst_51 : f32 to vector<1x384xf32>
    %211 = arith.addf %210, %209 : vector<1x384xf32>
    %212 = arith.divf %210, %211 : vector<1x384xf32>
    %213 = vector.extract_strided_slice %206 {offsets = [0, 384], sizes = [1, 128], strides = [1, 1]} : vector<1x512xf32> to vector<1x128xf32>
    %214 = math.tanh %213 : vector<1x128xf32>
    %215 = vector.extract_strided_slice %212 {offsets = [0, 0], sizes = [1, 128], strides = [1, 1]} : vector<1x384xf32> to vector<1x128xf32>
    %216 = vector.extract_strided_slice %212 {offsets = [0, 128], sizes = [1, 128], strides = [1, 1]} : vector<1x384xf32> to vector<1x128xf32>
    %217 = vector.extract_strided_slice %212 {offsets = [0, 256], sizes = [1, 128], strides = [1, 1]} : vector<1x384xf32> to vector<1x128xf32>
    %218 = arith.mulf %216, %179 : vector<1x128xf32>
    %219 = arith.mulf %215, %214 : vector<1x128xf32>
    %220 = arith.addf %218, %219 : vector<1x128xf32>
    %221 = math.tanh %220 : vector<1x128xf32>
    %222 = arith.mulf %217, %221 : vector<1x128xf32>
    %223 = vector.extract_strided_slice %203 {offsets = [0, 512], sizes = [1, 512], strides = [1, 1]} : vector<1x1024xf32> to vector<1x512xf32>
    %224 = arith.addf %1, %223 : vector<1x512xf32>
    %225 = vector.extract_strided_slice %224 {offsets = [0, 0], sizes = [1, 384], strides = [1, 1]} : vector<1x512xf32> to vector<1x384xf32>
    %226 = arith.negf %225 : vector<1x384xf32>
    %227 = math.exp %226 : vector<1x384xf32>
    %cst_52 = arith.constant 1.000000e+00 : f32
    %228 = vector.broadcast %cst_52 : f32 to vector<1x384xf32>
    %229 = arith.addf %228, %227 : vector<1x384xf32>
    %230 = arith.divf %228, %229 : vector<1x384xf32>
    %231 = vector.extract_strided_slice %224 {offsets = [0, 384], sizes = [1, 128], strides = [1, 1]} : vector<1x512xf32> to vector<1x128xf32>
    %232 = math.tanh %231 : vector<1x128xf32>
    %233 = vector.extract_strided_slice %230 {offsets = [0, 0], sizes = [1, 128], strides = [1, 1]} : vector<1x384xf32> to vector<1x128xf32>
    %234 = vector.extract_strided_slice %230 {offsets = [0, 128], sizes = [1, 128], strides = [1, 1]} : vector<1x384xf32> to vector<1x128xf32>
    %235 = vector.extract_strided_slice %230 {offsets = [0, 256], sizes = [1, 128], strides = [1, 1]} : vector<1x384xf32> to vector<1x128xf32>
    %236 = arith.mulf %234, %197 : vector<1x128xf32>
    %237 = arith.mulf %233, %232 : vector<1x128xf32>
    %238 = arith.addf %236, %237 : vector<1x128xf32>
    %239 = math.tanh %238 : vector<1x128xf32>
    %240 = arith.mulf %235, %239 : vector<1x128xf32>
    %241 = tpu.concatenate %222, %240 in 1 : vector<1x128xf32>, vector<1x128xf32> -> vector<1x256xf32>
    %242 = arith.truncf %241 : vector<1x256xf32> to vector<1x256xbf16>
    %c0_53 = arith.constant 0 : index
    %c0_54 = arith.constant 0 : index
    %243 = vector.load %arg2[%c0_53, %c0_54] : memref<256x1024xbf16, #tpu.memory_space<vmem>>, vector<256x1024xbf16>
    %cst_55 = arith.constant dense<0.000000e+00> : vector<1x1024xf32>
    %244 = tpu.matmul %242, %243, %cst_55 {dimension_numbers = #tpu.dot_dimension_numbers<[1], [0], [0], [1], [0, 0, 1, 1], [], []>} : vector<1x256xbf16>, vector<256x1024xbf16>, vector<1x1024xf32> -> vector<1x1024xf32>
    %c6 = arith.constant 6 : index
    %c0_56 = arith.constant 0 : index
    %245 = vector.load %arg6[%c6, %c0_56] : memref<8x512xf32, #tpu.memory_space<vmem>>, vector<1x512xf32>
    %246 = vector.extract_strided_slice %244 {offsets = [0, 0], sizes = [1, 512], strides = [1, 1]} : vector<1x1024xf32> to vector<1x512xf32>
    %247 = arith.addf %245, %246 : vector<1x512xf32>
    %248 = vector.extract_strided_slice %247 {offsets = [0, 0], sizes = [1, 384], strides = [1, 1]} : vector<1x512xf32> to vector<1x384xf32>
    %249 = arith.negf %248 : vector<1x384xf32>
    %250 = math.exp %249 : vector<1x384xf32>
    %cst_57 = arith.constant 1.000000e+00 : f32
    %251 = vector.broadcast %cst_57 : f32 to vector<1x384xf32>
    %252 = arith.addf %251, %250 : vector<1x384xf32>
    %253 = arith.divf %251, %252 : vector<1x384xf32>
    %254 = vector.extract_strided_slice %247 {offsets = [0, 384], sizes = [1, 128], strides = [1, 1]} : vector<1x512xf32> to vector<1x128xf32>
    %255 = math.tanh %254 : vector<1x128xf32>
    %256 = vector.extract_strided_slice %253 {offsets = [0, 0], sizes = [1, 128], strides = [1, 1]} : vector<1x384xf32> to vector<1x128xf32>
    %257 = vector.extract_strided_slice %253 {offsets = [0, 128], sizes = [1, 128], strides = [1, 1]} : vector<1x384xf32> to vector<1x128xf32>
    %258 = vector.extract_strided_slice %253 {offsets = [0, 256], sizes = [1, 128], strides = [1, 1]} : vector<1x384xf32> to vector<1x128xf32>
    %259 = arith.mulf %257, %220 : vector<1x128xf32>
    %260 = arith.mulf %256, %255 : vector<1x128xf32>
    %261 = arith.addf %259, %260 : vector<1x128xf32>
    %262 = math.tanh %261 : vector<1x128xf32>
    %263 = arith.mulf %258, %262 : vector<1x128xf32>
    %264 = vector.extract_strided_slice %244 {offsets = [0, 512], sizes = [1, 512], strides = [1, 1]} : vector<1x1024xf32> to vector<1x512xf32>
    %265 = arith.addf %1, %264 : vector<1x512xf32>
    %266 = vector.extract_strided_slice %265 {offsets = [0, 0], sizes = [1, 384], strides = [1, 1]} : vector<1x512xf32> to vector<1x384xf32>
    %267 = arith.negf %266 : vector<1x384xf32>
    %268 = math.exp %267 : vector<1x384xf32>
    %cst_58 = arith.constant 1.000000e+00 : f32
    %269 = vector.broadcast %cst_58 : f32 to vector<1x384xf32>
    %270 = arith.addf %269, %268 : vector<1x384xf32>
    %271 = arith.divf %269, %270 : vector<1x384xf32>
    %272 = vector.extract_strided_slice %265 {offsets = [0, 384], sizes = [1, 128], strides = [1, 1]} : vector<1x512xf32> to vector<1x128xf32>
    %273 = math.tanh %272 : vector<1x128xf32>
    %274 = vector.extract_strided_slice %271 {offsets = [0, 0], sizes = [1, 128], strides = [1, 1]} : vector<1x384xf32> to vector<1x128xf32>
    %275 = vector.extract_strided_slice %271 {offsets = [0, 128], sizes = [1, 128], strides = [1, 1]} : vector<1x384xf32> to vector<1x128xf32>
    %276 = vector.extract_strided_slice %271 {offsets = [0, 256], sizes = [1, 128], strides = [1, 1]} : vector<1x384xf32> to vector<1x128xf32>
    %277 = arith.mulf %275, %238 : vector<1x128xf32>
    %278 = arith.mulf %274, %273 : vector<1x128xf32>
    %279 = arith.addf %277, %278 : vector<1x128xf32>
    %280 = math.tanh %279 : vector<1x128xf32>
    %281 = arith.mulf %276, %280 : vector<1x128xf32>
    %282 = tpu.concatenate %263, %281 in 1 : vector<1x128xf32>, vector<1x128xf32> -> vector<1x256xf32>
    %283 = arith.truncf %282 : vector<1x256xf32> to vector<1x256xbf16>
    %c0_59 = arith.constant 0 : index
    %c0_60 = arith.constant 0 : index
    %284 = vector.load %arg2[%c0_59, %c0_60] : memref<256x1024xbf16, #tpu.memory_space<vmem>>, vector<256x1024xbf16>
    %cst_61 = arith.constant dense<0.000000e+00> : vector<1x1024xf32>
    %285 = tpu.matmul %283, %284, %cst_61 {dimension_numbers = #tpu.dot_dimension_numbers<[1], [0], [0], [1], [0, 0, 1, 1], [], []>} : vector<1x256xbf16>, vector<256x1024xbf16>, vector<1x1024xf32> -> vector<1x1024xf32>
    %c7 = arith.constant 7 : index
    %c0_62 = arith.constant 0 : index
    %286 = vector.load %arg6[%c7, %c0_62] : memref<8x512xf32, #tpu.memory_space<vmem>>, vector<1x512xf32>
    %287 = vector.extract_strided_slice %285 {offsets = [0, 0], sizes = [1, 512], strides = [1, 1]} : vector<1x1024xf32> to vector<1x512xf32>
    %288 = arith.addf %286, %287 : vector<1x512xf32>
    %289 = vector.extract_strided_slice %288 {offsets = [0, 0], sizes = [1, 384], strides = [1, 1]} : vector<1x512xf32> to vector<1x384xf32>
    %290 = arith.negf %289 : vector<1x384xf32>
    %291 = math.exp %290 : vector<1x384xf32>
    %cst_63 = arith.constant 1.000000e+00 : f32
    %292 = vector.broadcast %cst_63 : f32 to vector<1x384xf32>
    %293 = arith.addf %292, %291 : vector<1x384xf32>
    %294 = arith.divf %292, %293 : vector<1x384xf32>
    %295 = vector.extract_strided_slice %288 {offsets = [0, 384], sizes = [1, 128], strides = [1, 1]} : vector<1x512xf32> to vector<1x128xf32>
    %296 = math.tanh %295 : vector<1x128xf32>
    %297 = vector.extract_strided_slice %294 {offsets = [0, 0], sizes = [1, 128], strides = [1, 1]} : vector<1x384xf32> to vector<1x128xf32>
    %298 = vector.extract_strided_slice %294 {offsets = [0, 128], sizes = [1, 128], strides = [1, 1]} : vector<1x384xf32> to vector<1x128xf32>
    %299 = vector.extract_strided_slice %294 {offsets = [0, 256], sizes = [1, 128], strides = [1, 1]} : vector<1x384xf32> to vector<1x128xf32>
    %300 = arith.mulf %298, %261 : vector<1x128xf32>
    %301 = arith.mulf %297, %296 : vector<1x128xf32>
    %302 = arith.addf %300, %301 : vector<1x128xf32>
    %303 = math.tanh %302 : vector<1x128xf32>
    %304 = arith.mulf %299, %303 : vector<1x128xf32>
    %305 = vector.extract_strided_slice %285 {offsets = [0, 512], sizes = [1, 512], strides = [1, 1]} : vector<1x1024xf32> to vector<1x512xf32>
    %306 = arith.addf %1, %305 : vector<1x512xf32>
    %307 = vector.extract_strided_slice %306 {offsets = [0, 0], sizes = [1, 384], strides = [1, 1]} : vector<1x512xf32> to vector<1x384xf32>
    %308 = arith.negf %307 : vector<1x384xf32>
    %309 = math.exp %308 : vector<1x384xf32>
    %cst_64 = arith.constant 1.000000e+00 : f32
    %310 = vector.broadcast %cst_64 : f32 to vector<1x384xf32>
    %311 = arith.addf %310, %309 : vector<1x384xf32>
    %312 = arith.divf %310, %311 : vector<1x384xf32>
    %313 = vector.extract_strided_slice %306 {offsets = [0, 384], sizes = [1, 128], strides = [1, 1]} : vector<1x512xf32> to vector<1x128xf32>
    %314 = math.tanh %313 : vector<1x128xf32>
    %315 = vector.extract_strided_slice %312 {offsets = [0, 0], sizes = [1, 128], strides = [1, 1]} : vector<1x384xf32> to vector<1x128xf32>
    %316 = vector.extract_strided_slice %312 {offsets = [0, 128], sizes = [1, 128], strides = [1, 1]} : vector<1x384xf32> to vector<1x128xf32>
    %317 = vector.extract_strided_slice %312 {offsets = [0, 256], sizes = [1, 128], strides = [1, 1]} : vector<1x384xf32> to vector<1x128xf32>
    %318 = arith.mulf %316, %279 : vector<1x128xf32>
    %319 = arith.mulf %315, %314 : vector<1x128xf32>
    %320 = arith.addf %318, %319 : vector<1x128xf32>
    %321 = math.tanh %320 : vector<1x128xf32>
    %322 = arith.mulf %317, %321 : vector<1x128xf32>
    %323 = tpu.concatenate %304, %322 in 1 : vector<1x128xf32>, vector<1x128xf32> -> vector<1x256xf32>
    %324 = arith.truncf %323 : vector<1x256xf32> to vector<1x256xbf16>
    %c0_65 = arith.constant 0 : index
    %c0_66 = arith.constant 0 : index
    %325 = vector.load %arg2[%c0_65, %c0_66] : memref<256x1024xbf16, #tpu.memory_space<vmem>>, vector<256x1024xbf16>
    %cst_67 = arith.constant dense<0.000000e+00> : vector<1x1024xf32>
    %326 = tpu.matmul %324, %325, %cst_67 {dimension_numbers = #tpu.dot_dimension_numbers<[1], [0], [0], [1], [0, 0, 1, 1], [], []>} : vector<1x256xbf16>, vector<256x1024xbf16>, vector<1x1024xf32> -> vector<1x1024xf32>
    %327 = vector.extract_strided_slice %326 {offsets = [0, 512], sizes = [1, 512], strides = [1, 1]} : vector<1x1024xf32> to vector<1x512xf32>
    %328 = arith.addf %1, %327 : vector<1x512xf32>
    %329 = vector.extract_strided_slice %328 {offsets = [0, 0], sizes = [1, 384], strides = [1, 1]} : vector<1x512xf32> to vector<1x384xf32>
    %330 = arith.negf %329 : vector<1x384xf32>
    %331 = math.exp %330 : vector<1x384xf32>
    %cst_68 = arith.constant 1.000000e+00 : f32
    %332 = vector.broadcast %cst_68 : f32 to vector<1x384xf32>
    %333 = arith.addf %332, %331 : vector<1x384xf32>
    %334 = arith.divf %332, %333 : vector<1x384xf32>
    %335 = vector.extract_strided_slice %328 {offsets = [0, 384], sizes = [1, 128], strides = [1, 1]} : vector<1x512xf32> to vector<1x128xf32>
    %336 = math.tanh %335 : vector<1x128xf32>
    %337 = vector.extract_strided_slice %334 {offsets = [0, 0], sizes = [1, 128], strides = [1, 1]} : vector<1x384xf32> to vector<1x128xf32>
    %338 = vector.extract_strided_slice %334 {offsets = [0, 128], sizes = [1, 128], strides = [1, 1]} : vector<1x384xf32> to vector<1x128xf32>
    %339 = vector.extract_strided_slice %334 {offsets = [0, 256], sizes = [1, 128], strides = [1, 1]} : vector<1x384xf32> to vector<1x128xf32>
    %340 = arith.mulf %338, %320 : vector<1x128xf32>
    %341 = arith.mulf %337, %336 : vector<1x128xf32>
    %342 = arith.addf %340, %341 : vector<1x128xf32>
    %343 = math.tanh %342 : vector<1x128xf32>
    %344 = arith.mulf %339, %343 : vector<1x128xf32>
    %345 = arith.truncf %344 : vector<1x128xf32> to vector<1x128xbf16>
    %c0_69 = arith.constant 0 : index
    %c512 = arith.constant 512 : index
    %346 = vector.load %arg1[%c0_69, %c512] : memref<128x640xbf16, #tpu.memory_space<vmem>>, vector<128x128xbf16>
    %cst_70 = arith.constant dense<0.000000e+00> : vector<1x128xf32>
    %347 = tpu.matmul %345, %346, %cst_70 {dimension_numbers = #tpu.dot_dimension_numbers<[1], [0], [0], [1], [0, 0, 1, 1], [], []>} : vector<1x128xbf16>, vector<128x128xbf16>, vector<1x128xf32> -> vector<1x128xf32>
    %c2_71 = arith.constant 2 : index
    %c0_72 = arith.constant 0 : index
    %348 = vector.load %arg3[%c2_71, %c0_72] : memref<3x512xf32, #tpu.memory_space<vmem>>, vector<1x128xf32>
    %349 = arith.addf %347, %348 : vector<1x128xf32>
    %c0_73 = arith.constant 0 : index
    %c0_74 = arith.constant 0 : index
    %350 = vector.load %arg5[%c0_73, %c0_74] : memref<1x128xf32, #tpu.memory_space<vmem>>, vector<1x128xf32>
    tpu.vector_store %arg5[%c0_73, %c0_74], %349 {strides = array<i32>} : memref<1x128xf32, #tpu.memory_space<vmem>>, vector<1x128xf32>,
    return
  }
}

</mosaic_0001>

<llo_original>
// kernel: lstm_forward.1
$region0: #{lstm_forward.1}
  #allocation0 [shape = 'u32[]', space=smem, size = 0x4, offset = 0x4, fixed_abs, tag = 'smem constant byte address 0x4 - core index']
  #allocation1 [shape = 'u32[144,128]{1,0:T(1,128)}', space=vmem, size = 0x12000, scoped, tag = 'internal scratch']
  #allocation2 [shape = 'f32[8,512]{1,0:T(8,128)}', space=vmem, size = 0x4000, scoped, tag = 'scratch operand']
  %s0 = inlined_call_operand.vmem [shape: f32[8,128], index: 0, kind: input, shape index: {}]
  %s1 = inlined_call_operand.hbm [shape: bf16[128,640], index: 1, kind: input, shape index: {}]
  %s2 = inlined_call_operand.hbm [shape: bf16[256,1024], index: 2, kind: input, shape index: {}]
  %s3 = inlined_call_operand.vmem [shape: f32[3,512], index: 3, kind: input, shape index: {}]
  %s4 = inlined_call_operand.vmem [shape: f32[4,128], index: 4, kind: input, shape index: {}]
  %s5 = inlined_call_operand.vmem [shape: f32[1,128], index: 5, kind: output, shape index: {}]
  %s6 = sld [smem:[#allocation0]]
  $region38: #{lstm_forward.1} parent=0
    _
  %s8 = ssub.s32 1, %s6
  %s9 = scalar_select 0, %s8, %s6
  $region1: #{lstm_forward.1} parent=0
    #allocation3 [shape = 'u8[163840]{0}', space=vmem, size = 0x28000, scoped, tag = 'input window, operand 1, single buffered']
    #allocation4 [shape = 's32[1]{0}', space=sflag, size = 0x4, scoped, tag = 'scoped memory for lstm_forward.1']
    #allocation5 [shape = 'u8[524288]{0}', space=vmem, size = 0x80000, scoped, tag = 'input window, operand 2, single buffered']
    #allocation6 [shape = 's32[1]{0}', space=sflag, size = 0x4, scoped, tag = 'scoped memory for lstm_forward.1']
    %10 = vsyncpa [#allocation4], 0
    %11 = vsyncpa [#allocation6], 0
    // Predicated region
    $region2: #{lstm_forward.1} parent=1 // pred_check
      _
    $region3: #{lstm_forward.1} parent=1 // pred_check_branch
      %13 = sbr.rel (0) target = $region5
    $region4: #{lstm_forward.1} parent=1 // pred_region
      _
    $region5: #{lstm_forward.1} parent=1 // pred_fallthru
      _
    // Predicated region
    $region6: #{lstm_forward.1} parent=1 // pred_check
      _
    $region7: #{lstm_forward.1} parent=1 // pred_check_branch
      %15 = sbr.rel (0) target = $region9
    $region8: #{lstm_forward.1} parent=1 // pred_region
      %s17 = ssub.s32 5120, 5120
      %18 = vsyncadd [#allocation4], %s17
      %s19 = sshll.u32 [#allocation3], 4
      %s20 = int_to_ptr.vmem [resolvable:$true] %s19
      %25 = dma.hbm_to_vmem [thread:$0]  %s1, 5120, %s20, [#allocation4], 320, 320, 20
    $region9: #{lstm_forward.1} parent=1 // pred_fallthru
      _
    // Predicated region
    $region10: #{lstm_forward.1} parent=1 // pred_check
      _
    $region11: #{lstm_forward.1} parent=1 // pred_check_branch
      %27 = sbr.rel (0) target = $region13
    $region12: #{lstm_forward.1} parent=1 // pred_region
      %s29 = ssub.s32 16384, 16384
      %30 = vsyncadd [#allocation6], %s29
      %s31 = sshll.u32 [#allocation5], 4
      %s32 = int_to_ptr.vmem [resolvable:$true] %s31
      %37 = dma.hbm_to_vmem [thread:$0]  %s2, 16384, %s32, [#allocation6], 512, 512, 32
    $region13: #{lstm_forward.1} parent=1 // pred_fallthru
      _
    // Predicated region
    $region14: #{lstm_forward.1} parent=1 // pred_check
      _
    $region15: #{lstm_forward.1} parent=1 // pred_check_branch
      %39 = sbr.rel (0) target = $region17
    $region16: #{lstm_forward.1} parent=1 // pred_region
      _
    $region17: #{lstm_forward.1} parent=1 // pred_fallthru
      _
    // Predicated region
    $region18: #{lstm_forward.1} parent=1 // pred_check
      _
    $region19: #{lstm_forward.1} parent=1 // pred_check_branch
      %41 = sbr.rel (0) target = $region21
    $region20: #{lstm_forward.1} parent=1 // pred_region
      _
    $region21: #{lstm_forward.1} parent=1 // pred_fallthru
      _
    // Predicated region
    $region22: #{lstm_forward.1} parent=1 // pred_check
      _
    $region23: #{lstm_forward.1} parent=1 // pred_check_branch
      %43 = sbr.rel (0) target = $region25
    $region24: #{lstm_forward.1} parent=1 // pred_region
      %44 = dma.done [#allocation4], 5120
    $region25: #{lstm_forward.1} parent=1 // pred_fallthru
      _
    // Predicated region
    $region26: #{lstm_forward.1} parent=1 // pred_check
      _
    $region27: #{lstm_forward.1} parent=1 // pred_check_branch
      %46 = sbr.rel (0) target = $region29
    $region28: #{lstm_forward.1} parent=1 // pred_region
      %47 = dma.done [#allocation6], 16384
    $region29: #{lstm_forward.1} parent=1 // pred_fallthru
      _
    %v49 = vld [vmem:[%s3] ss:$4 sm:$0xf]
    %s50 = scalar_lea.vmem %s3, 1
    %v51 = vld [vmem:[%s50] ss:$4 sm:$0xf]
    %v52 = vld [vmem:[%s0] sm:$0xff]
    %v53 = vpack.c.bf16 %v52, %v52
    %v54 = vld [vmem:[#allocation3] sm:$0xff]
    %v55 = vld [vmem:[#allocation3 + $0x8] sm:$0xff]
    %v56 = vld [vmem:[#allocation3 + $0x14] sm:$0xff]
    %v57 = vld [vmem:[#allocation3 + $0x1c] sm:$0xff]
    %v58 = vld [vmem:[#allocation3 + $0x28] sm:$0xff]
    %v59 = vld [vmem:[#allocation3 + $0x30] sm:$0xff]
    %v60 = vld [vmem:[#allocation3 + $0x3c] sm:$0xff]
    %v61 = vld [vmem:[#allocation3 + $0x44] sm:$0xff]
    %v62 = vld [vmem:[#allocation3 + $0x50] sm:$0xff]
    %v63 = vld [vmem:[#allocation3 + $0x58] sm:$0xff]
    %v64 = vld [vmem:[#allocation3 + $0x64] sm:$0xff]
    %v65 = vld [vmem:[#allocation3 + $0x6c] sm:$0xff]
    %v66 = vld [vmem:[#allocation3 + $0x78] sm:$0xff]
    %v67 = vld [vmem:[#allocation3 + $0x80] sm:$0xff]
    %v68 = vld [vmem:[#allocation3 + $0x8c] sm:$0xff]
    %v69 = vld [vmem:[#allocation3 + $0x94] sm:$0xff]
    %v70 = vld [vmem:[#allocation3 + $0xa0] sm:$0xff]
    %v71 = vld [vmem:[#allocation3 + $0xa8] sm:$0xff]
    %v72 = vld [vmem:[#allocation3 + $0xb4] sm:$0xff]
    %v73 = vld [vmem:[#allocation3 + $0xbc] sm:$0xff]
    %v74 = vld [vmem:[#allocation3 + $0xc8] sm:$0xff]
    %v75 = vld [vmem:[#allocation3 + $0xd0] sm:$0xff]
    %v76 = vld [vmem:[#allocation3 + $0xdc] sm:$0xff]
    %v77 = vld [vmem:[#allocation3 + $0xe4] sm:$0xff]
    %v78 = vld [vmem:[#allocation3 + $0xf0] sm:$0xff]
    %v79 = vld [vmem:[#allocation3 + $0xf8] sm:$0xff]
    %v80 = vld [vmem:[#allocation3 + $0x104] sm:$0xff]
    %v81 = vld [vmem:[#allocation3 + $0x10c] sm:$0xff]
    %v82 = vld [vmem:[#allocation3 + $0x118] sm:$0xff]
    %v83 = vld [vmem:[#allocation3 + $0x120] sm:$0xff]
    %v84 = vld [vmem:[#allocation3 + $0x12c] sm:$0xff]
    %v85 = vld [vmem:[#allocation3 + $0x134] sm:$0xff]
    %v87 = vlaneseq
    %v88 = vshrl.u32 %v87, 7
    %v89 = vsub.s32 0, %v88
    %v90 = vrot.slane %v49, %v89
    %v91 = vlaneseq
    %v92 = vshrl.u32 %v91, 7
    %v93 = vsub.s32 1, %v92
    %v94 = vrot.slane %v49, %v93
    %v95 = vlaneseq
    %v96 = vshrl.u32 %v95, 7
    %v97 = vsub.s32 2, %v96
    %v98 = vrot.slane %v49, %v97
    %v99 = vlaneseq
    %v100 = vshrl.u32 %v99, 7
    %v101 = vsub.s32 3, %v100
    %v102 = vrot.slane %v49, %v101
    %v139 = vunpack.c.l.b16 %v54
    %v140 = vunpack.c.h.b16 %v54
    %v141 = vunpack.c.l.b16 %v55
    %v142 = vunpack.c.h.b16 %v55
    %v143 = vunpack.c.l.b16 %v56
    %v144 = vunpack.c.h.b16 %v56
    %v145 = vunpack.c.l.b16 %v57
    %v146 = vunpack.c.h.b16 %v57
    %v147 = vunpack.c.l.b16 %v58
    %v148 = vunpack.c.h.b16 %v58
    %v149 = vunpack.c.l.b16 %v59
    %v150 = vunpack.c.h.b16 %v59
    %v151 = vunpack.c.l.b16 %v60
    %v152 = vunpack.c.h.b16 %v60
    %v153 = vunpack.c.l.b16 %v61
    %v154 = vunpack.c.h.b16 %v61
    %v155 = vunpack.c.l.b16 %v62
    %v156 = vunpack.c.h.b16 %v62
    %v157 = vunpack.c.l.b16 %v63
    %v158 = vunpack.c.h.b16 %v63
    %v159 = vunpack.c.l.b16 %v64
    %v160 = vunpack.c.h.b16 %v64
    %v161 = vunpack.c.l.b16 %v65
    %v162 = vunpack.c.h.b16 %v65
    %v163 = vunpack.c.l.b16 %v66
    %v164 = vunpack.c.h.b16 %v66
    %v165 = vunpack.c.l.b16 %v67
    %v166 = vunpack.c.h.b16 %v67
    %v167 = vunpack.c.l.b16 %v68
    %v168 = vunpack.c.h.b16 %v68
    %v169 = vunpack.c.l.b16 %v69
    %v170 = vunpack.c.h.b16 %v69
    %v171 = vunpack.c.l.b16 %v70
    %v172 = vunpack.c.h.b16 %v70
    %v173 = vunpack.c.l.b16 %v71
    %v174 = vunpack.c.h.b16 %v71
    %v175 = vunpack.c.l.b16 %v72
    %v176 = vunpack.c.h.b16 %v72
    %v177 = vunpack.c.l.b16 %v73
    %v178 = vunpack.c.h.b16 %v73
    %v179 = vunpack.c.l.b16 %v74
    %v180 = vunpack.c.h.b16 %v74
    %v181 = vunpack.c.l.b16 %v75
    %v182 = vunpack.c.h.b16 %v75
    %v183 = vunpack.c.l.b16 %v76
    %v184 = vunpack.c.h.b16 %v76
    %v185 = vunpack.c.l.b16 %v77
    %v186 = vunpack.c.h.b16 %v77
    %v187 = vunpack.c.l.b16 %v78
    %v188 = vunpack.c.h.b16 %v78
    %v189 = vunpack.c.l.b16 %v79
    %v190 = vunpack.c.h.b16 %v79
    %v191 = vunpack.c.l.b16 %v80
    %v192 = vunpack.c.h.b16 %v80
    %v193 = vunpack.c.l.b16 %v81
    %v194 = vunpack.c.h.b16 %v81
    %v195 = vunpack.c.l.b16 %v82
    %v196 = vunpack.c.h.b16 %v82
    %v197 = vunpack.c.l.b16 %v83
    %v198 = vunpack.c.h.b16 %v83
    %v199 = vunpack.c.l.b16 %v84
    %v200 = vunpack.c.h.b16 %v84
    %v201 = vunpack.c.l.b16 %v85
    %v202 = vunpack.c.h.b16 %v85
    %v203 = vpack.c.b16 %v143, %v139
    %v204 = vpack.c.b16 %v144, %v140
    %v205 = vpack.c.b16 %v145, %v141
    %v206 = vpack.c.b16 %v146, %v142
    %v207 = vpack.c.b16 %v151, %v147
    %v208 = vpack.c.b16 %v152, %v148
    %v209 = vpack.c.b16 %v153, %v149
    %v210 = vpack.c.b16 %v154, %v150
    %v211 = vpack.c.b16 %v159, %v155
    %v212 = vpack.c.b16 %v160, %v156
    %v213 = vpack.c.b16 %v161, %v157
    %v214 = vpack.c.b16 %v162, %v158
    %v215 = vpack.c.b16 %v167, %v163
    %v216 = vpack.c.b16 %v168, %v164
    %v217 = vpack.c.b16 %v169, %v165
    %v218 = vpack.c.b16 %v170, %v166
    %v219 = vpack.c.b16 %v175, %v171
    %v220 = vpack.c.b16 %v176, %v172
    %v221 = vpack.c.b16 %v177, %v173
    %v222 = vpack.c.b16 %v178, %v174
    %v223 = vpack.c.b16 %v183, %v179
    %v224 = vpack.c.b16 %v184, %v180
    %v225 = vpack.c.b16 %v185, %v181
    %v226 = vpack.c.b16 %v186, %v182
    %v227 = vpack.c.b16 %v191, %v187
    %v228 = vpack.c.b16 %v192, %v188
    %v229 = vpack.c.b16 %v193, %v189
    %v230 = vpack.c.b16 %v194, %v190
    %v231 = vpack.c.b16 %v199, %v195
    %v232 = vpack.c.b16 %v200, %v196
    %v233 = vpack.c.b16 %v201, %v197
    %v234 = vpack.c.b16 %v202, %v198
    %267 = vmatprep.subr.bf16.mxu0 %v204
    %268 = vmatpush1.bf16.msra.mxu0 %v203
    %269 = vmatprep.subr.bf16.mxu0 %v208
    %270 = vmatpush1.bf16.msra.mxu0 %v207
    %271 = vmatprep.subr.bf16.mxu0 %v212
    %272 = vmatpush1.bf16.msra.mxu0 %v211
    %273 = vmatprep.subr.bf16.mxu0 %v216
    %274 = vmatpush1.bf16.msra.mxu0 %v215
    %275 = vmatprep.subr.bf16.mxu0 %v220
    %276 = vmatpush1.bf16.msra.mxu0 %v219
    %277 = vmatprep.subr.bf16.mxu0 %v224
    %278 = vmatpush1.bf16.msra.mxu0 %v223
    %279 = vmatprep.subr.bf16.mxu0 %v228
    %280 = vmatpush1.bf16.msra.mxu0 %v227
    %281 = vmatprep.subr.bf16.mxu0 %v232
    %282 = vmatpush1.bf16.msra.mxu0 %v231
    %283 = vmatprep.subr.bf16.mxu0 0
    %284 = vmatpush1.bf16.msra.mxu0 0
    %285 = vmatprep.subr.bf16.mxu0 0
    %286 = vmatpush1.bf16.msra.mxu0 0
    %287 = vmatprep.subr.bf16.mxu0 0
    %288 = vmatpush1.bf16.msra.mxu0 0
    %289 = vmatprep.subr.bf16.mxu0 0
    %290 = vmatpush1.bf16.msra.mxu0 0
    %291 = vmatprep.subr.bf16.mxu0 0
    %292 = vmatpush1.bf16.msra.mxu0 0
    %293 = vmatprep.subr.bf16.mxu0 0
    %294 = vmatpush1.bf16.msra.mxu0 0
    %295 = vmatprep.subr.bf16.mxu0 0
    %296 = vmatpush1.bf16.msra.mxu0 0
    %297 = vmatprep.subr.bf16.mxu0 0
    %298 = vmatpush1.bf16.msra.mxu0 0
    %299 = vmatprep.mubr.bf16.mxu0 0
    %300 = vmatmul.mubr.bf16.gmra.mrb[0].mxu0 %v53
    %v301 = vpop.f32.mrb[0].mxu0
    %v302 = vadd.f32 %v90, %v301
    %v303 = vpop.f32.mrb[0].mxu0
    %v304 = vadd.f32 %v94, %v303
    %v305 = vpop.f32.mrb[0].mxu0
    %v306 = vpop.f32.mrb[0].mxu0
    %307 = vdwg.mxu0
    %308 = vmatprep.subr.bf16.mxu0 %v206
    %309 = vmatpush1.bf16.msra.mxu0 %v205
    %310 = vmatprep.subr.bf16.mxu0 %v210
    %311 = vmatpush1.bf16.msra.mxu0 %v209
    %312 = vmatprep.subr.bf16.mxu0 %v214
    %313 = vmatpush1.bf16.msra.mxu0 %v213
    %314 = vmatprep.subr.bf16.mxu0 %v218
    %315 = vmatpush1.bf16.msra.mxu0 %v217
    %316 = vmatprep.subr.bf16.mxu0 %v222
    %317 = vmatpush1.bf16.msra.mxu0 %v221
    %318 = vmatprep.subr.bf16.mxu0 %v226
    %319 = vmatpush1.bf16.msra.mxu0 %v225
    %320 = vmatprep.subr.bf16.mxu0 %v230
    %321 = vmatpush1.bf16.msra.mxu0 %v229
    %322 = vmatprep.subr.bf16.mxu0 %v234
    %323 = vmatpush1.bf16.msra.mxu0 %v233
    %324 = vmatprep.subr.bf16.mxu0 0
    %325 = vmatpush1.bf16.msra.mxu0 0
    %326 = vmatprep.subr.bf16.mxu0 0
    %327 = vmatpush1.bf16.msra.mxu0 0
    %328 = vmatprep.subr.bf16.mxu0 0
    %329 = vmatpush1.bf16.msra.mxu0 0
    %330 = vmatprep.subr.bf16.mxu0 0
    %331 = vmatpush1.bf16.msra.mxu0 0
    %332 = vmatprep.subr.bf16.mxu0 0
    %333 = vmatpush1.bf16.msra.mxu0 0
    %334 = vmatprep.subr.bf16.mxu0 0
    %335 = vmatpush1.bf16.msra.mxu0 0
    %336 = vmatprep.subr.bf16.mxu0 0
    %337 = vmatpush1.bf16.msra.mxu0 0
    %338 = vmatprep.subr.bf16.mxu0 0
    %339 = vmatpush1.bf16.msra.mxu0 0
    %340 = vmatprep.mubr.bf16.mxu0 0
    %341 = vmatmul.mubr.bf16.gmra.mrb[0].mxu0 %v53
    %v342 = vpop.f32.mrb[0].mxu0
    %v343 = vadd.f32 %v98, %v342
    %v344 = vpop.f32.mrb[0].mxu0
    %v345 = vadd.f32 %v102, %v344
    %v346 = vpop.f32.mrb[0].mxu0
    %v347 = vpop.f32.mrb[0].mxu0
    %348 = vdwg.mxu0
    %349 = vst [vmem:[#allocation2] sm:$0xff] %v302
    %350 = vst [vmem:[#allocation2 + $0x8] sm:$0xff] %v304
    %351 = vst [vmem:[#allocation2 + $0x10] sm:$0xff] %v343
    %352 = vst [vmem:[#allocation2 + $0x18] sm:$0xff] %v345
    %v353 = vld [vmem:[%s4] sm:$0x1]
    %v354 = vld [vmem:[%s4 + $0x1] sm:$0x1]
    %v355 = vld [vmem:[%s4 + $0x2] sm:$0x1]
    %v356 = vld [vmem:[%s4 + $0x3] sm:$0x1]
    %v357 = vpack.c.bf16 %v353, %v353
    %v358 = vpack.c.bf16 %v355, %v355
    %v359 = vld [vmem:[#allocation5] sm:$0xff]
    %v360 = vld [vmem:[#allocation5 + $0x8] sm:$0xff]
    %v361 = vld [vmem:[#allocation5 + $0x10] sm:$0xff]
    %v362 = vld [vmem:[#allocation5 + $0x18] sm:$0xff]
    %v363 = vld [vmem:[#allocation5 + $0x20] sm:$0xff]
    %v364 = vld [vmem:[#allocation5 + $0x28] sm:$0xff]
    %v365 = vld [vmem:[#allocation5 + $0x30] sm:$0xff]
    %v366 = vld [vmem:[#allocation5 + $0x38] sm:$0xff]
    %v367 = vld [vmem:[#allocation5 + $0x40] sm:$0xff]
    %v368 = vld [vmem:[#allocation5 + $0x48] sm:$0xff]
    %v369 = vld [vmem:[#allocation5 + $0x50] sm:$0xff]
    %v370 = vld [vmem:[#allocation5 + $0x58] sm:$0xff]
    %v371 = vld [vmem:[#allocation5 + $0x60] sm:$0xff]
    %v372 = vld [vmem:[#allocation5 + $0x68] sm:$0xff]
    %v373 = vld [vmem:[#allocation5 + $0x70] sm:$0xff]
    %v374 = vld [vmem:[#allocation5 + $0x78] sm:$0xff]
    %v375 = vld [vmem:[#allocation5 + $0x80] sm:$0xff]
    %v376 = vld [vmem:[#allocation5 + $0x88] sm:$0xff]
    %v377 = vld [vmem:[#allocation5 + $0x90] sm:$0xff]
    %v378 = vld [vmem:[#allocation5 + $0x98] sm:$0xff]
    %v379 = vld [vmem:[#allocation5 + $0xa0] sm:$0xff]
    %v380 = vld [vmem:[#allocation5 + $0xa8] sm:$0xff]
    %v381 = vld [vmem:[#allocation5 + $0xb0] sm:$0xff]
    %v382 = vld [vmem:[#allocation5 + $0xb8] sm:$0xff]
    %v383 = vld [vmem:[#allocation5 + $0xc0] sm:$0xff]
    %v384 = vld [vmem:[#allocation5 + $0xc8] sm:$0xff]
    %v385 = vld [vmem:[#allocation5 + $0xd0] sm:$0xff]
    %v386 = vld [vmem:[#allocation5 + $0xd8] sm:$0xff]
    %v387 = vld [vmem:[#allocation5 + $0xe0] sm:$0xff]
    %v388 = vld [vmem:[#allocation5 + $0xe8] sm:$0xff]
    %v389 = vld [vmem:[#allocation5 + $0xf0] sm:$0xff]
    %v390 = vld [vmem:[#allocation5 + $0xf8] sm:$0xff]
    %v391 = vld [vmem:[#allocation5 + $0x100] sm:$0xff]
    %v392 = vld [vmem:[#allocation5 + $0x108] sm:$0xff]
    %v393 = vld [vmem:[#allocation5 + $0x110] sm:$0xff]
    %v394 = vld [vmem:[#allocation5 + $0x118] sm:$0xff]
    %v395 = vld [vmem:[#allocation5 + $0x120] sm:$0xff]
    %v396 = vld [vmem:[#allocation5 + $0x128] sm:$0xff]
    %v397 = vld [vmem:[#allocation5 + $0x130] sm:$0xff]
    %v398 = vld [vmem:[#allocation5 + $0x138] sm:$0xff]
    %v399 = vld [vmem:[#allocation5 + $0x140] sm:$0xff]
    %v400 = vld [vmem:[#allocation5 + $0x148] sm:$0xff]
    %v401 = vld [vmem:[#allocation5 + $0x150] sm:$0xff]
    %v402 = vld [vmem:[#allocation5 + $0x158] sm:$0xff]
    %v403 = vld [vmem:[#allocation5 + $0x160] sm:$0xff]
    %v404 = vld [vmem:[#allocation5 + $0x168] sm:$0xff]
    %v405 = vld [vmem:[#allocation5 + $0x170] sm:$0xff]
    %v406 = vld [vmem:[#allocation5 + $0x178] sm:$0xff]
    %v407 = vld [vmem:[#allocation5 + $0x180] sm:$0xff]
    %v408 = vld [vmem:[#allocation5 + $0x188] sm:$0xff]
    %v409 = vld [vmem:[#allocation5 + $0x190] sm:$0xff]
    %v410 = vld [vmem:[#allocation5 + $0x198] sm:$0xff]
    %v411 = vld [vmem:[#allocation5 + $0x1a0] sm:$0xff]
    %v412 = vld [vmem:[#allocation5 + $0x1a8] sm:$0xff]
    %v413 = vld [vmem:[#allocation5 + $0x1b0] sm:$0xff]
    %v414 = vld [vmem:[#allocation5 + $0x1b8] sm:$0xff]
    %v415 = vld [vmem:[#allocation5 + $0x1c0] sm:$0xff]
    %v416 = vld [vmem:[#allocation5 + $0x1c8] sm:$0xff]
    %v417 = vld [vmem:[#allocation5 + $0x1d0] sm:$0xff]
    %v418 = vld [vmem:[#allocation5 + $0x1d8] sm:$0xff]
    %v419 = vld [vmem:[#allocation5 + $0x1e0] sm:$0xff]
    %v420 = vld [vmem:[#allocation5 + $0x1e8] sm:$0xff]
    %v421 = vld [vmem:[#allocation5 + $0x1f0] sm:$0xff]
    %v422 = vld [vmem:[#allocation5 + $0x1f8] sm:$0xff]
    %v423 = vld [vmem:[#allocation5 + $0x200] sm:$0xff]
    %v424 = vld [vmem:[#allocation5 + $0x208] sm:$0xff]
    %v425 = vld [vmem:[#allocation5 + $0x210] sm:$0xff]
    %v426 = vld [vmem:[#allocation5 + $0x218] sm:$0xff]
    %v427 = vld [vmem:[#allocation5 + $0x220] sm:$0xff]
    %v428 = vld [vmem:[#allocation5 + $0x228] sm:$0xff]
    %v429 = vld [vmem:[#allocation5 + $0x230] sm:$0xff]
    %v430 = vld [vmem:[#allocation5 + $0x238] sm:$0xff]
    %v431 = vld [vmem:[#allocation5 + $0x240] sm:$0xff]
    %v432 = vld [vmem:[#allocation5 + $0x248] sm:$0xff]
    %v433 = vld [vmem:[#allocation5 + $0x250] sm:$0xff]
    %v434 = vld [vmem:[#allocation5 + $0x258] sm:$0xff]
    %v435 = vld [vmem:[#allocation5 + $0x260] sm:$0xff]
    %v436 = vld [vmem:[#allocation5 + $0x268] sm:$0xff]
    %v437 = vld [vmem:[#allocation5 + $0x270] sm:$0xff]
    %v438 = vld [vmem:[#allocation5 + $0x278] sm:$0xff]
    %v439 = vld [vmem:[#allocation5 + $0x280] sm:$0xff]
    %v440 = vld [vmem:[#allocation5 + $0x288] sm:$0xff]
    %v441 = vld [vmem:[#allocation5 + $0x290] sm:$0xff]
    %v442 = vld [vmem:[#allocation5 + $0x298] sm:$0xff]
    %v443 = vld [vmem:[#allocation5 + $0x2a0] sm:$0xff]
    %v444 = vld [vmem:[#allocation5 + $0x2a8] sm:$0xff]
    %v445 = vld [vmem:[#allocation5 + $0x2b0] sm:$0xff]
    %v446 = vld [vmem:[#allocation5 + $0x2b8] sm:$0xff]
    %v447 = vld [vmem:[#allocation5 + $0x2c0] sm:$0xff]
    %v448 = vld [vmem:[#allocation5 + $0x2c8] sm:$0xff]
    %v449 = vld [vmem:[#allocation5 + $0x2d0] sm:$0xff]
    %v450 = vld [vmem:[#allocation5 + $0x2d8] sm:$0xff]
    %v451 = vld [vmem:[#allocation5 + $0x2e0] sm:$0xff]
    %v452 = vld [vmem:[#allocation5 + $0x2e8] sm:$0xff]
    %v453 = vld [vmem:[#allocation5 + $0x2f0] sm:$0xff]
    %v454 = vld [vmem:[#allocation5 + $0x2f8] sm:$0xff]
    %v455 = vld [vmem:[#allocation5 + $0x300] sm:$0xff]
    %v456 = vld [vmem:[#allocation5 + $0x308] sm:$0xff]
    %v457 = vld [vmem:[#allocation5 + $0x310] sm:$0xff]
    %v458 = vld [vmem:[#allocation5 + $0x318] sm:$0xff]
    %v459 = vld [vmem:[#allocation5 + $0x320] sm:$0xff]
    %v460 = vld [vmem:[#allocation5 + $0x328] sm:$0xff]
    %v461 = vld [vmem:[#allocation5 + $0x330] sm:$0xff]
    %v462 = vld [vmem:[#allocation5 + $0x338] sm:$0xff]
    %v463 = vld [vmem:[#allocation5 + $0x340] sm:$0xff]
    %v464 = vld [vmem:[#allocation5 + $0x348] sm:$0xff]
    %v465 = vld [vmem:[#allocation5 + $0x350] sm:$0xff]
    %v466 = vld [vmem:[#allocation5 + $0x358] sm:$0xff]
    %v467 = vld [vmem:[#allocation5 + $0x360] sm:$0xff]
    %v468 = vld [vmem:[#allocation5 + $0x368] sm:$0xff]
    %v469 = vld [vmem:[#allocation5 + $0x370] sm:$0xff]
    %v470 = vld [vmem:[#allocation5 + $0x378] sm:$0xff]
    %v471 = vld [vmem:[#allocation5 + $0x380] sm:$0xff]
    %v472 = vld [vmem:[#allocation5 + $0x388] sm:$0xff]
    %v473 = vld [vmem:[#allocation5 + $0x390] sm:$0xff]
    %v474 = vld [vmem:[#allocation5 + $0x398] sm:$0xff]
    %v475 = vld [vmem:[#allocation5 + $0x3a0] sm:$0xff]
    %v476 = vld [vmem:[#allocation5 + $0x3a8] sm:$0xff]
    %v477 = vld [vmem:[#allocation5 + $0x3b0] sm:$0xff]
    %v478 = vld [vmem:[#allocation5 + $0x3b8] sm:$0xff]
    %v479 = vld [vmem:[#allocation5 + $0x3c0] sm:$0xff]
    %v480 = vld [vmem:[#allocation5 + $0x3c8] sm:$0xff]
    %v481 = vld [vmem:[#allocation5 + $0x3d0] sm:$0xff]
    %v482 = vld [vmem:[#allocation5 + $0x3d8] sm:$0xff]
    %v483 = vld [vmem:[#allocation5 + $0x3e0] sm:$0xff]
    %v484 = vld [vmem:[#allocation5 + $0x3e8] sm:$0xff]
    %v485 = vld [vmem:[#allocation5 + $0x3f0] sm:$0xff]
    %v486 = vld [vmem:[#allocation5 + $0x3f8] sm:$0xff]
    %v551 = vunpack.c.l.b16 %v359
    %v552 = vunpack.c.h.b16 %v359
    %v553 = vunpack.c.l.b16 %v360
    %v554 = vunpack.c.h.b16 %v360
    %v555 = vunpack.c.l.b16 %v363
    %v556 = vunpack.c.h.b16 %v363
    %v557 = vunpack.c.l.b16 %v364
    %v558 = vunpack.c.h.b16 %v364
    %v559 = vunpack.c.l.b16 %v367
    %v560 = vunpack.c.h.b16 %v367
    %v561 = vunpack.c.l.b16 %v368
    %v562 = vunpack.c.h.b16 %v368
    %v563 = vunpack.c.l.b16 %v371
    %v564 = vunpack.c.h.b16 %v371
    %v565 = vunpack.c.l.b16 %v372
    %v566 = vunpack.c.h.b16 %v372
    %v567 = vunpack.c.l.b16 %v375
    %v568 = vunpack.c.h.b16 %v375
    %v569 = vunpack.c.l.b16 %v376
    %v570 = vunpack.c.h.b16 %v376
    %v571 = vunpack.c.l.b16 %v379
    %v572 = vunpack.c.h.b16 %v379
    %v573 = vunpack.c.l.b16 %v380
    %v574 = vunpack.c.h.b16 %v380
    %v575 = vunpack.c.l.b16 %v383
    %v576 = vunpack.c.h.b16 %v383
    %v577 = vunpack.c.l.b16 %v384
    %v578 = vunpack.c.h.b16 %v384
    %v579 = vunpack.c.l.b16 %v387
    %v580 = vunpack.c.h.b16 %v387
    %v581 = vunpack.c.l.b16 %v388
    %v582 = vunpack.c.h.b16 %v388
    %v583 = vunpack.c.l.b16 %v391
    %v584 = vunpack.c.h.b16 %v391
    %v585 = vunpack.c.l.b16 %v392
    %v586 = vunpack.c.h.b16 %v392
    %v587 = vunpack.c.l.b16 %v395
    %v588 = vunpack.c.h.b16 %v395
    %v589 = vunpack.c.l.b16 %v396
    %v590 = vunpack.c.h.b16 %v396
    %v591 = vunpack.c.l.b16 %v399
    %v592 = vunpack.c.h.b16 %v399
    %v593 = vunpack.c.l.b16 %v400
    %v594 = vunpack.c.h.b16 %v400
    %v595 = vunpack.c.l.b16 %v403
    %v596 = vunpack.c.h.b16 %v403
    %v597 = vunpack.c.l.b16 %v404
    %v598 = vunpack.c.h.b16 %v404
    %v599 = vunpack.c.l.b16 %v407
    %v600 = vunpack.c.h.b16 %v407
    %v601 = vunpack.c.l.b16 %v408
    %v602 = vunpack.c.h.b16 %v408
    %v603 = vunpack.c.l.b16 %v411
    %v604 = vunpack.c.h.b16 %v411
    %v605 = vunpack.c.l.b16 %v412
    %v606 = vunpack.c.h.b16 %v412
    %v607 = vunpack.c.l.b16 %v415
    %v608 = vunpack.c.h.b16 %v415
    %v609 = vunpack.c.l.b16 %v416
    %v610 = vunpack.c.h.b16 %v416
    %v611 = vunpack.c.l.b16 %v419
    %v612 = vunpack.c.h.b16 %v419
    %v613 = vunpack.c.l.b16 %v420
    %v614 = vunpack.c.h.b16 %v420
    %v615 = vunpack.c.l.b16 %v423
    %v616 = vunpack.c.h.b16 %v423
    %v617 = vunpack.c.l.b16 %v424
    %v618 = vunpack.c.h.b16 %v424
    %v619 = vunpack.c.l.b16 %v427
    %v620 = vunpack.c.h.b16 %v427
    %v621 = vunpack.c.l.b16 %v428
    %v622 = vunpack.c.h.b16 %v428
    %v623 = vunpack.c.l.b16 %v431
    %v624 = vunpack.c.h.b16 %v431
    %v625 = vunpack.c.l.b16 %v432
    %v626 = vunpack.c.h.b16 %v432
    %v627 = vunpack.c.l.b16 %v435
    %v628 = vunpack.c.h.b16 %v435
    %v629 = vunpack.c.l.b16 %v436
    %v630 = vunpack.c.h.b16 %v436
    %v631 = vunpack.c.l.b16 %v439
    %v632 = vunpack.c.h.b16 %v439
    %v633 = vunpack.c.l.b16 %v440
    %v634 = vunpack.c.h.b16 %v440
    %v635 = vunpack.c.l.b16 %v443
    %v636 = vunpack.c.h.b16 %v443
    %v637 = vunpack.c.l.b16 %v444
    %v638 = vunpack.c.h.b16 %v444
    %v639 = vunpack.c.l.b16 %v447
    %v640 = vunpack.c.h.b16 %v447
    %v641 = vunpack.c.l.b16 %v448
    %v642 = vunpack.c.h.b16 %v448
    %v643 = vunpack.c.l.b16 %v451
    %v644 = vunpack.c.h.b16 %v451
    %v645 = vunpack.c.l.b16 %v452
    %v646 = vunpack.c.h.b16 %v452
    %v647 = vunpack.c.l.b16 %v455
    %v648 = vunpack.c.h.b16 %v455
    %v649 = vunpack.c.l.b16 %v456
    %v650 = vunpack.c.h.b16 %v456
    %v651 = vunpack.c.l.b16 %v459
    %v652 = vunpack.c.h.b16 %v459
    %v653 = vunpack.c.l.b16 %v460
    %v654 = vunpack.c.h.b16 %v460
    %v655 = vunpack.c.l.b16 %v463
    %v656 = vunpack.c.h.b16 %v463
    %v657 = vunpack.c.l.b16 %v464
    %v658 = vunpack.c.h.b16 %v464
    %v659 = vunpack.c.l.b16 %v467
    %v660 = vunpack.c.h.b16 %v467
    %v661 = vunpack.c.l.b16 %v468
    %v662 = vunpack.c.h.b16 %v468
    %v663 = vunpack.c.l.b16 %v471
    %v664 = vunpack.c.h.b16 %v471
    %v665 = vunpack.c.l.b16 %v472
    %v666 = vunpack.c.h.b16 %v472
    %v667 = vunpack.c.l.b16 %v475
    %v668 = vunpack.c.h.b16 %v475
    %v669 = vunpack.c.l.b16 %v476
    %v670 = vunpack.c.h.b16 %v476
    %v671 = vunpack.c.l.b16 %v479
    %v672 = vunpack.c.h.b16 %v479
    %v673 = vunpack.c.l.b16 %v480
    %v674 = vunpack.c.h.b16 %v480
    %v675 = vunpack.c.l.b16 %v483
    %v676 = vunpack.c.h.b16 %v483
    %v677 = vunpack.c.l.b16 %v484
    %v678 = vunpack.c.h.b16 %v484
    %v679 = vpack.c.b16 %v555, %v551
    %v680 = vpack.c.b16 %v556, %v552
    %v681 = vpack.c.b16 %v557, %v553
    %v682 = vpack.c.b16 %v558, %v554
    %v683 = vpack.c.b16 %v563, %v559
    %v684 = vpack.c.b16 %v564, %v560
    %v685 = vpack.c.b16 %v565, %v561
    %v686 = vpack.c.b16 %v566, %v562
    %v687 = vpack.c.b16 %v571, %v567
    %v688 = vpack.c.b16 %v572, %v568
    %v689 = vpack.c.b16 %v573, %v569
    %v690 = vpack.c.b16 %v574, %v570
    %v691 = vpack.c.b16 %v579, %v575
    %v692 = vpack.c.b16 %v580, %v576
    %v693 = vpack.c.b16 %v581, %v577
    %v694 = vpack.c.b16 %v582, %v578
    %v695 = vpack.c.b16 %v587, %v583
    %v696 = vpack.c.b16 %v588, %v584
    %v697 = vpack.c.b16 %v589, %v585
    %v698 = vpack.c.b16 %v590, %v586
    %v699 = vpack.c.b16 %v595, %v591
    %v700 = vpack.c.b16 %v596, %v592
    %v701 = vpack.c.b16 %v597, %v593
    %v702 = vpack.c.b16 %v598, %v594
    %v703 = vpack.c.b16 %v603, %v599
    %v704 = vpack.c.b16 %v604, %v600
    %v705 = vpack.c.b16 %v605, %v601
    %v706 = vpack.c.b16 %v606, %v602
    %v707 = vpack.c.b16 %v611, %v607
    %v708 = vpack.c.b16 %v612, %v608
    %v709 = vpack.c.b16 %v613, %v609
    %v710 = vpack.c.b16 %v614, %v610
    %v711 = vpack.c.b16 %v619, %v615
    %v712 = vpack.c.b16 %v620, %v616
    %v713 = vpack.c.b16 %v621, %v617
    %v714 = vpack.c.b16 %v622, %v618
    %v715 = vpack.c.b16 %v627, %v623
    %v716 = vpack.c.b16 %v628, %v624
    %v717 = vpack.c.b16 %v629, %v625
    %v718 = vpack.c.b16 %v630, %v626
    %v719 = vpack.c.b16 %v635, %v631
    %v720 = vpack.c.b16 %v636, %v632
    %v721 = vpack.c.b16 %v637, %v633
    %v722 = vpack.c.b16 %v638, %v634
    %v723 = vpack.c.b16 %v643, %v639
    %v724 = vpack.c.b16 %v644, %v640
    %v725 = vpack.c.b16 %v645, %v641
    %v726 = vpack.c.b16 %v646, %v642
    %v727 = vpack.c.b16 %v651, %v647
    %v728 = vpack.c.b16 %v652, %v648
    %v729 = vpack.c.b16 %v653, %v649
    %v730 = vpack.c.b16 %v654, %v650
    %v731 = vpack.c.b16 %v659, %v655
    %v732 = vpack.c.b16 %v660, %v656
    %v733 = vpack.c.b16 %v661, %v657
    %v734 = vpack.c.b16 %v662, %v658
    %v735 = vpack.c.b16 %v667, %v663
    %v736 = vpack.c.b16 %v668, %v664
    %v737 = vpack.c.b16 %v669, %v665
    %v738 = vpack.c.b16 %v670, %v666
    %v739 = vpack.c.b16 %v675, %v671
    %v740 = vpack.c.b16 %v676, %v672
    %v741 = vpack.c.b16 %v677, %v673
    %v742 = vpack.c.b16 %v678, %v674
    %807 = vmatprep.subr.bf16.mxu0 %v680
    %808 = vmatpush1.bf16.msra.mxu0 %v679
    %809 = vmatprep.subr.bf16.mxu0 %v684
    %810 = vmatpush1.bf16.msra.mxu0 %v683
    %811 = vmatprep.subr.bf16.mxu0 %v688
    %812 = vmatpush1.bf16.msra.mxu0 %v687
    %813 = vmatprep.subr.bf16.mxu0 %v692
    %814 = vmatpush1.bf16.msra.mxu0 %v691
    %815 = vmatprep.subr.bf16.mxu0 %v696
    %816 = vmatpush1.bf16.msra.mxu0 %v695
    %817 = vmatprep.subr.bf16.mxu0 %v700
    %818 = vmatpush1.bf16.msra.mxu0 %v699
    %819 = vmatprep.subr.bf16.mxu0 %v704
    %820 = vmatpush1.bf16.msra.mxu0 %v703
    %821 = vmatprep.subr.bf16.mxu0 %v708
    %822 = vmatpush1.bf16.msra.mxu0 %v707
    %823 = vmatprep.subr.bf16.mxu0 %v712
    %824 = vmatpush1.bf16.msra.mxu0 %v711
    %825 = vmatprep.subr.bf16.mxu0 %v716
    %826 = vmatpush1.bf16.msra.mxu0 %v715
    %827 = vmatprep.subr.bf16.mxu0 %v720
    %828 = vmatpush1.bf16.msra.mxu0 %v719
    %829 = vmatprep.subr.bf16.mxu0 %v724
    %830 = vmatpush1.bf16.msra.mxu0 %v723
    %831 = vmatprep.subr.bf16.mxu0 %v728
    %832 = vmatpush1.bf16.msra.mxu0 %v727
    %833 = vmatprep.subr.bf16.mxu0 %v732
    %834 = vmatpush1.bf16.msra.mxu0 %v731
    %835 = vmatprep.subr.bf16.mxu0 %v736
    %836 = vmatpush1.bf16.msra.mxu0 %v735
    %837 = vmatprep.subr.bf16.mxu0 %v740
    %838 = vmatpush1.bf16.msra.mxu0 %v739
    %839 = vmatprep.mubr.bf16.mxu0 %v358
    %840 = vmatmul.mubr.bf16.gmra.mrb[0].mxu0 %v357
    %v841 = vpop.f32.mrb[0].mxu0
    %v842 = vadd.f32 0.0, %v841
    %v843 = vpop.f32.mrb[0].mxu0
    %v844 = vadd.f32 0.0, %v843
    %v845 = vpop.f32.mrb[0].mxu0
    %v846 = vpop.f32.mrb[0].mxu0
    %847 = vdwg.mxu0
    %848 = vmatprep.subr.bf16.mxu0 %v682
    %849 = vmatpush1.bf16.msra.mxu0 %v681
    %850 = vmatprep.subr.bf16.mxu0 %v686
    %851 = vmatpush1.bf16.msra.mxu0 %v685
    %852 = vmatprep.subr.bf16.mxu0 %v690
    %853 = vmatpush1.bf16.msra.mxu0 %v689
    %854 = vmatprep.subr.bf16.mxu0 %v694
    %855 = vmatpush1.bf16.msra.mxu0 %v693
    %856 = vmatprep.subr.bf16.mxu0 %v698
    %857 = vmatpush1.bf16.msra.mxu0 %v697
    %858 = vmatprep.subr.bf16.mxu0 %v702
    %859 = vmatpush1.bf16.msra.mxu0 %v701
    %860 = vmatprep.subr.bf16.mxu0 %v706
    %861 = vmatpush1.bf16.msra.mxu0 %v705
    %862 = vmatprep.subr.bf16.mxu0 %v710
    %863 = vmatpush1.bf16.msra.mxu0 %v709
    %864 = vmatprep.subr.bf16.mxu0 %v714
    %865 = vmatpush1.bf16.msra.mxu0 %v713
    %866 = vmatprep.subr.bf16.mxu0 %v718
    %867 = vmatpush1.bf16.msra.mxu0 %v717
    %868 = vmatprep.subr.bf16.mxu0 %v722
    %869 = vmatpush1.bf16.msra.mxu0 %v721
    %870 = vmatprep.subr.bf16.mxu0 %v726
    %871 = vmatpush1.bf16.msra.mxu0 %v725
    %872 = vmatprep.subr.bf16.mxu0 %v730
    %873 = vmatpush1.bf16.msra.mxu0 %v729
    %874 = vmatprep.subr.bf16.mxu0 %v734
    %875 = vmatpush1.bf16.msra.mxu0 %v733
    %876 = vmatprep.subr.bf16.mxu0 %v738
    %877 = vmatpush1.bf16.msra.mxu0 %v737
    %878 = vmatprep.subr.bf16.mxu0 %v742
    %879 = vmatpush1.bf16.msra.mxu0 %v741
    %880 = vmatprep.mubr.bf16.mxu0 %v358
    %881 = vmatmul.mubr.bf16.gmra.mrb[0].mxu0 %v357
    %v882 = vpop.f32.mrb[0].mxu0
    %v883 = vadd.f32 0.0, %v882
    %v884 = vpop.f32.mrb[0].mxu0
    %v885 = vadd.f32 0.0, %v884
    %v886 = vpop.f32.mrb[0].mxu0
    %v887 = vpop.f32.mrb[0].mxu0
    %888 = vdwg.mxu0
    %v889 = vld [vmem:[#allocation2] ss:$8 sm:$0xf]
    %v894 = vcombine.low %v842, %v844
    %v895 = vcombine.low %v883, %v885
    %v897 = vunpack.c.l.s4 1966171168
    %v898 = vunpack.c.0.s8 %v897
    %v899 = vlaneseq
    %v900 = vshrl.u32 %v899, 7
    %v901 = vsub.s32 %v898, %v900
    %v902 = vrot.slane %v894, %v901
    %v904 = vunpack.c.l.s4 1966171168
    %v905 = vunpack.c.0.s8 %v904
    %v906 = vlaneseq
    %v907 = vshrl.u32 %v906, 7
    %v908 = vsub.s32 %v905, %v907
    %v909 = vrot.slane %v895, %v908
    %v910 = vcombine.low %v902, %v909
    %v912 = vunpack.c.l.s4 1966171168
    %v913 = vunpack.c.0.s8 %v912
    %v914 = vlaneseq
    %v915 = vshrl.u32 %v914, 7
    %v916 = vsub.s32 %v913, %v915
    %v917 = vrot.slane %v910, %v916
    %v919 = vadd.f32 %v889, %v917
    %v920 = vxor.u32 %v919, 2147483648
    %v921 = vmul.f32 %v920, 1.442695
    %v922 = vpow.pop %v921
    %v923 = vadd.f32 %v922, 1.0
    %v924 = vrcp.pop %v923
    %v925 = vmul.f32 1.0, %v924
    %v927 = vrot.slane %v919, 3
    %v929 = vtanh.pop %v927
    %v931 = vrot.slane %v925, 1
    %v933 = vmul.f32 %v931, %v354
    %v934 = vmul.f32 %v925, %v929
    %v935 = vadd.f32 %v933, %v934
    %v936 = vtanh.pop %v935
    %v937 = vrot.slane %v925, 2
    %v939 = vmul.f32 %v937, %v936
    %v940 = vpack.c.bf16 %v939, %v939
    %v1005 = vunpack.c.l.b16 %v361
    %v1006 = vunpack.c.h.b16 %v361
    %v1007 = vunpack.c.l.b16 %v362
    %v1008 = vunpack.c.h.b16 %v362
    %v1009 = vunpack.c.l.b16 %v365
    %v1010 = vunpack.c.h.b16 %v365
    %v1011 = vunpack.c.l.b16 %v366
    %v1012 = vunpack.c.h.b16 %v366
    %v1013 = vunpack.c.l.b16 %v369
    %v1014 = vunpack.c.h.b16 %v369
    %v1015 = vunpack.c.l.b16 %v370
    %v1016 = vunpack.c.h.b16 %v370
    %v1017 = vunpack.c.l.b16 %v373
    %v1018 = vunpack.c.h.b16 %v373
    %v1019 = vunpack.c.l.b16 %v374
    %v1020 = vunpack.c.h.b16 %v374
    %v1021 = vunpack.c.l.b16 %v377
    %v1022 = vunpack.c.h.b16 %v377
    %v1023 = vunpack.c.l.b16 %v378
    %v1024 = vunpack.c.h.b16 %v378
    %v1025 = vunpack.c.l.b16 %v381
    %v1026 = vunpack.c.h.b16 %v381
    %v1027 = vunpack.c.l.b16 %v382
    %v1028 = vunpack.c.h.b16 %v382
    %v1029 = vunpack.c.l.b16 %v385
    %v1030 = vunpack.c.h.b16 %v385
    %v1031 = vunpack.c.l.b16 %v386
    %v1032 = vunpack.c.h.b16 %v386
    %v1033 = vunpack.c.l.b16 %v389
    %v1034 = vunpack.c.h.b16 %v389
    %v1035 = vunpack.c.l.b16 %v390
    %v1036 = vunpack.c.h.b16 %v390
    %v1037 = vunpack.c.l.b16 %v393
    %v1038 = vunpack.c.h.b16 %v393
    %v1039 = vunpack.c.l.b16 %v394
    %v1040 = vunpack.c.h.b16 %v394
    %v1041 = vunpack.c.l.b16 %v397
    %v1042 = vunpack.c.h.b16 %v397
    %v1043 = vunpack.c.l.b16 %v398
    %v1044 = vunpack.c.h.b16 %v398
    %v1045 = vunpack.c.l.b16 %v401
    %v1046 = vunpack.c.h.b16 %v401
    %v1047 = vunpack.c.l.b16 %v402
    %v1048 = vunpack.c.h.b16 %v402
    %v1049 = vunpack.c.l.b16 %v405
    %v1050 = vunpack.c.h.b16 %v405
    %v1051 = vunpack.c.l.b16 %v406
    %v1052 = vunpack.c.h.b16 %v406
    %v1053 = vunpack.c.l.b16 %v409
    %v1054 = vunpack.c.h.b16 %v409
    %v1055 = vunpack.c.l.b16 %v410
    %v1056 = vunpack.c.h.b16 %v410
    %v1057 = vunpack.c.l.b16 %v413
    %v1058 = vunpack.c.h.b16 %v413
    %v1059 = vunpack.c.l.b16 %v414
    %v1060 = vunpack.c.h.b16 %v414
    %v1061 = vunpack.c.l.b16 %v417
    %v1062 = vunpack.c.h.b16 %v417
    %v1063 = vunpack.c.l.b16 %v418
    %v1064 = vunpack.c.h.b16 %v418
    %v1065 = vunpack.c.l.b16 %v421
    %v1066 = vunpack.c.h.b16 %v421
    %v1067 = vunpack.c.l.b16 %v422
    %v1068 = vunpack.c.h.b16 %v422
    %v1069 = vunpack.c.l.b16 %v425
    %v1070 = vunpack.c.h.b16 %v425
    %v1071 = vunpack.c.l.b16 %v426
    %v1072 = vunpack.c.h.b16 %v426
    %v1073 = vunpack.c.l.b16 %v429
    %v1074 = vunpack.c.h.b16 %v429
    %v1075 = vunpack.c.l.b16 %v430
    %v1076 = vunpack.c.h.b16 %v430
    %v1077 = vunpack.c.l.b16 %v433
    %v1078 = vunpack.c.h.b16 %v433
    %v1079 = vunpack.c.l.b16 %v434
    %v1080 = vunpack.c.h.b16 %v434
    %v1081 = vunpack.c.l.b16 %v437
    %v1082 = vunpack.c.h.b16 %v437
    %v1083 = vunpack.c.l.b16 %v438
    %v1084 = vunpack.c.h.b16 %v438
    %v1085 = vunpack.c.l.b16 %v441
    %v1086 = vunpack.c.h.b16 %v441
    %v1087 = vunpack.c.l.b16 %v442
    %v1088 = vunpack.c.h.b16 %v442
    %v1089 = vunpack.c.l.b16 %v445
    %v1090 = vunpack.c.h.b16 %v445
    %v1091 = vunpack.c.l.b16 %v446
    %v1092 = vunpack.c.h.b16 %v446
    %v1093 = vunpack.c.l.b16 %v449
    %v1094 = vunpack.c.h.b16 %v449
    %v1095 = vunpack.c.l.b16 %v450
    %v1096 = vunpack.c.h.b16 %v450
    %v1097 = vunpack.c.l.b16 %v453
    %v1098 = vunpack.c.h.b16 %v453
    %v1099 = vunpack.c.l.b16 %v454
    %v1100 = vunpack.c.h.b16 %v454
    %v1101 = vunpack.c.l.b16 %v457
    %v1102 = vunpack.c.h.b16 %v457
    %v1103 = vunpack.c.l.b16 %v458
    %v1104 = vunpack.c.h.b16 %v458
    %v1105 = vunpack.c.l.b16 %v461
    %v1106 = vunpack.c.h.b16 %v461
    %v1107 = vunpack.c.l.b16 %v462
    %v1108 = vunpack.c.h.b16 %v462
    %v1109 = vunpack.c.l.b16 %v465
    %v1110 = vunpack.c.h.b16 %v465
    %v1111 = vunpack.c.l.b16 %v466
    %v1112 = vunpack.c.h.b16 %v466
    %v1113 = vunpack.c.l.b16 %v469
    %v1114 = vunpack.c.h.b16 %v469
    %v1115 = vunpack.c.l.b16 %v470
    %v1116 = vunpack.c.h.b16 %v470
    %v1117 = vunpack.c.l.b16 %v473
    %v1118 = vunpack.c.h.b16 %v473
    %v1119 = vunpack.c.l.b16 %v474
    %v1120 = vunpack.c.h.b16 %v474
    %v1121 = vunpack.c.l.b16 %v477
    %v1122 = vunpack.c.h.b16 %v477
    %v1123 = vunpack.c.l.b16 %v478
    %v1124 = vunpack.c.h.b16 %v478
    %v1125 = vunpack.c.l.b16 %v481
    %v1126 = vunpack.c.h.b16 %v481
    %v1127 = vunpack.c.l.b16 %v482
    %v1128 = vunpack.c.h.b16 %v482
    %v1129 = vunpack.c.l.b16 %v485
    %v1130 = vunpack.c.h.b16 %v485
    %v1131 = vunpack.c.l.b16 %v486
    %v1132 = vunpack.c.h.b16 %v486
    %v1133 = vpack.c.b16 %v1009, %v1005
    %v1134 = vpack.c.b16 %v1010, %v1006
    %v1135 = vpack.c.b16 %v1011, %v1007
    %v1136 = vpack.c.b16 %v1012, %v1008
    %v1137 = vpack.c.b16 %v1017, %v1013
    %v1138 = vpack.c.b16 %v1018, %v1014
    %v1139 = vpack.c.b16 %v1019, %v1015
    %v1140 = vpack.c.b16 %v1020, %v1016
    %v1141 = vpack.c.b16 %v1025, %v1021
    %v1142 = vpack.c.b16 %v1026, %v1022
    %v1143 = vpack.c.b16 %v1027, %v1023
    %v1144 = vpack.c.b16 %v1028, %v1024
    %v1145 = vpack.c.b16 %v1033, %v1029
    %v1146 = vpack.c.b16 %v1034, %v1030
    %v1147 = vpack.c.b16 %v1035, %v1031
    %v1148 = vpack.c.b16 %v1036, %v1032
    %v1149 = vpack.c.b16 %v1041, %v1037
    %v1150 = vpack.c.b16 %v1042, %v1038
    %v1151 = vpack.c.b16 %v1043, %v1039
    %v1152 = vpack.c.b16 %v1044, %v1040
    %v1153 = vpack.c.b16 %v1049, %v1045
    %v1154 = vpack.c.b16 %v1050, %v1046
    %v1155 = vpack.c.b16 %v1051, %v1047
    %v1156 = vpack.c.b16 %v1052, %v1048
    %v1157 = vpack.c.b16 %v1057, %v1053
    %v1158 = vpack.c.b16 %v1058, %v1054
    %v1159 = vpack.c.b16 %v1059, %v1055
    %v1160 = vpack.c.b16 %v1060, %v1056
    %v1161 = vpack.c.b16 %v1065, %v1061
    %v1162 = vpack.c.b16 %v1066, %v1062
    %v1163 = vpack.c.b16 %v1067, %v1063
    %v1164 = vpack.c.b16 %v1068, %v1064
    %v1165 = vpack.c.b16 %v1073, %v1069
    %v1166 = vpack.c.b16 %v1074, %v1070
    %v1167 = vpack.c.b16 %v1075, %v1071
    %v1168 = vpack.c.b16 %v1076, %v1072
    %v1169 = vpack.c.b16 %v1081, %v1077
    %v1170 = vpack.c.b16 %v1082, %v1078
    %v1171 = vpack.c.b16 %v1083, %v1079
    %v1172 = vpack.c.b16 %v1084, %v1080
    %v1173 = vpack.c.b16 %v1089, %v1085
    %v1174 = vpack.c.b16 %v1090, %v1086
    %v1175 = vpack.c.b16 %v1091, %v1087
    %v1176 = vpack.c.b16 %v1092, %v1088
    %v1177 = vpack.c.b16 %v1097, %v1093
    %v1178 = vpack.c.b16 %v1098, %v1094
    %v1179 = vpack.c.b16 %v1099, %v1095
    %v1180 = vpack.c.b16 %v1100, %v1096
    %v1181 = vpack.c.b16 %v1105, %v1101
    %v1182 = vpack.c.b16 %v1106, %v1102
    %v1183 = vpack.c.b16 %v1107, %v1103
    %v1184 = vpack.c.b16 %v1108, %v1104
    %v1185 = vpack.c.b16 %v1113, %v1109
    %v1186 = vpack.c.b16 %v1114, %v1110
    %v1187 = vpack.c.b16 %v1115, %v1111
    %v1188 = vpack.c.b16 %v1116, %v1112
    %v1189 = vpack.c.b16 %v1121, %v1117
    %v1190 = vpack.c.b16 %v1122, %v1118
    %v1191 = vpack.c.b16 %v1123, %v1119
    %v1192 = vpack.c.b16 %v1124, %v1120
    %v1193 = vpack.c.b16 %v1129, %v1125
    %v1194 = vpack.c.b16 %v1130, %v1126
    %v1195 = vpack.c.b16 %v1131, %v1127
    %v1196 = vpack.c.b16 %v1132, %v1128
    %1261 = vmatprep.subr.bf16.mxu0 %v680
    %1262 = vmatpush1.bf16.msra.mxu0 %v679
    %1263 = vmatprep.subr.bf16.mxu0 %v684
    %1264 = vmatpush1.bf16.msra.mxu0 %v683
    %1265 = vmatprep.subr.bf16.mxu0 %v688
    %1266 = vmatpush1.bf16.msra.mxu0 %v687
    %1267 = vmatprep.subr.bf16.mxu0 %v692
    %1268 = vmatpush1.bf16.msra.mxu0 %v691
    %1269 = vmatprep.subr.bf16.mxu0 %v696
    %1270 = vmatpush1.bf16.msra.mxu0 %v695
    %1271 = vmatprep.subr.bf16.mxu0 %v700
    %1272 = vmatpush1.bf16.msra.mxu0 %v699
    %1273 = vmatprep.subr.bf16.mxu0 %v704
    %1274 = vmatpush1.bf16.msra.mxu0 %v703
    %1275 = vmatprep.subr.bf16.mxu0 %v708
    %1276 = vmatpush1.bf16.msra.mxu0 %v707
    %1277 = vmatprep.subr.bf16.mxu0 %v712
    %1278 = vmatpush1.bf16.msra.mxu0 %v711
    %1279 = vmatprep.subr.bf16.mxu0 %v716
    %1280 = vmatpush1.bf16.msra.mxu0 %v715
    %1281 = vmatprep.subr.bf16.mxu0 %v720
    %1282 = vmatpush1.bf16.msra.mxu0 %v719
    %1283 = vmatprep.subr.bf16.mxu0 %v724
    %1284 = vmatpush1.bf16.msra.mxu0 %v723
    %1285 = vmatprep.subr.bf16.mxu0 %v728
    %1286 = vmatpush1.bf16.msra.mxu0 %v727
    %1287 = vmatprep.subr.bf16.mxu0 %v732
    %1288 = vmatpush1.bf16.msra.mxu0 %v731
    %1289 = vmatprep.subr.bf16.mxu0 %v736
    %1290 = vmatpush1.bf16.msra.mxu0 %v735
    %1291 = vmatprep.subr.bf16.mxu0 %v740
    %1292 = vmatpush1.bf16.msra.mxu0 %v739
    %1293 = vmatprep.mubr.bf16.mxu0 %v358
    %1294 = vmatmul.mubr.bf16.gmra.mrb[0].mxu0 %v940
    %v1295 = vpop.f32.mrb[0].mxu0
    %v1296 = vadd.f32 0.0, %v1295
    %v1297 = vpop.f32.mrb[0].mxu0
    %v1298 = vadd.f32 0.0, %v1297
    %v1299 = vpop.f32.mrb[0].mxu0
    %v1300 = vpop.f32.mrb[0].mxu0
    %1301 = vdwg.mxu0
    %1302 = vmatprep.subr.bf16.mxu0 %v682
    %1303 = vmatpush1.bf16.msra.mxu0 %v681
    %1304 = vmatprep.subr.bf16.mxu0 %v686
    %1305 = vmatpush1.bf16.msra.mxu0 %v685
    %1306 = vmatprep.subr.bf16.mxu0 %v690
    %1307 = vmatpush1.bf16.msra.mxu0 %v689
    %1308 = vmatprep.subr.bf16.mxu0 %v694
    %1309 = vmatpush1.bf16.msra.mxu0 %v693
    %1310 = vmatprep.subr.bf16.mxu0 %v698
    %1311 = vmatpush1.bf16.msra.mxu0 %v697
    %1312 = vmatprep.subr.bf16.mxu0 %v702
    %1313 = vmatpush1.bf16.msra.mxu0 %v701
    %1314 = vmatprep.subr.bf16.mxu0 %v706
    %1315 = vmatpush1.bf16.msra.mxu0 %v705
    %1316 = vmatprep.subr.bf16.mxu0 %v710
    %1317 = vmatpush1.bf16.msra.mxu0 %v709
    %1318 = vmatprep.subr.bf16.mxu0 %v714
    %1319 = vmatpush1.bf16.msra.mxu0 %v713
    %1320 = vmatprep.subr.bf16.mxu0 %v718
    %1321 = vmatpush1.bf16.msra.mxu0 %v717
    %1322 = vmatprep.subr.bf16.mxu0 %v722
    %1323 = vmatpush1.bf16.msra.mxu0 %v721
    %1324 = vmatprep.subr.bf16.mxu0 %v726
    %1325 = vmatpush1.bf16.msra.mxu0 %v725
    %1326 = vmatprep.subr.bf16.mxu0 %v730
    %1327 = vmatpush1.bf16.msra.mxu0 %v729
    %1328 = vmatprep.subr.bf16.mxu0 %v734
    %1329 = vmatpush1.bf16.msra.mxu0 %v733
    %1330 = vmatprep.subr.bf16.mxu0 %v738
    %1331 = vmatpush1.bf16.msra.mxu0 %v737
    %1332 = vmatprep.subr.bf16.mxu0 %v742
    %1333 = vmatpush1.bf16.msra.mxu0 %v741
    %1334 = vmatprep.mubr.bf16.mxu0 %v358
    %1335 = vmatmul.mubr.bf16.gmra.mrb[0].mxu0 %v940
    %v1336 = vpop.f32.mrb[0].mxu0
    %v1337 = vadd.f32 0.0, %v1336
    %v1338 = vpop.f32.mrb[0].mxu0
    %v1339 = vadd.f32 0.0, %v1338
    %v1340 = vpop.f32.mrb[0].mxu0
    %v1341 = vpop.f32.mrb[0].mxu0
    %1342 = vdwg.mxu0
    %1343 = vmatprep.subr.bf16.mxu0 %v1134
    %1344 = vmatpush1.bf16.msra.mxu0 %v1133
    %1345 = vmatprep.subr.bf16.mxu0 %v1138
    %1346 = vmatpush1.bf16.msra.mxu0 %v1137
    %1347 = vmatprep.subr.bf16.mxu0 %v1142
    %1348 = vmatpush1.bf16.msra.mxu0 %v1141
    %1349 = vmatprep.subr.bf16.mxu0 %v1146
    %1350 = vmatpush1.bf16.msra.mxu0 %v1145
    %1351 = vmatprep.subr.bf16.mxu0 %v1150
    %1352 = vmatpush1.bf16.msra.mxu0 %v1149
    %1353 = vmatprep.subr.bf16.mxu0 %v1154
    %1354 = vmatpush1.bf16.msra.mxu0 %v1153
    %1355 = vmatprep.subr.bf16.mxu0 %v1158
    %1356 = vmatpush1.bf16.msra.mxu0 %v1157
    %1357 = vmatprep.subr.bf16.mxu0 %v1162
    %1358 = vmatpush1.bf16.msra.mxu0 %v1161
    %1359 = vmatprep.subr.bf16.mxu0 %v1166
    %1360 = vmatpush1.bf16.msra.mxu0 %v1165
    %1361 = vmatprep.subr.bf16.mxu0 %v1170
    %1362 = vmatpush1.bf16.msra.mxu0 %v1169
    %1363 = vmatprep.subr.bf16.mxu0 %v1174
    %1364 = vmatpush1.bf16.msra.mxu0 %v1173
    %1365 = vmatprep.subr.bf16.mxu0 %v1178
    %1366 = vmatpush1.bf16.msra.mxu0 %v1177
    %1367 = vmatprep.subr.bf16.mxu0 %v1182
    %1368 = vmatpush1.bf16.msra.mxu0 %v1181
    %1369 = vmatprep.subr.bf16.mxu0 %v1186
    %1370 = vmatpush1.bf16.msra.mxu0 %v1185
    %1371 = vmatprep.subr.bf16.mxu0 %v1190
    %1372 = vmatpush1.bf16.msra.mxu0 %v1189
    %1373 = vmatprep.subr.bf16.mxu0 %v1194
    %1374 = vmatpush1.bf16.msra.mxu0 %v1193
    %1375 = vmatprep.mubr.bf16.mxu0 %v358
    %1376 = vmatmul.mubr.bf16.gmra.mrb[0].mxu0 %v940
    %v1377 = vpop.f32.mrb[0].mxu0
    %v1378 = vadd.f32 0.0, %v1377
    %v1379 = vpop.f32.mrb[0].mxu0
    %v1380 = vadd.f32 0.0, %v1379
    %v1381 = vpop.f32.mrb[0].mxu0
    %v1382 = vpop.f32.mrb[0].mxu0
    %1383 = vdwg.mxu0
    %1384 = vmatprep.subr.bf16.mxu0 %v1136
    %1385 = vmatpush1.bf16.msra.mxu0 %v1135
    %1386 = vmatprep.subr.bf16.mxu0 %v1140
    %1387 = vmatpush1.bf16.msra.mxu0 %v1139
    %1388 = vmatprep.subr.bf16.mxu0 %v1144
    %1389 = vmatpush1.bf16.msra.mxu0 %v1143
    %1390 = vmatprep.subr.bf16.mxu0 %v1148
    %1391 = vmatpush1.bf16.msra.mxu0 %v1147
    %1392 = vmatprep.subr.bf16.mxu0 %v1152
    %1393 = vmatpush1.bf16.msra.mxu0 %v1151
    %1394 = vmatprep.subr.bf16.mxu0 %v1156
    %1395 = vmatpush1.bf16.msra.mxu0 %v1155
    %1396 = vmatprep.subr.bf16.mxu0 %v1160
    %1397 = vmatpush1.bf16.msra.mxu0 %v1159
    %1398 = vmatprep.subr.bf16.mxu0 %v1164
    %1399 = vmatpush1.bf16.msra.mxu0 %v1163
    %1400 = vmatprep.subr.bf16.mxu0 %v1168
    %1401 = vmatpush1.bf16.msra.mxu0 %v1167
    %1402 = vmatprep.subr.bf16.mxu0 %v1172
    %1403 = vmatpush1.bf16.msra.mxu0 %v1171
    %1404 = vmatprep.subr.bf16.mxu0 %v1176
    %1405 = vmatpush1.bf16.msra.mxu0 %v1175
    %1406 = vmatprep.subr.bf16.mxu0 %v1180
    %1407 = vmatpush1.bf16.msra.mxu0 %v1179
    %1408 = vmatprep.subr.bf16.mxu0 %v1184
    %1409 = vmatpush1.bf16.msra.mxu0 %v1183
    %1410 = vmatprep.subr.bf16.mxu0 %v1188
    %1411 = vmatpush1.bf16.msra.mxu0 %v1187
    %1412 = vmatprep.subr.bf16.mxu0 %v1192
    %1413 = vmatpush1.bf16.msra.mxu0 %v1191
    %1414 = vmatprep.subr.bf16.mxu0 %v1196
    %1415 = vmatpush1.bf16.msra.mxu0 %v1195
    %1416 = vmatprep.mubr.bf16.mxu0 %v358
    %1417 = vmatmul.mubr.bf16.gmra.mrb[0].mxu0 %v940
    %v1418 = vpop.f32.mrb[0].mxu0
    %v1419 = vadd.f32 0.0, %v1418
    %v1420 = vpop.f32.mrb[0].mxu0
    %v1421 = vadd.f32 0.0, %v1420
    %v1422 = vpop.f32.mrb[0].mxu0
    %v1423 = vpop.f32.mrb[0].mxu0
    %1424 = vdwg.mxu0
    %s1425 = scalar_lea.vmem [#allocation2], 1
    %v1426 = vld [vmem:[%s1425] ss:$8 sm:$0xf]
    %v1431 = vcombine.low %v1296, %v1298
    %v1432 = vcombine.low %v1337, %v1339
    %v1434 = vunpack.c.l.s4 1966171168
    %v1435 = vunpack.c.0.s8 %v1434
    %v1436 = vlaneseq
    %v1437 = vshrl.u32 %v1436, 7
    %v1438 = vsub.s32 %v1435, %v1437
    %v1439 = vrot.slane %v1431, %v1438
    %v1441 = vunpack.c.l.s4 1966171168
    %v1442 = vunpack.c.0.s8 %v1441
    %v1443 = vlaneseq
    %v1444 = vshrl.u32 %v1443, 7
    %v1445 = vsub.s32 %v1442, %v1444
    %v1446 = vrot.slane %v1432, %v1445
    %v1447 = vcombine.low %v1439, %v1446
    %v1449 = vunpack.c.l.s4 1966171168
    %v1450 = vunpack.c.0.s8 %v1449
    %v1451 = vlaneseq
    %v1452 = vshrl.u32 %v1451, 7
    %v1453 = vsub.s32 %v1450, %v1452
    %v1454 = vrot.slane %v1447, %v1453
    %v1456 = vadd.f32 %v1426, %v1454
    %v1457 = vxor.u32 %v1456, 2147483648
    %v1458 = vmul.f32 %v1457, 1.442695
    %v1459 = vpow.pop %v1458
    %v1460 = vadd.f32 %v1459, 1.0
    %v1461 = vrcp.pop %v1460
    %v1462 = vmul.f32 1.0, %v1461
    %v1464 = vrot.slane %v1456, 3
    %v1466 = vtanh.pop %v1464
    %v1468 = vrot.slane %v1462, 1
    %v1470 = vmul.f32 %v1468, %v935
    %v1471 = vmul.f32 %v1462, %v1466
    %v1472 = vadd.f32 %v1470, %v1471
    %v1473 = vtanh.pop %v1472
    %v1474 = vrot.slane %v1462, 2
    %v1476 = vmul.f32 %v1474, %v1473
    %v1481 = vcombine.low %v1378, %v1380
    %v1482 = vcombine.low %v1419, %v1421
    %v1484 = vunpack.c.l.s4 1966171168
    %v1485 = vunpack.c.0.s8 %v1484
    %v1486 = vlaneseq
    %v1487 = vshrl.u32 %v1486, 7
    %v1488 = vsub.s32 %v1485, %v1487
    %v1489 = vrot.slane %v1481, %v1488
    %v1491 = vunpack.c.l.s4 1966171168
    %v1492 = vunpack.c.0.s8 %v1491
    %v1493 = vlaneseq
    %v1494 = vshrl.u32 %v1493, 7
    %v1495 = vsub.s32 %v1492, %v1494
    %v1496 = vrot.slane %v1482, %v1495
    %v1497 = vcombine.low %v1489, %v1496
    %v1499 = vunpack.c.l.s4 1966171168
    %v1500 = vunpack.c.0.s8 %v1499
    %v1501 = vlaneseq
    %v1502 = vshrl.u32 %v1501, 7
    %v1503 = vsub.s32 %v1500, %v1502
    %v1504 = vrot.slane %v1497, %v1503
    %v1506 = vadd.f32 %v51, %v1504
    %v1507 = vxor.u32 %v1506, 2147483648
    %v1508 = vmul.f32 %v1507, 1.442695
    %v1509 = vpow.pop %v1508
    %v1510 = vadd.f32 %v1509, 1.0
    %v1511 = vrcp.pop %v1510
    %v1512 = vmul.f32 1.0, %v1511
    %v1514 = vrot.slane %v1506, 3
    %v1516 = vtanh.pop %v1514
    %v1518 = vrot.slane %v1512, 1
    %v1520 = vmul.f32 %v1518, %v356
    %v1521 = vmul.f32 %v1512, %v1516
    %v1522 = vadd.f32 %v1520, %v1521
    %v1523 = vtanh.pop %v1522
    %v1524 = vrot.slane %v1512, 2
    %v1526 = vmul.f32 %v1524, %v1523
    %v1527 = vpack.c.bf16 %v1476, %v1476
    %v1528 = vpack.c.bf16 %v1526, %v1526
    %1529 = vmatprep.subr.bf16.mxu0 %v680
    %1530 = vmatpush1.bf16.msra.mxu0 %v679
    %1531 = vmatprep.subr.bf16.mxu0 %v684
    %1532 = vmatpush1.bf16.msra.mxu0 %v683
    %1533 = vmatprep.subr.bf16.mxu0 %v688
    %1534 = vmatpush1.bf16.msra.mxu0 %v687
    %1535 = vmatprep.subr.bf16.mxu0 %v692
    %1536 = vmatpush1.bf16.msra.mxu0 %v691
    %1537 = vmatprep.subr.bf16.mxu0 %v696
    %1538 = vmatpush1.bf16.msra.mxu0 %v695
    %1539 = vmatprep.subr.bf16.mxu0 %v700
    %1540 = vmatpush1.bf16.msra.mxu0 %v699
    %1541 = vmatprep.subr.bf16.mxu0 %v704
    %1542 = vmatpush1.bf16.msra.mxu0 %v703
    %1543 = vmatprep.subr.bf16.mxu0 %v708
    %1544 = vmatpush1.bf16.msra.mxu0 %v707
    %1545 = vmatprep.subr.bf16.mxu0 %v712
    %1546 = vmatpush1.bf16.msra.mxu0 %v711
    %1547 = vmatprep.subr.bf16.mxu0 %v716
    %1548 = vmatpush1.bf16.msra.mxu0 %v715
    %1549 = vmatprep.subr.bf16.mxu0 %v720
    %1550 = vmatpush1.bf16.msra.mxu0 %v719
    %1551 = vmatprep.subr.bf16.mxu0 %v724
    %1552 = vmatpush1.bf16.msra.mxu0 %v723
    %1553 = vmatprep.subr.bf16.mxu0 %v728
    %1554 = vmatpush1.bf16.msra.mxu0 %v727
    %1555 = vmatprep.subr.bf16.mxu0 %v732
    %1556 = vmatpush1.bf16.msra.mxu0 %v731
    %1557 = vmatprep.subr.bf16.mxu0 %v736
    %1558 = vmatpush1.bf16.msra.mxu0 %v735
    %1559 = vmatprep.subr.bf16.mxu0 %v740
    %1560 = vmatpush1.bf16.msra.mxu0 %v739
    %1561 = vmatprep.mubr.bf16.mxu0 %v1528
    %1562 = vmatmul.mubr.bf16.gmra.mrb[0].mxu0 %v1527
    %v1563 = vpop.f32.mrb[0].mxu0
    %v1564 = vadd.f32 0.0, %v1563
    %v1565 = vpop.f32.mrb[0].mxu0
    %v1566 = vadd.f32 0.0, %v1565
    %v1567 = vpop.f32.mrb[0].mxu0
    %v1568 = vpop.f32.mrb[0].mxu0
    %1569 = vdwg.mxu0
    %1570 = vmatprep.subr.bf16.mxu0 %v682
    %1571 = vmatpush1.bf16.msra.mxu0 %v681
    %1572 = vmatprep.subr.bf16.mxu0 %v686
    %1573 = vmatpush1.bf16.msra.mxu0 %v685
    %1574 = vmatprep.subr.bf16.mxu0 %v690
    %1575 = vmatpush1.bf16.msra.mxu0 %v689
    %1576 = vmatprep.subr.bf16.mxu0 %v694
    %1577 = vmatpush1.bf16.msra.mxu0 %v693
    %1578 = vmatprep.subr.bf16.mxu0 %v698
    %1579 = vmatpush1.bf16.msra.mxu0 %v697
    %1580 = vmatprep.subr.bf16.mxu0 %v702
    %1581 = vmatpush1.bf16.msra.mxu0 %v701
    %1582 = vmatprep.subr.bf16.mxu0 %v706
    %1583 = vmatpush1.bf16.msra.mxu0 %v705
    %1584 = vmatprep.subr.bf16.mxu0 %v710
    %1585 = vmatpush1.bf16.msra.mxu0 %v709
    %1586 = vmatprep.subr.bf16.mxu0 %v714
    %1587 = vmatpush1.bf16.msra.mxu0 %v713
    %1588 = vmatprep.subr.bf16.mxu0 %v718
    %1589 = vmatpush1.bf16.msra.mxu0 %v717
    %1590 = vmatprep.subr.bf16.mxu0 %v722
    %1591 = vmatpush1.bf16.msra.mxu0 %v721
    %1592 = vmatprep.subr.bf16.mxu0 %v726
    %1593 = vmatpush1.bf16.msra.mxu0 %v725
    %1594 = vmatprep.subr.bf16.mxu0 %v730
    %1595 = vmatpush1.bf16.msra.mxu0 %v729
    %1596 = vmatprep.subr.bf16.mxu0 %v734
    %1597 = vmatpush1.bf16.msra.mxu0 %v733
    %1598 = vmatprep.subr.bf16.mxu0 %v738
    %1599 = vmatpush1.bf16.msra.mxu0 %v737
    %1600 = vmatprep.subr.bf16.mxu0 %v742
    %1601 = vmatpush1.bf16.msra.mxu0 %v741
    %1602 = vmatprep.mubr.bf16.mxu0 %v1528
    %1603 = vmatmul.mubr.bf16.gmra.mrb[0].mxu0 %v1527
    %v1604 = vpop.f32.mrb[0].mxu0
    %v1605 = vadd.f32 0.0, %v1604
    %v1606 = vpop.f32.mrb[0].mxu0
    %v1607 = vadd.f32 0.0, %v1606
    %v1608 = vpop.f32.mrb[0].mxu0
    %v1609 = vpop.f32.mrb[0].mxu0
    %1610 = vdwg.mxu0
    %1611 = vmatprep.subr.bf16.mxu0 %v1134
    %1612 = vmatpush1.bf16.msra.mxu0 %v1133
    %1613 = vmatprep.subr.bf16.mxu0 %v1138
    %1614 = vmatpush1.bf16.msra.mxu0 %v1137
    %1615 = vmatprep.subr.bf16.mxu0 %v1142
    %1616 = vmatpush1.bf16.msra.mxu0 %v1141
    %1617 = vmatprep.subr.bf16.mxu0 %v1146
    %1618 = vmatpush1.bf16.msra.mxu0 %v1145
    %1619 = vmatprep.subr.bf16.mxu0 %v1150
    %1620 = vmatpush1.bf16.msra.mxu0 %v1149
    %1621 = vmatprep.subr.bf16.mxu0 %v1154
    %1622 = vmatpush1.bf16.msra.mxu0 %v1153
    %1623 = vmatprep.subr.bf16.mxu0 %v1158
    %1624 = vmatpush1.bf16.msra.mxu0 %v1157
    %1625 = vmatprep.subr.bf16.mxu0 %v1162
    %1626 = vmatpush1.bf16.msra.mxu0 %v1161
    %1627 = vmatprep.subr.bf16.mxu0 %v1166
    %1628 = vmatpush1.bf16.msra.mxu0 %v1165
    %1629 = vmatprep.subr.bf16.mxu0 %v1170
    %1630 = vmatpush1.bf16.msra.mxu0 %v1169
    %1631 = vmatprep.subr.bf16.mxu0 %v1174
    %1632 = vmatpush1.bf16.msra.mxu0 %v1173
    %1633 = vmatprep.subr.bf16.mxu0 %v1178
    %1634 = vmatpush1.bf16.msra.mxu0 %v1177
    %1635 = vmatprep.subr.bf16.mxu0 %v1182
    %1636 = vmatpush1.bf16.msra.mxu0 %v1181
    %1637 = vmatprep.subr.bf16.mxu0 %v1186
    %1638 = vmatpush1.bf16.msra.mxu0 %v1185
    %1639 = vmatprep.subr.bf16.mxu0 %v1190
    %1640 = vmatpush1.bf16.msra.mxu0 %v1189
    %1641 = vmatprep.subr.bf16.mxu0 %v1194
    %1642 = vmatpush1.bf16.msra.mxu0 %v1193
    %1643 = vmatprep.mubr.bf16.mxu0 %v1528
    %1644 = vmatmul.mubr.bf16.gmra.mrb[0].mxu0 %v1527
    %v1645 = vpop.f32.mrb[0].mxu0
    %v1646 = vadd.f32 0.0, %v1645
    %v1647 = vpop.f32.mrb[0].mxu0
    %v1648 = vadd.f32 0.0, %v1647
    %v1649 = vpop.f32.mrb[0].mxu0
    %v1650 = vpop.f32.mrb[0].mxu0
    %1651 = vdwg.mxu0
    %1652 = vmatprep.subr.bf16.mxu0 %v1136
    %1653 = vmatpush1.bf16.msra.mxu0 %v1135
    %1654 = vmatprep.subr.bf16.mxu0 %v1140
    %1655 = vmatpush1.bf16.msra.mxu0 %v1139
    %1656 = vmatprep.subr.bf16.mxu0 %v1144
    %1657 = vmatpush1.bf16.msra.mxu0 %v1143
    %1658 = vmatprep.subr.bf16.mxu0 %v1148
    %1659 = vmatpush1.bf16.msra.mxu0 %v1147
    %1660 = vmatprep.subr.bf16.mxu0 %v1152
    %1661 = vmatpush1.bf16.msra.mxu0 %v1151
    %1662 = vmatprep.subr.bf16.mxu0 %v1156
    %1663 = vmatpush1.bf16.msra.mxu0 %v1155
    %1664 = vmatprep.subr.bf16.mxu0 %v1160
    %1665 = vmatpush1.bf16.msra.mxu0 %v1159
    %1666 = vmatprep.subr.bf16.mxu0 %v1164
    %1667 = vmatpush1.bf16.msra.mxu0 %v1163
    %1668 = vmatprep.subr.bf16.mxu0 %v1168
    %1669 = vmatpush1.bf16.msra.mxu0 %v1167
    %1670 = vmatprep.subr.bf16.mxu0 %v1172
    %1671 = vmatpush1.bf16.msra.mxu0 %v1171
    %1672 = vmatprep.subr.bf16.mxu0 %v1176
    %1673 = vmatpush1.bf16.msra.mxu0 %v1175
    %1674 = vmatprep.subr.bf16.mxu0 %v1180
    %1675 = vmatpush1.bf16.msra.mxu0 %v1179
    %1676 = vmatprep.subr.bf16.mxu0 %v1184
    %1677 = vmatpush1.bf16.msra.mxu0 %v1183
    %1678 = vmatprep.subr.bf16.mxu0 %v1188
    %1679 = vmatpush1.bf16.msra.mxu0 %v1187
    %1680 = vmatprep.subr.bf16.mxu0 %v1192
    %1681 = vmatpush1.bf16.msra.mxu0 %v1191
    %1682 = vmatprep.subr.bf16.mxu0 %v1196
    %1683 = vmatpush1.bf16.msra.mxu0 %v1195
    %1684 = vmatprep.mubr.bf16.mxu0 %v1528
    %1685 = vmatmul.mubr.bf16.gmra.mrb[0].mxu0 %v1527
    %v1686 = vpop.f32.mrb[0].mxu0
    %v1687 = vadd.f32 0.0, %v1686
    %v1688 = vpop.f32.mrb[0].mxu0
    %v1689 = vadd.f32 0.0, %v1688
    %v1690 = vpop.f32.mrb[0].mxu0
    %v1691 = vpop.f32.mrb[0].mxu0
    %1692 = vdwg.mxu0
    %s1693 = scalar_lea.vmem [#allocation2], 2
    %v1694 = vld [vmem:[%s1693] ss:$8 sm:$0xf]
    %v1699 = vcombine.low %v1564, %v1566
    %v1700 = vcombine.low %v1605, %v1607
    %v1702 = vunpack.c.l.s4 1966171168
    %v1703 = vunpack.c.0.s8 %v1702
    %v1704 = vlaneseq
    %v1705 = vshrl.u32 %v1704, 7
    %v1706 = vsub.s32 %v1703, %v1705
    %v1707 = vrot.slane %v1699, %v1706
    %v1709 = vunpack.c.l.s4 1966171168
    %v1710 = vunpack.c.0.s8 %v1709
    %v1711 = vlaneseq
    %v1712 = vshrl.u32 %v1711, 7
    %v1713 = vsub.s32 %v1710, %v1712
    %v1714 = vrot.slane %v1700, %v1713
    %v1715 = vcombine.low %v1707, %v1714
    %v1717 = vunpack.c.l.s4 1966171168
    %v1718 = vunpack.c.0.s8 %v1717
    %v1719 = vlaneseq
    %v1720 = vshrl.u32 %v1719, 7
    %v1721 = vsub.s32 %v1718, %v1720
    %v1722 = vrot.slane %v1715, %v1721
    %v1724 = vadd.f32 %v1694, %v1722
    %v1725 = vxor.u32 %v1724, 2147483648
    %v1726 = vmul.f32 %v1725, 1.442695
    %v1727 = vpow.pop %v1726
    %v1728 = vadd.f32 %v1727, 1.0
    %v1729 = vrcp.pop %v1728
    %v1730 = vmul.f32 1.0, %v1729
    %v1732 = vrot.slane %v1724, 3
    %v1734 = vtanh.pop %v1732
    %v1736 = vrot.slane %v1730, 1
    %v1738 = vmul.f32 %v1736, %v1472
    %v1739 = vmul.f32 %v1730, %v1734
    %v1740 = vadd.f32 %v1738, %v1739
    %v1741 = vtanh.pop %v1740
    %v1742 = vrot.slane %v1730, 2
    %v1744 = vmul.f32 %v1742, %v1741
    %v1749 = vcombine.low %v1646, %v1648
    %v1750 = vcombine.low %v1687, %v1689
    %v1752 = vunpack.c.l.s4 1966171168
    %v1753 = vunpack.c.0.s8 %v1752
    %v1754 = vlaneseq
    %v1755 = vshrl.u32 %v1754, 7
    %v1756 = vsub.s32 %v1753, %v1755
    %v1757 = vrot.slane %v1749, %v1756
    %v1759 = vunpack.c.l.s4 1966171168
    %v1760 = vunpack.c.0.s8 %v1759
    %v1761 = vlaneseq
    %v1762 = vshrl.u32 %v1761, 7
    %v1763 = vsub.s32 %v1760, %v1762
    %v1764 = vrot.slane %v1750, %v1763
    %v1765 = vcombine.low %v1757, %v1764
    %v1767 = vunpack.c.l.s4 1966171168
    %v1768 = vunpack.c.0.s8 %v1767
    %v1769 = vlaneseq
    %v1770 = vshrl.u32 %v1769, 7
    %v1771 = vsub.s32 %v1768, %v1770
    %v1772 = vrot.slane %v1765, %v1771
    %v1774 = vadd.f32 %v51, %v1772
    %v1775 = vxor.u32 %v1774, 2147483648
    %v1776 = vmul.f32 %v1775, 1.442695
    %v1777 = vpow.pop %v1776
    %v1778 = vadd.f32 %v1777, 1.0
    %v1779 = vrcp.pop %v1778
    %v1780 = vmul.f32 1.0, %v1779
    %v1782 = vrot.slane %v1774, 3
    %v1784 = vtanh.pop %v1782
    %v1786 = vrot.slane %v1780, 1
    %v1788 = vmul.f32 %v1786, %v1522
    %v1789 = vmul.f32 %v1780, %v1784
    %v1790 = vadd.f32 %v1788, %v1789
    %v1791 = vtanh.pop %v1790
    %v1792 = vrot.slane %v1780, 2
    %v1794 = vmul.f32 %v1792, %v1791
    %v1795 = vpack.c.bf16 %v1744, %v1744
    %v1796 = vpack.c.bf16 %v1794, %v1794
    %1797 = vmatprep.subr.bf16.mxu0 %v680
    %1798 = vmatpush1.bf16.msra.mxu0 %v679
    %1799 = vmatprep.subr.bf16.mxu0 %v684
    %1800 = vmatpush1.bf16.msra.mxu0 %v683
    %1801 = vmatprep.subr.bf16.mxu0 %v688
    %1802 = vmatpush1.bf16.msra.mxu0 %v687
    %1803 = vmatprep.subr.bf16.mxu0 %v692
    %1804 = vmatpush1.bf16.msra.mxu0 %v691
    %1805 = vmatprep.subr.bf16.mxu0 %v696
    %1806 = vmatpush1.bf16.msra.mxu0 %v695
    %1807 = vmatprep.subr.bf16.mxu0 %v700
    %1808 = vmatpush1.bf16.msra.mxu0 %v699
    %1809 = vmatprep.subr.bf16.mxu0 %v704
    %1810 = vmatpush1.bf16.msra.mxu0 %v703
    %1811 = vmatprep.subr.bf16.mxu0 %v708
    %1812 = vmatpush1.bf16.msra.mxu0 %v707
    %1813 = vmatprep.subr.bf16.mxu0 %v712
    %1814 = vmatpush1.bf16.msra.mxu0 %v711
    %1815 = vmatprep.subr.bf16.mxu0 %v716
    %1816 = vmatpush1.bf16.msra.mxu0 %v715
    %1817 = vmatprep.subr.bf16.mxu0 %v720
    %1818 = vmatpush1.bf16.msra.mxu0 %v719
    %1819 = vmatprep.subr.bf16.mxu0 %v724
    %1820 = vmatpush1.bf16.msra.mxu0 %v723
    %1821 = vmatprep.subr.bf16.mxu0 %v728
    %1822 = vmatpush1.bf16.msra.mxu0 %v727
    %1823 = vmatprep.subr.bf16.mxu0 %v732
    %1824 = vmatpush1.bf16.msra.mxu0 %v731
    %1825 = vmatprep.subr.bf16.mxu0 %v736
    %1826 = vmatpush1.bf16.msra.mxu0 %v735
    %1827 = vmatprep.subr.bf16.mxu0 %v740
    %1828 = vmatpush1.bf16.msra.mxu0 %v739
    %1829 = vmatprep.mubr.bf16.mxu0 %v1796
    %1830 = vmatmul.mubr.bf16.gmra.mrb[0].mxu0 %v1795
    %v1831 = vpop.f32.mrb[0].mxu0
    %v1832 = vadd.f32 0.0, %v1831
    %v1833 = vpop.f32.mrb[0].mxu0
    %v1834 = vadd.f32 0.0, %v1833
    %v1835 = vpop.f32.mrb[0].mxu0
    %v1836 = vpop.f32.mrb[0].mxu0
    %1837 = vdwg.mxu0
    %1838 = vmatprep.subr.bf16.mxu0 %v682
    %1839 = vmatpush1.bf16.msra.mxu0 %v681
    %1840 = vmatprep.subr.bf16.mxu0 %v686
    %1841 = vmatpush1.bf16.msra.mxu0 %v685
    %1842 = vmatprep.subr.bf16.mxu0 %v690
    %1843 = vmatpush1.bf16.msra.mxu0 %v689
    %1844 = vmatprep.subr.bf16.mxu0 %v694
    %1845 = vmatpush1.bf16.msra.mxu0 %v693
    %1846 = vmatprep.subr.bf16.mxu0 %v698
    %1847 = vmatpush1.bf16.msra.mxu0 %v697
    %1848 = vmatprep.subr.bf16.mxu0 %v702
    %1849 = vmatpush1.bf16.msra.mxu0 %v701
    %1850 = vmatprep.subr.bf16.mxu0 %v706
    %1851 = vmatpush1.bf16.msra.mxu0 %v705
    %1852 = vmatprep.subr.bf16.mxu0 %v710
    %1853 = vmatpush1.bf16.msra.mxu0 %v709
    %1854 = vmatprep.subr.bf16.mxu0 %v714
    %1855 = vmatpush1.bf16.msra.mxu0 %v713
    %1856 = vmatprep.subr.bf16.mxu0 %v718
    %1857 = vmatpush1.bf16.msra.mxu0 %v717
    %1858 = vmatprep.subr.bf16.mxu0 %v722
    %1859 = vmatpush1.bf16.msra.mxu0 %v721
    %1860 = vmatprep.subr.bf16.mxu0 %v726
    %1861 = vmatpush1.bf16.msra.mxu0 %v725
    %1862 = vmatprep.subr.bf16.mxu0 %v730
    %1863 = vmatpush1.bf16.msra.mxu0 %v729
    %1864 = vmatprep.subr.bf16.mxu0 %v734
    %1865 = vmatpush1.bf16.msra.mxu0 %v733
    %1866 = vmatprep.subr.bf16.mxu0 %v738
    %1867 = vmatpush1.bf16.msra.mxu0 %v737
    %1868 = vmatprep.subr.bf16.mxu0 %v742
    %1869 = vmatpush1.bf16.msra.mxu0 %v741
    %1870 = vmatprep.mubr.bf16.mxu0 %v1796
    %1871 = vmatmul.mubr.bf16.gmra.mrb[0].mxu0 %v1795
    %v1872 = vpop.f32.mrb[0].mxu0
    %v1873 = vadd.f32 0.0, %v1872
    %v1874 = vpop.f32.mrb[0].mxu0
    %v1875 = vadd.f32 0.0, %v1874
    %v1876 = vpop.f32.mrb[0].mxu0
    %v1877 = vpop.f32.mrb[0].mxu0
    %1878 = vdwg.mxu0
    %1879 = vmatprep.subr.bf16.mxu0 %v1134
    %1880 = vmatpush1.bf16.msra.mxu0 %v1133
    %1881 = vmatprep.subr.bf16.mxu0 %v1138
    %1882 = vmatpush1.bf16.msra.mxu0 %v1137
    %1883 = vmatprep.subr.bf16.mxu0 %v1142
    %1884 = vmatpush1.bf16.msra.mxu0 %v1141
    %1885 = vmatprep.subr.bf16.mxu0 %v1146
    %1886 = vmatpush1.bf16.msra.mxu0 %v1145
    %1887 = vmatprep.subr.bf16.mxu0 %v1150
    %1888 = vmatpush1.bf16.msra.mxu0 %v1149
    %1889 = vmatprep.subr.bf16.mxu0 %v1154
    %1890 = vmatpush1.bf16.msra.mxu0 %v1153
    %1891 = vmatprep.subr.bf16.mxu0 %v1158
    %1892 = vmatpush1.bf16.msra.mxu0 %v1157
    %1893 = vmatprep.subr.bf16.mxu0 %v1162
    %1894 = vmatpush1.bf16.msra.mxu0 %v1161
    %1895 = vmatprep.subr.bf16.mxu0 %v1166
    %1896 = vmatpush1.bf16.msra.mxu0 %v1165
    %1897 = vmatprep.subr.bf16.mxu0 %v1170
    %1898 = vmatpush1.bf16.msra.mxu0 %v1169
    %1899 = vmatprep.subr.bf16.mxu0 %v1174
    %1900 = vmatpush1.bf16.msra.mxu0 %v1173
    %1901 = vmatprep.subr.bf16.mxu0 %v1178
    %1902 = vmatpush1.bf16.msra.mxu0 %v1177
    %1903 = vmatprep.subr.bf16.mxu0 %v1182
    %1904 = vmatpush1.bf16.msra.mxu0 %v1181
    %1905 = vmatprep.subr.bf16.mxu0 %v1186
    %1906 = vmatpush1.bf16.msra.mxu0 %v1185
    %1907 = vmatprep.subr.bf16.mxu0 %v1190
    %1908 = vmatpush1.bf16.msra.mxu0 %v1189
    %1909 = vmatprep.subr.bf16.mxu0 %v1194
    %1910 = vmatpush1.bf16.msra.mxu0 %v1193
    %1911 = vmatprep.mubr.bf16.mxu0 %v1796
    %1912 = vmatmul.mubr.bf16.gmra.mrb[0].mxu0 %v1795
    %v1913 = vpop.f32.mrb[0].mxu0
    %v1914 = vadd.f32 0.0, %v1913
    %v1915 = vpop.f32.mrb[0].mxu0
    %v1916 = vadd.f32 0.0, %v1915
    %v1917 = vpop.f32.mrb[0].mxu0
    %v1918 = vpop.f32.mrb[0].mxu0
    %1919 = vdwg.mxu0
    %1920 = vmatprep.subr.bf16.mxu0 %v1136
    %1921 = vmatpush1.bf16.msra.mxu0 %v1135
    %1922 = vmatprep.subr.bf16.mxu0 %v1140
    %1923 = vmatpush1.bf16.msra.mxu0 %v1139
    %1924 = vmatprep.subr.bf16.mxu0 %v1144
    %1925 = vmatpush1.bf16.msra.mxu0 %v1143
    %1926 = vmatprep.subr.bf16.mxu0 %v1148
    %1927 = vmatpush1.bf16.msra.mxu0 %v1147
    %1928 = vmatprep.subr.bf16.mxu0 %v1152
    %1929 = vmatpush1.bf16.msra.mxu0 %v1151
    %1930 = vmatprep.subr.bf16.mxu0 %v1156
    %1931 = vmatpush1.bf16.msra.mxu0 %v1155
    %1932 = vmatprep.subr.bf16.mxu0 %v1160
    %1933 = vmatpush1.bf16.msra.mxu0 %v1159
    %1934 = vmatprep.subr.bf16.mxu0 %v1164
    %1935 = vmatpush1.bf16.msra.mxu0 %v1163
    %1936 = vmatprep.subr.bf16.mxu0 %v1168
    %1937 = vmatpush1.bf16.msra.mxu0 %v1167
    %1938 = vmatprep.subr.bf16.mxu0 %v1172
    %1939 = vmatpush1.bf16.msra.mxu0 %v1171
    %1940 = vmatprep.subr.bf16.mxu0 %v1176
    %1941 = vmatpush1.bf16.msra.mxu0 %v1175
    %1942 = vmatprep.subr.bf16.mxu0 %v1180
    %1943 = vmatpush1.bf16.msra.mxu0 %v1179
    %1944 = vmatprep.subr.bf16.mxu0 %v1184
    %1945 = vmatpush1.bf16.msra.mxu0 %v1183
    %1946 = vmatprep.subr.bf16.mxu0 %v1188
    %1947 = vmatpush1.bf16.msra.mxu0 %v1187
    %1948 = vmatprep.subr.bf16.mxu0 %v1192
    %1949 = vmatpush1.bf16.msra.mxu0 %v1191
    %1950 = vmatprep.subr.bf16.mxu0 %v1196
    %1951 = vmatpush1.bf16.msra.mxu0 %v1195
    %1952 = vmatprep.mubr.bf16.mxu0 %v1796
    %1953 = vmatmul.mubr.bf16.gmra.mrb[0].mxu0 %v1795
    %v1954 = vpop.f32.mrb[0].mxu0
    %v1955 = vadd.f32 0.0, %v1954
    %v1956 = vpop.f32.mrb[0].mxu0
    %v1957 = vadd.f32 0.0, %v1956
    %v1958 = vpop.f32.mrb[0].mxu0
    %v1959 = vpop.f32.mrb[0].mxu0
    %1960 = vdwg.mxu0
    %s1961 = scalar_lea.vmem [#allocation2], 3
    %v1962 = vld [vmem:[%s1961] ss:$8 sm:$0xf]
    %v1967 = vcombine.low %v1832, %v1834
    %v1968 = vcombine.low %v1873, %v1875
    %v1970 = vunpack.c.l.s4 1966171168
    %v1971 = vunpack.c.0.s8 %v1970
    %v1972 = vlaneseq
    %v1973 = vshrl.u32 %v1972, 7
    %v1974 = vsub.s32 %v1971, %v1973
    %v1975 = vrot.slane %v1967, %v1974
    %v1977 = vunpack.c.l.s4 1966171168
    %v1978 = vunpack.c.0.s8 %v1977
    %v1979 = vlaneseq
    %v1980 = vshrl.u32 %v1979, 7
    %v1981 = vsub.s32 %v1978, %v1980
    %v1982 = vrot.slane %v1968, %v1981
    %v1983 = vcombine.low %v1975, %v1982
    %v1985 = vunpack.c.l.s4 1966171168
    %v1986 = vunpack.c.0.s8 %v1985
    %v1987 = vlaneseq
    %v1988 = vshrl.u32 %v1987, 7
    %v1989 = vsub.s32 %v1986, %v1988
    %v1990 = vrot.slane %v1983, %v1989
    %v1992 = vadd.f32 %v1962, %v1990
    %v1993 = vxor.u32 %v1992, 2147483648
    %v1994 = vmul.f32 %v1993, 1.442695
    %v1995 = vpow.pop %v1994
    %v1996 = vadd.f32 %v1995, 1.0
    %v1997 = vrcp.pop %v1996
    %v1998 = vmul.f32 1.0, %v1997
    %v2000 = vrot.slane %v1992, 3
    %v2002 = vtanh.pop %v2000
    %v2004 = vrot.slane %v1998, 1
    %v2006 = vmul.f32 %v2004, %v1740
    %v2007 = vmul.f32 %v1998, %v2002
    %v2008 = vadd.f32 %v2006, %v2007
    %v2009 = vtanh.pop %v2008
    %v2010 = vrot.slane %v1998, 2
    %v2012 = vmul.f32 %v2010, %v2009
    %v2017 = vcombine.low %v1914, %v1916
    %v2018 = vcombine.low %v1955, %v1957
    %v2020 = vunpack.c.l.s4 1966171168
    %v2021 = vunpack.c.0.s8 %v2020
    %v2022 = vlaneseq
    %v2023 = vshrl.u32 %v2022, 7
    %v2024 = vsub.s32 %v2021, %v2023
    %v2025 = vrot.slane %v2017, %v2024
    %v2027 = vunpack.c.l.s4 1966171168
    %v2028 = vunpack.c.0.s8 %v2027
    %v2029 = vlaneseq
    %v2030 = vshrl.u32 %v2029, 7
    %v2031 = vsub.s32 %v2028, %v2030
    %v2032 = vrot.slane %v2018, %v2031
    %v2033 = vcombine.low %v2025, %v2032
    %v2035 = vunpack.c.l.s4 1966171168
    %v2036 = vunpack.c.0.s8 %v2035
    %v2037 = vlaneseq
    %v2038 = vshrl.u32 %v2037, 7
    %v2039 = vsub.s32 %v2036, %v2038
    %v2040 = vrot.slane %v2033, %v2039
    %v2042 = vadd.f32 %v51, %v2040
    %v2043 = vxor.u32 %v2042, 2147483648
    %v2044 = vmul.f32 %v2043, 1.442695
    %v2045 = vpow.pop %v2044
    %v2046 = vadd.f32 %v2045, 1.0
    %v2047 = vrcp.pop %v2046
    %v2048 = vmul.f32 1.0, %v2047
    %v2050 = vrot.slane %v2042, 3
    %v2052 = vtanh.pop %v2050
    %v2054 = vrot.slane %v2048, 1
    %v2056 = vmul.f32 %v2054, %v1790
    %v2057 = vmul.f32 %v2048, %v2052
    %v2058 = vadd.f32 %v2056, %v2057
    %v2059 = vtanh.pop %v2058
    %v2060 = vrot.slane %v2048, 2
    %v2062 = vmul.f32 %v2060, %v2059
    %v2063 = vpack.c.bf16 %v2012, %v2012
    %v2064 = vpack.c.bf16 %v2062, %v2062
    %2065 = vmatprep.subr.bf16.mxu0 %v680
    %2066 = vmatpush1.bf16.msra.mxu0 %v679
    %2067 = vmatprep.subr.bf16.mxu0 %v684
    %2068 = vmatpush1.bf16.msra.mxu0 %v683
    %2069 = vmatprep.subr.bf16.mxu0 %v688
    %2070 = vmatpush1.bf16.msra.mxu0 %v687
    %2071 = vmatprep.subr.bf16.mxu0 %v692
    %2072 = vmatpush1.bf16.msra.mxu0 %v691
    %2073 = vmatprep.subr.bf16.mxu0 %v696
    %2074 = vmatpush1.bf16.msra.mxu0 %v695
    %2075 = vmatprep.subr.bf16.mxu0 %v700
    %2076 = vmatpush1.bf16.msra.mxu0 %v699
    %2077 = vmatprep.subr.bf16.mxu0 %v704
    %2078 = vmatpush1.bf16.msra.mxu0 %v703
    %2079 = vmatprep.subr.bf16.mxu0 %v708
    %2080 = vmatpush1.bf16.msra.mxu0 %v707
    %2081 = vmatprep.subr.bf16.mxu0 %v712
    %2082 = vmatpush1.bf16.msra.mxu0 %v711
    %2083 = vmatprep.subr.bf16.mxu0 %v716
    %2084 = vmatpush1.bf16.msra.mxu0 %v715
    %2085 = vmatprep.subr.bf16.mxu0 %v720
    %2086 = vmatpush1.bf16.msra.mxu0 %v719
    %2087 = vmatprep.subr.bf16.mxu0 %v724
    %2088 = vmatpush1.bf16.msra.mxu0 %v723
    %2089 = vmatprep.subr.bf16.mxu0 %v728
    %2090 = vmatpush1.bf16.msra.mxu0 %v727
    %2091 = vmatprep.subr.bf16.mxu0 %v732
    %2092 = vmatpush1.bf16.msra.mxu0 %v731
    %2093 = vmatprep.subr.bf16.mxu0 %v736
    %2094 = vmatpush1.bf16.msra.mxu0 %v735
    %2095 = vmatprep.subr.bf16.mxu0 %v740
    %2096 = vmatpush1.bf16.msra.mxu0 %v739
    %2097 = vmatprep.mubr.bf16.mxu0 %v2064
    %2098 = vmatmul.mubr.bf16.gmra.mrb[0].mxu0 %v2063
    %v2099 = vpop.f32.mrb[0].mxu0
    %v2100 = vadd.f32 0.0, %v2099
    %v2101 = vpop.f32.mrb[0].mxu0
    %v2102 = vadd.f32 0.0, %v2101
    %v2103 = vpop.f32.mrb[0].mxu0
    %v2104 = vpop.f32.mrb[0].mxu0
    %2105 = vdwg.mxu0
    %2106 = vmatprep.subr.bf16.mxu0 %v682
    %2107 = vmatpush1.bf16.msra.mxu0 %v681
    %2108 = vmatprep.subr.bf16.mxu0 %v686
    %2109 = vmatpush1.bf16.msra.mxu0 %v685
    %2110 = vmatprep.subr.bf16.mxu0 %v690
    %2111 = vmatpush1.bf16.msra.mxu0 %v689
    %2112 = vmatprep.subr.bf16.mxu0 %v694
    %2113 = vmatpush1.bf16.msra.mxu0 %v693
    %2114 = vmatprep.subr.bf16.mxu0 %v698
    %2115 = vmatpush1.bf16.msra.mxu0 %v697
    %2116 = vmatprep.subr.bf16.mxu0 %v702
    %2117 = vmatpush1.bf16.msra.mxu0 %v701
    %2118 = vmatprep.subr.bf16.mxu0 %v706
    %2119 = vmatpush1.bf16.msra.mxu0 %v705
    %2120 = vmatprep.subr.bf16.mxu0 %v710
    %2121 = vmatpush1.bf16.msra.mxu0 %v709
    %2122 = vmatprep.subr.bf16.mxu0 %v714
    %2123 = vmatpush1.bf16.msra.mxu0 %v713
    %2124 = vmatprep.subr.bf16.mxu0 %v718
    %2125 = vmatpush1.bf16.msra.mxu0 %v717
    %2126 = vmatprep.subr.bf16.mxu0 %v722
    %2127 = vmatpush1.bf16.msra.mxu0 %v721
    %2128 = vmatprep.subr.bf16.mxu0 %v726
    %2129 = vmatpush1.bf16.msra.mxu0 %v725
    %2130 = vmatprep.subr.bf16.mxu0 %v730
    %2131 = vmatpush1.bf16.msra.mxu0 %v729
    %2132 = vmatprep.subr.bf16.mxu0 %v734
    %2133 = vmatpush1.bf16.msra.mxu0 %v733
    %2134 = vmatprep.subr.bf16.mxu0 %v738
    %2135 = vmatpush1.bf16.msra.mxu0 %v737
    %2136 = vmatprep.subr.bf16.mxu0 %v742
    %2137 = vmatpush1.bf16.msra.mxu0 %v741
    %2138 = vmatprep.mubr.bf16.mxu0 %v2064
    %2139 = vmatmul.mubr.bf16.gmra.mrb[0].mxu0 %v2063
    %v2140 = vpop.f32.mrb[0].mxu0
    %v2141 = vadd.f32 0.0, %v2140
    %v2142 = vpop.f32.mrb[0].mxu0
    %v2143 = vadd.f32 0.0, %v2142
    %v2144 = vpop.f32.mrb[0].mxu0
    %v2145 = vpop.f32.mrb[0].mxu0
    %2146 = vdwg.mxu0
    %2147 = vmatprep.subr.bf16.mxu0 %v1134
    %2148 = vmatpush1.bf16.msra.mxu0 %v1133
    %2149 = vmatprep.subr.bf16.mxu0 %v1138
    %2150 = vmatpush1.bf16.msra.mxu0 %v1137
    %2151 = vmatprep.subr.bf16.mxu0 %v1142
    %2152 = vmatpush1.bf16.msra.mxu0 %v1141
    %2153 = vmatprep.subr.bf16.mxu0 %v1146
    %2154 = vmatpush1.bf16.msra.mxu0 %v1145
    %2155 = vmatprep.subr.bf16.mxu0 %v1150
    %2156 = vmatpush1.bf16.msra.mxu0 %v1149
    %2157 = vmatprep.subr.bf16.mxu0 %v1154
    %2158 = vmatpush1.bf16.msra.mxu0 %v1153
    %2159 = vmatprep.subr.bf16.mxu0 %v1158
    %2160 = vmatpush1.bf16.msra.mxu0 %v1157
    %2161 = vmatprep.subr.bf16.mxu0 %v1162
    %2162 = vmatpush1.bf16.msra.mxu0 %v1161
    %2163 = vmatprep.subr.bf16.mxu0 %v1166
    %2164 = vmatpush1.bf16.msra.mxu0 %v1165
    %2165 = vmatprep.subr.bf16.mxu0 %v1170
    %2166 = vmatpush1.bf16.msra.mxu0 %v1169
    %2167 = vmatprep.subr.bf16.mxu0 %v1174
    %2168 = vmatpush1.bf16.msra.mxu0 %v1173
    %2169 = vmatprep.subr.bf16.mxu0 %v1178
    %2170 = vmatpush1.bf16.msra.mxu0 %v1177
    %2171 = vmatprep.subr.bf16.mxu0 %v1182
    %2172 = vmatpush1.bf16.msra.mxu0 %v1181
    %2173 = vmatprep.subr.bf16.mxu0 %v1186
    %2174 = vmatpush1.bf16.msra.mxu0 %v1185
    %2175 = vmatprep.subr.bf16.mxu0 %v1190
    %2176 = vmatpush1.bf16.msra.mxu0 %v1189
    %2177 = vmatprep.subr.bf16.mxu0 %v1194
    %2178 = vmatpush1.bf16.msra.mxu0 %v1193
    %2179 = vmatprep.mubr.bf16.mxu0 %v2064
    %2180 = vmatmul.mubr.bf16.gmra.mrb[0].mxu0 %v2063
    %v2181 = vpop.f32.mrb[0].mxu0
    %v2182 = vadd.f32 0.0, %v2181
    %v2183 = vpop.f32.mrb[0].mxu0
    %v2184 = vadd.f32 0.0, %v2183
    %v2185 = vpop.f32.mrb[0].mxu0
    %v2186 = vpop.f32.mrb[0].mxu0
    %2187 = vdwg.mxu0
    %2188 = vmatprep.subr.bf16.mxu0 %v1136
    %2189 = vmatpush1.bf16.msra.mxu0 %v1135
    %2190 = vmatprep.subr.bf16.mxu0 %v1140
    %2191 = vmatpush1.bf16.msra.mxu0 %v1139
    %2192 = vmatprep.subr.bf16.mxu0 %v1144
    %2193 = vmatpush1.bf16.msra.mxu0 %v1143
    %2194 = vmatprep.subr.bf16.mxu0 %v1148
    %2195 = vmatpush1.bf16.msra.mxu0 %v1147
    %2196 = vmatprep.subr.bf16.mxu0 %v1152
    %2197 = vmatpush1.bf16.msra.mxu0 %v1151
    %2198 = vmatprep.subr.bf16.mxu0 %v1156
    %2199 = vmatpush1.bf16.msra.mxu0 %v1155
    %2200 = vmatprep.subr.bf16.mxu0 %v1160
    %2201 = vmatpush1.bf16.msra.mxu0 %v1159
    %2202 = vmatprep.subr.bf16.mxu0 %v1164
    %2203 = vmatpush1.bf16.msra.mxu0 %v1163
    %2204 = vmatprep.subr.bf16.mxu0 %v1168
    %2205 = vmatpush1.bf16.msra.mxu0 %v1167
    %2206 = vmatprep.subr.bf16.mxu0 %v1172
    %2207 = vmatpush1.bf16.msra.mxu0 %v1171
    %2208 = vmatprep.subr.bf16.mxu0 %v1176
    %2209 = vmatpush1.bf16.msra.mxu0 %v1175
    %2210 = vmatprep.subr.bf16.mxu0 %v1180
    %2211 = vmatpush1.bf16.msra.mxu0 %v1179
    %2212 = vmatprep.subr.bf16.mxu0 %v1184
    %2213 = vmatpush1.bf16.msra.mxu0 %v1183
    %2214 = vmatprep.subr.bf16.mxu0 %v1188
    %2215 = vmatpush1.bf16.msra.mxu0 %v1187
    %2216 = vmatprep.subr.bf16.mxu0 %v1192
    %2217 = vmatpush1.bf16.msra.mxu0 %v1191
    %2218 = vmatprep.subr.bf16.mxu0 %v1196
    %2219 = vmatpush1.bf16.msra.mxu0 %v1195
    %2220 = vmatprep.mubr.bf16.mxu0 %v2064
    %2221 = vmatmul.mubr.bf16.gmra.mrb[0].mxu0 %v2063
    %v2222 = vpop.f32.mrb[0].mxu0
    %v2223 = vadd.f32 0.0, %v2222
    %v2224 = vpop.f32.mrb[0].mxu0
    %v2225 = vadd.f32 0.0, %v2224
    %v2226 = vpop.f32.mrb[0].mxu0
    %v2227 = vpop.f32.mrb[0].mxu0
    %2228 = vdwg.mxu0
    %s2229 = scalar_lea.vmem [#allocation2], 4
    %v2230 = vld [vmem:[%s2229] ss:$8 sm:$0xf]
    %v2235 = vcombine.low %v2100, %v2102
    %v2236 = vcombine.low %v2141, %v2143
    %v2238 = vunpack.c.l.s4 1966171168
    %v2239 = vunpack.c.0.s8 %v2238
    %v2240 = vlaneseq
    %v2241 = vshrl.u32 %v2240, 7
    %v2242 = vsub.s32 %v2239, %v2241
    %v2243 = vrot.slane %v2235, %v2242
    %v2245 = vunpack.c.l.s4 1966171168
    %v2246 = vunpack.c.0.s8 %v2245
    %v2247 = vlaneseq
    %v2248 = vshrl.u32 %v2247, 7
    %v2249 = vsub.s32 %v2246, %v2248
    %v2250 = vrot.slane %v2236, %v2249
    %v2251 = vcombine.low %v2243, %v2250
    %v2253 = vunpack.c.l.s4 1966171168
    %v2254 = vunpack.c.0.s8 %v2253
    %v2255 = vlaneseq
    %v2256 = vshrl.u32 %v2255, 7
    %v2257 = vsub.s32 %v2254, %v2256
    %v2258 = vrot.slane %v2251, %v2257
    %v2260 = vadd.f32 %v2230, %v2258
    %v2261 = vxor.u32 %v2260, 2147483648
    %v2262 = vmul.f32 %v2261, 1.442695
    %v2263 = vpow.pop %v2262
    %v2264 = vadd.f32 %v2263, 1.0
    %v2265 = vrcp.pop %v2264
    %v2266 = vmul.f32 1.0, %v2265
    %v2268 = vrot.slane %v2260, 3
    %v2270 = vtanh.pop %v2268
    %v2272 = vrot.slane %v2266, 1
    %v2274 = vmul.f32 %v2272, %v2008
    %v2275 = vmul.f32 %v2266, %v2270
    %v2276 = vadd.f32 %v2274, %v2275
    %v2277 = vtanh.pop %v2276
    %v2278 = vrot.slane %v2266, 2
    %v2280 = vmul.f32 %v2278, %v2277
    %v2285 = vcombine.low %v2182, %v2184
    %v2286 = vcombine.low %v2223, %v2225
    %v2288 = vunpack.c.l.s4 1966171168
    %v2289 = vunpack.c.0.s8 %v2288
    %v2290 = vlaneseq
    %v2291 = vshrl.u32 %v2290, 7
    %v2292 = vsub.s32 %v2289, %v2291
    %v2293 = vrot.slane %v2285, %v2292
    %v2295 = vunpack.c.l.s4 1966171168
    %v2296 = vunpack.c.0.s8 %v2295
    %v2297 = vlaneseq
    %v2298 = vshrl.u32 %v2297, 7
    %v2299 = vsub.s32 %v2296, %v2298
    %v2300 = vrot.slane %v2286, %v2299
    %v2301 = vcombine.low %v2293, %v2300
    %v2303 = vunpack.c.l.s4 1966171168
    %v2304 = vunpack.c.0.s8 %v2303
    %v2305 = vlaneseq
    %v2306 = vshrl.u32 %v2305, 7
    %v2307 = vsub.s32 %v2304, %v2306
    %v2308 = vrot.slane %v2301, %v2307
    %v2310 = vadd.f32 %v51, %v2308
    %v2311 = vxor.u32 %v2310, 2147483648
    %v2312 = vmul.f32 %v2311, 1.442695
    %v2313 = vpow.pop %v2312
    %v2314 = vadd.f32 %v2313, 1.0
    %v2315 = vrcp.pop %v2314
    %v2316 = vmul.f32 1.0, %v2315
    %v2318 = vrot.slane %v2310, 3
    %v2320 = vtanh.pop %v2318
    %v2322 = vrot.slane %v2316, 1
    %v2324 = vmul.f32 %v2322, %v2058
    %v2325 = vmul.f32 %v2316, %v2320
    %v2326 = vadd.f32 %v2324, %v2325
    %v2327 = vtanh.pop %v2326
    %v2328 = vrot.slane %v2316, 2
    %v2330 = vmul.f32 %v2328, %v2327
    %v2331 = vpack.c.bf16 %v2280, %v2280
    %v2332 = vpack.c.bf16 %v2330, %v2330
    %2333 = vmatprep.subr.bf16.mxu0 %v680
    %2334 = vmatpush1.bf16.msra.mxu0 %v679
    %2335 = vmatprep.subr.bf16.mxu0 %v684
    %2336 = vmatpush1.bf16.msra.mxu0 %v683
    %2337 = vmatprep.subr.bf16.mxu0 %v688
    %2338 = vmatpush1.bf16.msra.mxu0 %v687
    %2339 = vmatprep.subr.bf16.mxu0 %v692
    %2340 = vmatpush1.bf16.msra.mxu0 %v691
    %2341 = vmatprep.subr.bf16.mxu0 %v696
    %2342 = vmatpush1.bf16.msra.mxu0 %v695
    %2343 = vmatprep.subr.bf16.mxu0 %v700
    %2344 = vmatpush1.bf16.msra.mxu0 %v699
    %2345 = vmatprep.subr.bf16.mxu0 %v704
    %2346 = vmatpush1.bf16.msra.mxu0 %v703
    %2347 = vmatprep.subr.bf16.mxu0 %v708
    %2348 = vmatpush1.bf16.msra.mxu0 %v707
    %2349 = vmatprep.subr.bf16.mxu0 %v712
    %2350 = vmatpush1.bf16.msra.mxu0 %v711
    %2351 = vmatprep.subr.bf16.mxu0 %v716
    %2352 = vmatpush1.bf16.msra.mxu0 %v715
    %2353 = vmatprep.subr.bf16.mxu0 %v720
    %2354 = vmatpush1.bf16.msra.mxu0 %v719
    %2355 = vmatprep.subr.bf16.mxu0 %v724
    %2356 = vmatpush1.bf16.msra.mxu0 %v723
    %2357 = vmatprep.subr.bf16.mxu0 %v728
    %2358 = vmatpush1.bf16.msra.mxu0 %v727
    %2359 = vmatprep.subr.bf16.mxu0 %v732
    %2360 = vmatpush1.bf16.msra.mxu0 %v731
    %2361 = vmatprep.subr.bf16.mxu0 %v736
    %2362 = vmatpush1.bf16.msra.mxu0 %v735
    %2363 = vmatprep.subr.bf16.mxu0 %v740
    %2364 = vmatpush1.bf16.msra.mxu0 %v739
    %2365 = vmatprep.mubr.bf16.mxu0 %v2332
    %2366 = vmatmul.mubr.bf16.gmra.mrb[0].mxu0 %v2331
    %v2367 = vpop.f32.mrb[0].mxu0
    %v2368 = vadd.f32 0.0, %v2367
    %v2369 = vpop.f32.mrb[0].mxu0
    %v2370 = vadd.f32 0.0, %v2369
    %v2371 = vpop.f32.mrb[0].mxu0
    %v2372 = vpop.f32.mrb[0].mxu0
    %2373 = vdwg.mxu0
    %2374 = vmatprep.subr.bf16.mxu0 %v682
    %2375 = vmatpush1.bf16.msra.mxu0 %v681
    %2376 = vmatprep.subr.bf16.mxu0 %v686
    %2377 = vmatpush1.bf16.msra.mxu0 %v685
    %2378 = vmatprep.subr.bf16.mxu0 %v690
    %2379 = vmatpush1.bf16.msra.mxu0 %v689
    %2380 = vmatprep.subr.bf16.mxu0 %v694
    %2381 = vmatpush1.bf16.msra.mxu0 %v693
    %2382 = vmatprep.subr.bf16.mxu0 %v698
    %2383 = vmatpush1.bf16.msra.mxu0 %v697
    %2384 = vmatprep.subr.bf16.mxu0 %v702
    %2385 = vmatpush1.bf16.msra.mxu0 %v701
    %2386 = vmatprep.subr.bf16.mxu0 %v706
    %2387 = vmatpush1.bf16.msra.mxu0 %v705
    %2388 = vmatprep.subr.bf16.mxu0 %v710
    %2389 = vmatpush1.bf16.msra.mxu0 %v709
    %2390 = vmatprep.subr.bf16.mxu0 %v714
    %2391 = vmatpush1.bf16.msra.mxu0 %v713
    %2392 = vmatprep.subr.bf16.mxu0 %v718
    %2393 = vmatpush1.bf16.msra.mxu0 %v717
    %2394 = vmatprep.subr.bf16.mxu0 %v722
    %2395 = vmatpush1.bf16.msra.mxu0 %v721
    %2396 = vmatprep.subr.bf16.mxu0 %v726
    %2397 = vmatpush1.bf16.msra.mxu0 %v725
    %2398 = vmatprep.subr.bf16.mxu0 %v730
    %2399 = vmatpush1.bf16.msra.mxu0 %v729
    %2400 = vmatprep.subr.bf16.mxu0 %v734
    %2401 = vmatpush1.bf16.msra.mxu0 %v733
    %2402 = vmatprep.subr.bf16.mxu0 %v738
    %2403 = vmatpush1.bf16.msra.mxu0 %v737
    %2404 = vmatprep.subr.bf16.mxu0 %v742
    %2405 = vmatpush1.bf16.msra.mxu0 %v741
    %2406 = vmatprep.mubr.bf16.mxu0 %v2332
    %2407 = vmatmul.mubr.bf16.gmra.mrb[0].mxu0 %v2331
    %v2408 = vpop.f32.mrb[0].mxu0
    %v2409 = vadd.f32 0.0, %v2408
    %v2410 = vpop.f32.mrb[0].mxu0
    %v2411 = vadd.f32 0.0, %v2410
    %v2412 = vpop.f32.mrb[0].mxu0
    %v2413 = vpop.f32.mrb[0].mxu0
    %2414 = vdwg.mxu0
    %2415 = vmatprep.subr.bf16.mxu0 %v1134
    %2416 = vmatpush1.bf16.msra.mxu0 %v1133
    %2417 = vmatprep.subr.bf16.mxu0 %v1138
    %2418 = vmatpush1.bf16.msra.mxu0 %v1137
    %2419 = vmatprep.subr.bf16.mxu0 %v1142
    %2420 = vmatpush1.bf16.msra.mxu0 %v1141
    %2421 = vmatprep.subr.bf16.mxu0 %v1146
    %2422 = vmatpush1.bf16.msra.mxu0 %v1145
    %2423 = vmatprep.subr.bf16.mxu0 %v1150
    %2424 = vmatpush1.bf16.msra.mxu0 %v1149
    %2425 = vmatprep.subr.bf16.mxu0 %v1154
    %2426 = vmatpush1.bf16.msra.mxu0 %v1153
    %2427 = vmatprep.subr.bf16.mxu0 %v1158
    %2428 = vmatpush1.bf16.msra.mxu0 %v1157
    %2429 = vmatprep.subr.bf16.mxu0 %v1162
    %2430 = vmatpush1.bf16.msra.mxu0 %v1161
    %2431 = vmatprep.subr.bf16.mxu0 %v1166
    %2432 = vmatpush1.bf16.msra.mxu0 %v1165
    %2433 = vmatprep.subr.bf16.mxu0 %v1170
    %2434 = vmatpush1.bf16.msra.mxu0 %v1169
    %2435 = vmatprep.subr.bf16.mxu0 %v1174
    %2436 = vmatpush1.bf16.msra.mxu0 %v1173
    %2437 = vmatprep.subr.bf16.mxu0 %v1178
    %2438 = vmatpush1.bf16.msra.mxu0 %v1177
    %2439 = vmatprep.subr.bf16.mxu0 %v1182
    %2440 = vmatpush1.bf16.msra.mxu0 %v1181
    %2441 = vmatprep.subr.bf16.mxu0 %v1186
    %2442 = vmatpush1.bf16.msra.mxu0 %v1185
    %2443 = vmatprep.subr.bf16.mxu0 %v1190
    %2444 = vmatpush1.bf16.msra.mxu0 %v1189
    %2445 = vmatprep.subr.bf16.mxu0 %v1194
    %2446 = vmatpush1.bf16.msra.mxu0 %v1193
    %2447 = vmatprep.mubr.bf16.mxu0 %v2332
    %2448 = vmatmul.mubr.bf16.gmra.mrb[0].mxu0 %v2331
    %v2449 = vpop.f32.mrb[0].mxu0
    %v2450 = vadd.f32 0.0, %v2449
    %v2451 = vpop.f32.mrb[0].mxu0
    %v2452 = vadd.f32 0.0, %v2451
    %v2453 = vpop.f32.mrb[0].mxu0
    %v2454 = vpop.f32.mrb[0].mxu0
    %2455 = vdwg.mxu0
    %2456 = vmatprep.subr.bf16.mxu0 %v1136
    %2457 = vmatpush1.bf16.msra.mxu0 %v1135
    %2458 = vmatprep.subr.bf16.mxu0 %v1140
    %2459 = vmatpush1.bf16.msra.mxu0 %v1139
    %2460 = vmatprep.subr.bf16.mxu0 %v1144
    %2461 = vmatpush1.bf16.msra.mxu0 %v1143
    %2462 = vmatprep.subr.bf16.mxu0 %v1148
    %2463 = vmatpush1.bf16.msra.mxu0 %v1147
    %2464 = vmatprep.subr.bf16.mxu0 %v1152
    %2465 = vmatpush1.bf16.msra.mxu0 %v1151
    %2466 = vmatprep.subr.bf16.mxu0 %v1156
    %2467 = vmatpush1.bf16.msra.mxu0 %v1155
    %2468 = vmatprep.subr.bf16.mxu0 %v1160
    %2469 = vmatpush1.bf16.msra.mxu0 %v1159
    %2470 = vmatprep.subr.bf16.mxu0 %v1164
    %2471 = vmatpush1.bf16.msra.mxu0 %v1163
    %2472 = vmatprep.subr.bf16.mxu0 %v1168
    %2473 = vmatpush1.bf16.msra.mxu0 %v1167
    %2474 = vmatprep.subr.bf16.mxu0 %v1172
    %2475 = vmatpush1.bf16.msra.mxu0 %v1171
    %2476 = vmatprep.subr.bf16.mxu0 %v1176
    %2477 = vmatpush1.bf16.msra.mxu0 %v1175
    %2478 = vmatprep.subr.bf16.mxu0 %v1180
    %2479 = vmatpush1.bf16.msra.mxu0 %v1179
    %2480 = vmatprep.subr.bf16.mxu0 %v1184
    %2481 = vmatpush1.bf16.msra.mxu0 %v1183
    %2482 = vmatprep.subr.bf16.mxu0 %v1188
    %2483 = vmatpush1.bf16.msra.mxu0 %v1187
    %2484 = vmatprep.subr.bf16.mxu0 %v1192
    %2485 = vmatpush1.bf16.msra.mxu0 %v1191
    %2486 = vmatprep.subr.bf16.mxu0 %v1196
    %2487 = vmatpush1.bf16.msra.mxu0 %v1195
    %2488 = vmatprep.mubr.bf16.mxu0 %v2332
    %2489 = vmatmul.mubr.bf16.gmra.mrb[0].mxu0 %v2331
    %v2490 = vpop.f32.mrb[0].mxu0
    %v2491 = vadd.f32 0.0, %v2490
    %v2492 = vpop.f32.mrb[0].mxu0
    %v2493 = vadd.f32 0.0, %v2492
    %v2494 = vpop.f32.mrb[0].mxu0
    %v2495 = vpop.f32.mrb[0].mxu0
    %2496 = vdwg.mxu0
    %s2497 = scalar_lea.vmem [#allocation2], 5
    %v2498 = vld [vmem:[%s2497] ss:$8 sm:$0xf]
    %v2503 = vcombine.low %v2368, %v2370
    %v2504 = vcombine.low %v2409, %v2411
    %v2506 = vunpack.c.l.s4 1966171168
    %v2507 = vunpack.c.0.s8 %v2506
    %v2508 = vlaneseq
    %v2509 = vshrl.u32 %v2508, 7
    %v2510 = vsub.s32 %v2507, %v2509
    %v2511 = vrot.slane %v2503, %v2510
    %v2513 = vunpack.c.l.s4 1966171168
    %v2514 = vunpack.c.0.s8 %v2513
    %v2515 = vlaneseq
    %v2516 = vshrl.u32 %v2515, 7
    %v2517 = vsub.s32 %v2514, %v2516
    %v2518 = vrot.slane %v2504, %v2517
    %v2519 = vcombine.low %v2511, %v2518
    %v2521 = vunpack.c.l.s4 1966171168
    %v2522 = vunpack.c.0.s8 %v2521
    %v2523 = vlaneseq
    %v2524 = vshrl.u32 %v2523, 7
    %v2525 = vsub.s32 %v2522, %v2524
    %v2526 = vrot.slane %v2519, %v2525
    %v2528 = vadd.f32 %v2498, %v2526
    %v2529 = vxor.u32 %v2528, 2147483648
    %v2530 = vmul.f32 %v2529, 1.442695
    %v2531 = vpow.pop %v2530
    %v2532 = vadd.f32 %v2531, 1.0
    %v2533 = vrcp.pop %v2532
    %v2534 = vmul.f32 1.0, %v2533
    %v2536 = vrot.slane %v2528, 3
    %v2538 = vtanh.pop %v2536
    %v2540 = vrot.slane %v2534, 1
    %v2542 = vmul.f32 %v2540, %v2276
    %v2543 = vmul.f32 %v2534, %v2538
    %v2544 = vadd.f32 %v2542, %v2543
    %v2545 = vtanh.pop %v2544
    %v2546 = vrot.slane %v2534, 2
    %v2548 = vmul.f32 %v2546, %v2545
    %v2553 = vcombine.low %v2450, %v2452
    %v2554 = vcombine.low %v2491, %v2493
    %v2556 = vunpack.c.l.s4 1966171168
    %v2557 = vunpack.c.0.s8 %v2556
    %v2558 = vlaneseq
    %v2559 = vshrl.u32 %v2558, 7
    %v2560 = vsub.s32 %v2557, %v2559
    %v2561 = vrot.slane %v2553, %v2560
    %v2563 = vunpack.c.l.s4 1966171168
    %v2564 = vunpack.c.0.s8 %v2563
    %v2565 = vlaneseq
    %v2566 = vshrl.u32 %v2565, 7
    %v2567 = vsub.s32 %v2564, %v2566
    %v2568 = vrot.slane %v2554, %v2567
    %v2569 = vcombine.low %v2561, %v2568
    %v2571 = vunpack.c.l.s4 1966171168
    %v2572 = vunpack.c.0.s8 %v2571
    %v2573 = vlaneseq
    %v2574 = vshrl.u32 %v2573, 7
    %v2575 = vsub.s32 %v2572, %v2574
    %v2576 = vrot.slane %v2569, %v2575
    %v2578 = vadd.f32 %v51, %v2576
    %v2579 = vxor.u32 %v2578, 2147483648
    %v2580 = vmul.f32 %v2579, 1.442695
    %v2581 = vpow.pop %v2580
    %v2582 = vadd.f32 %v2581, 1.0
    %v2583 = vrcp.pop %v2582
    %v2584 = vmul.f32 1.0, %v2583
    %v2586 = vrot.slane %v2578, 3
    %v2588 = vtanh.pop %v2586
    %v2590 = vrot.slane %v2584, 1
    %v2592 = vmul.f32 %v2590, %v2326
    %v2593 = vmul.f32 %v2584, %v2588
    %v2594 = vadd.f32 %v2592, %v2593
    %v2595 = vtanh.pop %v2594
    %v2596 = vrot.slane %v2584, 2
    %v2598 = vmul.f32 %v2596, %v2595
    %v2599 = vpack.c.bf16 %v2548, %v2548
    %v2600 = vpack.c.bf16 %v2598, %v2598
    %2601 = vmatprep.subr.bf16.mxu0 %v680
    %2602 = vmatpush1.bf16.msra.mxu0 %v679
    %2603 = vmatprep.subr.bf16.mxu0 %v684
    %2604 = vmatpush1.bf16.msra.mxu0 %v683
    %2605 = vmatprep.subr.bf16.mxu0 %v688
    %2606 = vmatpush1.bf16.msra.mxu0 %v687
    %2607 = vmatprep.subr.bf16.mxu0 %v692
    %2608 = vmatpush1.bf16.msra.mxu0 %v691
    %2609 = vmatprep.subr.bf16.mxu0 %v696
    %2610 = vmatpush1.bf16.msra.mxu0 %v695
    %2611 = vmatprep.subr.bf16.mxu0 %v700
    %2612 = vmatpush1.bf16.msra.mxu0 %v699
    %2613 = vmatprep.subr.bf16.mxu0 %v704
    %2614 = vmatpush1.bf16.msra.mxu0 %v703
    %2615 = vmatprep.subr.bf16.mxu0 %v708
    %2616 = vmatpush1.bf16.msra.mxu0 %v707
    %2617 = vmatprep.subr.bf16.mxu0 %v712
    %2618 = vmatpush1.bf16.msra.mxu0 %v711
    %2619 = vmatprep.subr.bf16.mxu0 %v716
    %2620 = vmatpush1.bf16.msra.mxu0 %v715
    %2621 = vmatprep.subr.bf16.mxu0 %v720
    %2622 = vmatpush1.bf16.msra.mxu0 %v719
    %2623 = vmatprep.subr.bf16.mxu0 %v724
    %2624 = vmatpush1.bf16.msra.mxu0 %v723
    %2625 = vmatprep.subr.bf16.mxu0 %v728
    %2626 = vmatpush1.bf16.msra.mxu0 %v727
    %2627 = vmatprep.subr.bf16.mxu0 %v732
    %2628 = vmatpush1.bf16.msra.mxu0 %v731
    %2629 = vmatprep.subr.bf16.mxu0 %v736
    %2630 = vmatpush1.bf16.msra.mxu0 %v735
    %2631 = vmatprep.subr.bf16.mxu0 %v740
    %2632 = vmatpush1.bf16.msra.mxu0 %v739
    %2633 = vmatprep.mubr.bf16.mxu0 %v2600
    %2634 = vmatmul.mubr.bf16.gmra.mrb[0].mxu0 %v2599
    %v2635 = vpop.f32.mrb[0].mxu0
    %v2636 = vadd.f32 0.0, %v2635
    %v2637 = vpop.f32.mrb[0].mxu0
    %v2638 = vadd.f32 0.0, %v2637
    %v2639 = vpop.f32.mrb[0].mxu0
    %v2640 = vpop.f32.mrb[0].mxu0
    %2641 = vdwg.mxu0
    %2642 = vmatprep.subr.bf16.mxu0 %v682
    %2643 = vmatpush1.bf16.msra.mxu0 %v681
    %2644 = vmatprep.subr.bf16.mxu0 %v686
    %2645 = vmatpush1.bf16.msra.mxu0 %v685
    %2646 = vmatprep.subr.bf16.mxu0 %v690
    %2647 = vmatpush1.bf16.msra.mxu0 %v689
    %2648 = vmatprep.subr.bf16.mxu0 %v694
    %2649 = vmatpush1.bf16.msra.mxu0 %v693
    %2650 = vmatprep.subr.bf16.mxu0 %v698
    %2651 = vmatpush1.bf16.msra.mxu0 %v697
    %2652 = vmatprep.subr.bf16.mxu0 %v702
    %2653 = vmatpush1.bf16.msra.mxu0 %v701
    %2654 = vmatprep.subr.bf16.mxu0 %v706
    %2655 = vmatpush1.bf16.msra.mxu0 %v705
    %2656 = vmatprep.subr.bf16.mxu0 %v710
    %2657 = vmatpush1.bf16.msra.mxu0 %v709
    %2658 = vmatprep.subr.bf16.mxu0 %v714
    %2659 = vmatpush1.bf16.msra.mxu0 %v713
    %2660 = vmatprep.subr.bf16.mxu0 %v718
    %2661 = vmatpush1.bf16.msra.mxu0 %v717
    %2662 = vmatprep.subr.bf16.mxu0 %v722
    %2663 = vmatpush1.bf16.msra.mxu0 %v721
    %2664 = vmatprep.subr.bf16.mxu0 %v726
    %2665 = vmatpush1.bf16.msra.mxu0 %v725
    %2666 = vmatprep.subr.bf16.mxu0 %v730
    %2667 = vmatpush1.bf16.msra.mxu0 %v729
    %2668 = vmatprep.subr.bf16.mxu0 %v734
    %2669 = vmatpush1.bf16.msra.mxu0 %v733
    %2670 = vmatprep.subr.bf16.mxu0 %v738
    %2671 = vmatpush1.bf16.msra.mxu0 %v737
    %2672 = vmatprep.subr.bf16.mxu0 %v742
    %2673 = vmatpush1.bf16.msra.mxu0 %v741
    %2674 = vmatprep.mubr.bf16.mxu0 %v2600
    %2675 = vmatmul.mubr.bf16.gmra.mrb[0].mxu0 %v2599
    %v2676 = vpop.f32.mrb[0].mxu0
    %v2677 = vadd.f32 0.0, %v2676
    %v2678 = vpop.f32.mrb[0].mxu0
    %v2679 = vadd.f32 0.0, %v2678
    %v2680 = vpop.f32.mrb[0].mxu0
    %v2681 = vpop.f32.mrb[0].mxu0
    %2682 = vdwg.mxu0
    %2683 = vmatprep.subr.bf16.mxu0 %v1134
    %2684 = vmatpush1.bf16.msra.mxu0 %v1133
    %2685 = vmatprep.subr.bf16.mxu0 %v1138
    %2686 = vmatpush1.bf16.msra.mxu0 %v1137
    %2687 = vmatprep.subr.bf16.mxu0 %v1142
    %2688 = vmatpush1.bf16.msra.mxu0 %v1141
    %2689 = vmatprep.subr.bf16.mxu0 %v1146
    %2690 = vmatpush1.bf16.msra.mxu0 %v1145
    %2691 = vmatprep.subr.bf16.mxu0 %v1150
    %2692 = vmatpush1.bf16.msra.mxu0 %v1149
    %2693 = vmatprep.subr.bf16.mxu0 %v1154
    %2694 = vmatpush1.bf16.msra.mxu0 %v1153
    %2695 = vmatprep.subr.bf16.mxu0 %v1158
    %2696 = vmatpush1.bf16.msra.mxu0 %v1157
    %2697 = vmatprep.subr.bf16.mxu0 %v1162
    %2698 = vmatpush1.bf16.msra.mxu0 %v1161
    %2699 = vmatprep.subr.bf16.mxu0 %v1166
    %2700 = vmatpush1.bf16.msra.mxu0 %v1165
    %2701 = vmatprep.subr.bf16.mxu0 %v1170
    %2702 = vmatpush1.bf16.msra.mxu0 %v1169
    %2703 = vmatprep.subr.bf16.mxu0 %v1174
    %2704 = vmatpush1.bf16.msra.mxu0 %v1173
    %2705 = vmatprep.subr.bf16.mxu0 %v1178
    %2706 = vmatpush1.bf16.msra.mxu0 %v1177
    %2707 = vmatprep.subr.bf16.mxu0 %v1182
    %2708 = vmatpush1.bf16.msra.mxu0 %v1181
    %2709 = vmatprep.subr.bf16.mxu0 %v1186
    %2710 = vmatpush1.bf16.msra.mxu0 %v1185
    %2711 = vmatprep.subr.bf16.mxu0 %v1190
    %2712 = vmatpush1.bf16.msra.mxu0 %v1189
    %2713 = vmatprep.subr.bf16.mxu0 %v1194
    %2714 = vmatpush1.bf16.msra.mxu0 %v1193
    %2715 = vmatprep.mubr.bf16.mxu0 %v2600
    %2716 = vmatmul.mubr.bf16.gmra.mrb[0].mxu0 %v2599
    %v2717 = vpop.f32.mrb[0].mxu0
    %v2718 = vadd.f32 0.0, %v2717
    %v2719 = vpop.f32.mrb[0].mxu0
    %v2720 = vadd.f32 0.0, %v2719
    %v2721 = vpop.f32.mrb[0].mxu0
    %v2722 = vpop.f32.mrb[0].mxu0
    %2723 = vdwg.mxu0
    %2724 = vmatprep.subr.bf16.mxu0 %v1136
    %2725 = vmatpush1.bf16.msra.mxu0 %v1135
    %2726 = vmatprep.subr.bf16.mxu0 %v1140
    %2727 = vmatpush1.bf16.msra.mxu0 %v1139
    %2728 = vmatprep.subr.bf16.mxu0 %v1144
    %2729 = vmatpush1.bf16.msra.mxu0 %v1143
    %2730 = vmatprep.subr.bf16.mxu0 %v1148
    %2731 = vmatpush1.bf16.msra.mxu0 %v1147
    %2732 = vmatprep.subr.bf16.mxu0 %v1152
    %2733 = vmatpush1.bf16.msra.mxu0 %v1151
    %2734 = vmatprep.subr.bf16.mxu0 %v1156
    %2735 = vmatpush1.bf16.msra.mxu0 %v1155
    %2736 = vmatprep.subr.bf16.mxu0 %v1160
    %2737 = vmatpush1.bf16.msra.mxu0 %v1159
    %2738 = vmatprep.subr.bf16.mxu0 %v1164
    %2739 = vmatpush1.bf16.msra.mxu0 %v1163
    %2740 = vmatprep.subr.bf16.mxu0 %v1168
    %2741 = vmatpush1.bf16.msra.mxu0 %v1167
    %2742 = vmatprep.subr.bf16.mxu0 %v1172
    %2743 = vmatpush1.bf16.msra.mxu0 %v1171
    %2744 = vmatprep.subr.bf16.mxu0 %v1176
    %2745 = vmatpush1.bf16.msra.mxu0 %v1175
    %2746 = vmatprep.subr.bf16.mxu0 %v1180
    %2747 = vmatpush1.bf16.msra.mxu0 %v1179
    %2748 = vmatprep.subr.bf16.mxu0 %v1184
    %2749 = vmatpush1.bf16.msra.mxu0 %v1183
    %2750 = vmatprep.subr.bf16.mxu0 %v1188
    %2751 = vmatpush1.bf16.msra.mxu0 %v1187
    %2752 = vmatprep.subr.bf16.mxu0 %v1192
    %2753 = vmatpush1.bf16.msra.mxu0 %v1191
    %2754 = vmatprep.subr.bf16.mxu0 %v1196
    %2755 = vmatpush1.bf16.msra.mxu0 %v1195
    %2756 = vmatprep.mubr.bf16.mxu0 %v2600
    %2757 = vmatmul.mubr.bf16.gmra.mrb[0].mxu0 %v2599
    %v2758 = vpop.f32.mrb[0].mxu0
    %v2759 = vadd.f32 0.0, %v2758
    %v2760 = vpop.f32.mrb[0].mxu0
    %v2761 = vadd.f32 0.0, %v2760
    %v2762 = vpop.f32.mrb[0].mxu0
    %v2763 = vpop.f32.mrb[0].mxu0
    %2764 = vdwg.mxu0
    %s2765 = scalar_lea.vmem [#allocation2], 6
    %v2766 = vld [vmem:[%s2765] ss:$8 sm:$0xf]
    %v2771 = vcombine.low %v2636, %v2638
    %v2772 = vcombine.low %v2677, %v2679
    %v2774 = vunpack.c.l.s4 1966171168
    %v2775 = vunpack.c.0.s8 %v2774
    %v2776 = vlaneseq
    %v2777 = vshrl.u32 %v2776, 7
    %v2778 = vsub.s32 %v2775, %v2777
    %v2779 = vrot.slane %v2771, %v2778
    %v2781 = vunpack.c.l.s4 1966171168
    %v2782 = vunpack.c.0.s8 %v2781
    %v2783 = vlaneseq
    %v2784 = vshrl.u32 %v2783, 7
    %v2785 = vsub.s32 %v2782, %v2784
    %v2786 = vrot.slane %v2772, %v2785
    %v2787 = vcombine.low %v2779, %v2786
    %v2789 = vunpack.c.l.s4 1966171168
    %v2790 = vunpack.c.0.s8 %v2789
    %v2791 = vlaneseq
    %v2792 = vshrl.u32 %v2791, 7
    %v2793 = vsub.s32 %v2790, %v2792
    %v2794 = vrot.slane %v2787, %v2793
    %v2796 = vadd.f32 %v2766, %v2794
    %v2797 = vxor.u32 %v2796, 2147483648
    %v2798 = vmul.f32 %v2797, 1.442695
    %v2799 = vpow.pop %v2798
    %v2800 = vadd.f32 %v2799, 1.0
    %v2801 = vrcp.pop %v2800
    %v2802 = vmul.f32 1.0, %v2801
    %v2804 = vrot.slane %v2796, 3
    %v2806 = vtanh.pop %v2804
    %v2808 = vrot.slane %v2802, 1
    %v2810 = vmul.f32 %v2808, %v2544
    %v2811 = vmul.f32 %v2802, %v2806
    %v2812 = vadd.f32 %v2810, %v2811
    %v2813 = vtanh.pop %v2812
    %v2814 = vrot.slane %v2802, 2
    %v2816 = vmul.f32 %v2814, %v2813
    %v2821 = vcombine.low %v2718, %v2720
    %v2822 = vcombine.low %v2759, %v2761
    %v2824 = vunpack.c.l.s4 1966171168
    %v2825 = vunpack.c.0.s8 %v2824
    %v2826 = vlaneseq
    %v2827 = vshrl.u32 %v2826, 7
    %v2828 = vsub.s32 %v2825, %v2827
    %v2829 = vrot.slane %v2821, %v2828
    %v2831 = vunpack.c.l.s4 1966171168
    %v2832 = vunpack.c.0.s8 %v2831
    %v2833 = vlaneseq
    %v2834 = vshrl.u32 %v2833, 7
    %v2835 = vsub.s32 %v2832, %v2834
    %v2836 = vrot.slane %v2822, %v2835
    %v2837 = vcombine.low %v2829, %v2836
    %v2839 = vunpack.c.l.s4 1966171168
    %v2840 = vunpack.c.0.s8 %v2839
    %v2841 = vlaneseq
    %v2842 = vshrl.u32 %v2841, 7
    %v2843 = vsub.s32 %v2840, %v2842
    %v2844 = vrot.slane %v2837, %v2843
    %v2846 = vadd.f32 %v51, %v2844
    %v2847 = vxor.u32 %v2846, 2147483648
    %v2848 = vmul.f32 %v2847, 1.442695
    %v2849 = vpow.pop %v2848
    %v2850 = vadd.f32 %v2849, 1.0
    %v2851 = vrcp.pop %v2850
    %v2852 = vmul.f32 1.0, %v2851
    %v2854 = vrot.slane %v2846, 3
    %v2856 = vtanh.pop %v2854
    %v2858 = vrot.slane %v2852, 1
    %v2860 = vmul.f32 %v2858, %v2594
    %v2861 = vmul.f32 %v2852, %v2856
    %v2862 = vadd.f32 %v2860, %v2861
    %v2863 = vtanh.pop %v2862
    %v2864 = vrot.slane %v2852, 2
    %v2866 = vmul.f32 %v2864, %v2863
    %v2867 = vpack.c.bf16 %v2816, %v2816
    %v2868 = vpack.c.bf16 %v2866, %v2866
    %2869 = vmatprep.subr.bf16.mxu0 %v680
    %2870 = vmatpush1.bf16.msra.mxu0 %v679
    %2871 = vmatprep.subr.bf16.mxu0 %v684
    %2872 = vmatpush1.bf16.msra.mxu0 %v683
    %2873 = vmatprep.subr.bf16.mxu0 %v688
    %2874 = vmatpush1.bf16.msra.mxu0 %v687
    %2875 = vmatprep.subr.bf16.mxu0 %v692
    %2876 = vmatpush1.bf16.msra.mxu0 %v691
    %2877 = vmatprep.subr.bf16.mxu0 %v696
    %2878 = vmatpush1.bf16.msra.mxu0 %v695
    %2879 = vmatprep.subr.bf16.mxu0 %v700
    %2880 = vmatpush1.bf16.msra.mxu0 %v699
    %2881 = vmatprep.subr.bf16.mxu0 %v704
    %2882 = vmatpush1.bf16.msra.mxu0 %v703
    %2883 = vmatprep.subr.bf16.mxu0 %v708
    %2884 = vmatpush1.bf16.msra.mxu0 %v707
    %2885 = vmatprep.subr.bf16.mxu0 %v712
    %2886 = vmatpush1.bf16.msra.mxu0 %v711
    %2887 = vmatprep.subr.bf16.mxu0 %v716
    %2888 = vmatpush1.bf16.msra.mxu0 %v715
    %2889 = vmatprep.subr.bf16.mxu0 %v720
    %2890 = vmatpush1.bf16.msra.mxu0 %v719
    %2891 = vmatprep.subr.bf16.mxu0 %v724
    %2892 = vmatpush1.bf16.msra.mxu0 %v723
    %2893 = vmatprep.subr.bf16.mxu0 %v728
    %2894 = vmatpush1.bf16.msra.mxu0 %v727
    %2895 = vmatprep.subr.bf16.mxu0 %v732
    %2896 = vmatpush1.bf16.msra.mxu0 %v731
    %2897 = vmatprep.subr.bf16.mxu0 %v736
    %2898 = vmatpush1.bf16.msra.mxu0 %v735
    %2899 = vmatprep.subr.bf16.mxu0 %v740
    %2900 = vmatpush1.bf16.msra.mxu0 %v739
    %2901 = vmatprep.mubr.bf16.mxu0 %v2868
    %2902 = vmatmul.mubr.bf16.gmra.mrb[0].mxu0 %v2867
    %v2903 = vpop.f32.mrb[0].mxu0
    %v2904 = vadd.f32 0.0, %v2903
    %v2905 = vpop.f32.mrb[0].mxu0
    %v2906 = vadd.f32 0.0, %v2905
    %v2907 = vpop.f32.mrb[0].mxu0
    %v2908 = vpop.f32.mrb[0].mxu0
    %2909 = vdwg.mxu0
    %2910 = vmatprep.subr.bf16.mxu0 %v682
    %2911 = vmatpush1.bf16.msra.mxu0 %v681
    %2912 = vmatprep.subr.bf16.mxu0 %v686
    %2913 = vmatpush1.bf16.msra.mxu0 %v685
    %2914 = vmatprep.subr.bf16.mxu0 %v690
    %2915 = vmatpush1.bf16.msra.mxu0 %v689
    %2916 = vmatprep.subr.bf16.mxu0 %v694
    %2917 = vmatpush1.bf16.msra.mxu0 %v693
    %2918 = vmatprep.subr.bf16.mxu0 %v698
    %2919 = vmatpush1.bf16.msra.mxu0 %v697
    %2920 = vmatprep.subr.bf16.mxu0 %v702
    %2921 = vmatpush1.bf16.msra.mxu0 %v701
    %2922 = vmatprep.subr.bf16.mxu0 %v706
    %2923 = vmatpush1.bf16.msra.mxu0 %v705
    %2924 = vmatprep.subr.bf16.mxu0 %v710
    %2925 = vmatpush1.bf16.msra.mxu0 %v709
    %2926 = vmatprep.subr.bf16.mxu0 %v714
    %2927 = vmatpush1.bf16.msra.mxu0 %v713
    %2928 = vmatprep.subr.bf16.mxu0 %v718
    %2929 = vmatpush1.bf16.msra.mxu0 %v717
    %2930 = vmatprep.subr.bf16.mxu0 %v722
    %2931 = vmatpush1.bf16.msra.mxu0 %v721
    %2932 = vmatprep.subr.bf16.mxu0 %v726
    %2933 = vmatpush1.bf16.msra.mxu0 %v725
    %2934 = vmatprep.subr.bf16.mxu0 %v730
    %2935 = vmatpush1.bf16.msra.mxu0 %v729
    %2936 = vmatprep.subr.bf16.mxu0 %v734
    %2937 = vmatpush1.bf16.msra.mxu0 %v733
    %2938 = vmatprep.subr.bf16.mxu0 %v738
    %2939 = vmatpush1.bf16.msra.mxu0 %v737
    %2940 = vmatprep.subr.bf16.mxu0 %v742
    %2941 = vmatpush1.bf16.msra.mxu0 %v741
    %2942 = vmatprep.mubr.bf16.mxu0 %v2868
    %2943 = vmatmul.mubr.bf16.gmra.mrb[0].mxu0 %v2867
    %v2944 = vpop.f32.mrb[0].mxu0
    %v2945 = vadd.f32 0.0, %v2944
    %v2946 = vpop.f32.mrb[0].mxu0
    %v2947 = vadd.f32 0.0, %v2946
    %v2948 = vpop.f32.mrb[0].mxu0
    %v2949 = vpop.f32.mrb[0].mxu0
    %2950 = vdwg.mxu0
    %2951 = vmatprep.subr.bf16.mxu0 %v1134
    %2952 = vmatpush1.bf16.msra.mxu0 %v1133
    %2953 = vmatprep.subr.bf16.mxu0 %v1138
    %2954 = vmatpush1.bf16.msra.mxu0 %v1137
    %2955 = vmatprep.subr.bf16.mxu0 %v1142
    %2956 = vmatpush1.bf16.msra.mxu0 %v1141
    %2957 = vmatprep.subr.bf16.mxu0 %v1146
    %2958 = vmatpush1.bf16.msra.mxu0 %v1145
    %2959 = vmatprep.subr.bf16.mxu0 %v1150
    %2960 = vmatpush1.bf16.msra.mxu0 %v1149
    %2961 = vmatprep.subr.bf16.mxu0 %v1154
    %2962 = vmatpush1.bf16.msra.mxu0 %v1153
    %2963 = vmatprep.subr.bf16.mxu0 %v1158
    %2964 = vmatpush1.bf16.msra.mxu0 %v1157
    %2965 = vmatprep.subr.bf16.mxu0 %v1162
    %2966 = vmatpush1.bf16.msra.mxu0 %v1161
    %2967 = vmatprep.subr.bf16.mxu0 %v1166
    %2968 = vmatpush1.bf16.msra.mxu0 %v1165
    %2969 = vmatprep.subr.bf16.mxu0 %v1170
    %2970 = vmatpush1.bf16.msra.mxu0 %v1169
    %2971 = vmatprep.subr.bf16.mxu0 %v1174
    %2972 = vmatpush1.bf16.msra.mxu0 %v1173
    %2973 = vmatprep.subr.bf16.mxu0 %v1178
    %2974 = vmatpush1.bf16.msra.mxu0 %v1177
    %2975 = vmatprep.subr.bf16.mxu0 %v1182
    %2976 = vmatpush1.bf16.msra.mxu0 %v1181
    %2977 = vmatprep.subr.bf16.mxu0 %v1186
    %2978 = vmatpush1.bf16.msra.mxu0 %v1185
    %2979 = vmatprep.subr.bf16.mxu0 %v1190
    %2980 = vmatpush1.bf16.msra.mxu0 %v1189
    %2981 = vmatprep.subr.bf16.mxu0 %v1194
    %2982 = vmatpush1.bf16.msra.mxu0 %v1193
    %2983 = vmatprep.mubr.bf16.mxu0 %v2868
    %2984 = vmatmul.mubr.bf16.gmra.mrb[0].mxu0 %v2867
    %v2985 = vpop.f32.mrb[0].mxu0
    %v2986 = vadd.f32 0.0, %v2985
    %v2987 = vpop.f32.mrb[0].mxu0
    %v2988 = vadd.f32 0.0, %v2987
    %v2989 = vpop.f32.mrb[0].mxu0
    %v2990 = vpop.f32.mrb[0].mxu0
    %2991 = vdwg.mxu0
    %2992 = vmatprep.subr.bf16.mxu0 %v1136
    %2993 = vmatpush1.bf16.msra.mxu0 %v1135
    %2994 = vmatprep.subr.bf16.mxu0 %v1140
    %2995 = vmatpush1.bf16.msra.mxu0 %v1139
    %2996 = vmatprep.subr.bf16.mxu0 %v1144
    %2997 = vmatpush1.bf16.msra.mxu0 %v1143
    %2998 = vmatprep.subr.bf16.mxu0 %v1148
    %2999 = vmatpush1.bf16.msra.mxu0 %v1147
    %3000 = vmatprep.subr.bf16.mxu0 %v1152
    %3001 = vmatpush1.bf16.msra.mxu0 %v1151
    %3002 = vmatprep.subr.bf16.mxu0 %v1156
    %3003 = vmatpush1.bf16.msra.mxu0 %v1155
    %3004 = vmatprep.subr.bf16.mxu0 %v1160
    %3005 = vmatpush1.bf16.msra.mxu0 %v1159
    %3006 = vmatprep.subr.bf16.mxu0 %v1164
    %3007 = vmatpush1.bf16.msra.mxu0 %v1163
    %3008 = vmatprep.subr.bf16.mxu0 %v1168
    %3009 = vmatpush1.bf16.msra.mxu0 %v1167
    %3010 = vmatprep.subr.bf16.mxu0 %v1172
    %3011 = vmatpush1.bf16.msra.mxu0 %v1171
    %3012 = vmatprep.subr.bf16.mxu0 %v1176
    %3013 = vmatpush1.bf16.msra.mxu0 %v1175
    %3014 = vmatprep.subr.bf16.mxu0 %v1180
    %3015 = vmatpush1.bf16.msra.mxu0 %v1179
    %3016 = vmatprep.subr.bf16.mxu0 %v1184
    %3017 = vmatpush1.bf16.msra.mxu0 %v1183
    %3018 = vmatprep.subr.bf16.mxu0 %v1188
    %3019 = vmatpush1.bf16.msra.mxu0 %v1187
    %3020 = vmatprep.subr.bf16.mxu0 %v1192
    %3021 = vmatpush1.bf16.msra.mxu0 %v1191
    %3022 = vmatprep.subr.bf16.mxu0 %v1196
    %3023 = vmatpush1.bf16.msra.mxu0 %v1195
    %3024 = vmatprep.mubr.bf16.mxu0 %v2868
    %3025 = vmatmul.mubr.bf16.gmra.mrb[0].mxu0 %v2867
    %v3026 = vpop.f32.mrb[0].mxu0
    %v3027 = vadd.f32 0.0, %v3026
    %v3028 = vpop.f32.mrb[0].mxu0
    %v3029 = vadd.f32 0.0, %v3028
    %v3030 = vpop.f32.mrb[0].mxu0
    %v3031 = vpop.f32.mrb[0].mxu0
    %3032 = vdwg.mxu0
    %s3033 = scalar_lea.vmem [#allocation2], 7
    %v3034 = vld [vmem:[%s3033] ss:$8 sm:$0xf]
    %v3039 = vcombine.low %v2904, %v2906
    %v3040 = vcombine.low %v2945, %v2947
    %v3042 = vunpack.c.l.s4 1966171168
    %v3043 = vunpack.c.0.s8 %v3042
    %v3044 = vlaneseq
    %v3045 = vshrl.u32 %v3044, 7
    %v3046 = vsub.s32 %v3043, %v3045
    %v3047 = vrot.slane %v3039, %v3046
    %v3049 = vunpack.c.l.s4 1966171168
    %v3050 = vunpack.c.0.s8 %v3049
    %v3051 = vlaneseq
    %v3052 = vshrl.u32 %v3051, 7
    %v3053 = vsub.s32 %v3050, %v3052
    %v3054 = vrot.slane %v3040, %v3053
    %v3055 = vcombine.low %v3047, %v3054
    %v3057 = vunpack.c.l.s4 1966171168
    %v3058 = vunpack.c.0.s8 %v3057
    %v3059 = vlaneseq
    %v3060 = vshrl.u32 %v3059, 7
    %v3061 = vsub.s32 %v3058, %v3060
    %v3062 = vrot.slane %v3055, %v3061
    %v3064 = vadd.f32 %v3034, %v3062
    %v3065 = vxor.u32 %v3064, 2147483648
    %v3066 = vmul.f32 %v3065, 1.442695
    %v3067 = vpow.pop %v3066
    %v3068 = vadd.f32 %v3067, 1.0
    %v3069 = vrcp.pop %v3068
    %v3070 = vmul.f32 1.0, %v3069
    %v3072 = vrot.slane %v3064, 3
    %v3074 = vtanh.pop %v3072
    %v3076 = vrot.slane %v3070, 1
    %v3078 = vmul.f32 %v3076, %v2812
    %v3079 = vmul.f32 %v3070, %v3074
    %v3080 = vadd.f32 %v3078, %v3079
    %v3081 = vtanh.pop %v3080
    %v3082 = vrot.slane %v3070, 2
    %v3084 = vmul.f32 %v3082, %v3081
    %v3089 = vcombine.low %v2986, %v2988
    %v3090 = vcombine.low %v3027, %v3029
    %v3092 = vunpack.c.l.s4 1966171168
    %v3093 = vunpack.c.0.s8 %v3092
    %v3094 = vlaneseq
    %v3095 = vshrl.u32 %v3094, 7
    %v3096 = vsub.s32 %v3093, %v3095
    %v3097 = vrot.slane %v3089, %v3096
    %v3099 = vunpack.c.l.s4 1966171168
    %v3100 = vunpack.c.0.s8 %v3099
    %v3101 = vlaneseq
    %v3102 = vshrl.u32 %v3101, 7
    %v3103 = vsub.s32 %v3100, %v3102
    %v3104 = vrot.slane %v3090, %v3103
    %v3105 = vcombine.low %v3097, %v3104
    %v3107 = vunpack.c.l.s4 1966171168
    %v3108 = vunpack.c.0.s8 %v3107
    %v3109 = vlaneseq
    %v3110 = vshrl.u32 %v3109, 7
    %v3111 = vsub.s32 %v3108, %v3110
    %v3112 = vrot.slane %v3105, %v3111
    %v3114 = vadd.f32 %v51, %v3112
    %v3115 = vxor.u32 %v3114, 2147483648
    %v3116 = vmul.f32 %v3115, 1.442695
    %v3117 = vpow.pop %v3116
    %v3118 = vadd.f32 %v3117, 1.0
    %v3119 = vrcp.pop %v3118
    %v3120 = vmul.f32 1.0, %v3119
    %v3122 = vrot.slane %v3114, 3
    %v3124 = vtanh.pop %v3122
    %v3126 = vrot.slane %v3120, 1
    %v3128 = vmul.f32 %v3126, %v2862
    %v3129 = vmul.f32 %v3120, %v3124
    %v3130 = vadd.f32 %v3128, %v3129
    %v3131 = vtanh.pop %v3130
    %v3132 = vrot.slane %v3120, 2
    %v3134 = vmul.f32 %v3132, %v3131
    %v3135 = vpack.c.bf16 %v3084, %v3084
    %v3136 = vpack.c.bf16 %v3134, %v3134
    %3137 = vmatprep.subr.bf16.mxu0 %v1134
    %3138 = vmatpush1.bf16.msra.mxu0 %v1133
    %3139 = vmatprep.subr.bf16.mxu0 %v1138
    %3140 = vmatpush1.bf16.msra.mxu0 %v1137
    %3141 = vmatprep.subr.bf16.mxu0 %v1142
    %3142 = vmatpush1.bf16.msra.mxu0 %v1141
    %3143 = vmatprep.subr.bf16.mxu0 %v1146
    %3144 = vmatpush1.bf16.msra.mxu0 %v1145
    %3145 = vmatprep.subr.bf16.mxu0 %v1150
    %3146 = vmatpush1.bf16.msra.mxu0 %v1149
    %3147 = vmatprep.subr.bf16.mxu0 %v1154
    %3148 = vmatpush1.bf16.msra.mxu0 %v1153
    %3149 = vmatprep.subr.bf16.mxu0 %v1158
    %3150 = vmatpush1.bf16.msra.mxu0 %v1157
    %3151 = vmatprep.subr.bf16.mxu0 %v1162
    %3152 = vmatpush1.bf16.msra.mxu0 %v1161
    %3153 = vmatprep.subr.bf16.mxu0 %v1166
    %3154 = vmatpush1.bf16.msra.mxu0 %v1165
    %3155 = vmatprep.subr.bf16.mxu0 %v1170
    %3156 = vmatpush1.bf16.msra.mxu0 %v1169
    %3157 = vmatprep.subr.bf16.mxu0 %v1174
    %3158 = vmatpush1.bf16.msra.mxu0 %v1173
    %3159 = vmatprep.subr.bf16.mxu0 %v1178
    %3160 = vmatpush1.bf16.msra.mxu0 %v1177
    %3161 = vmatprep.subr.bf16.mxu0 %v1182
    %3162 = vmatpush1.bf16.msra.mxu0 %v1181
    %3163 = vmatprep.subr.bf16.mxu0 %v1186
    %3164 = vmatpush1.bf16.msra.mxu0 %v1185
    %3165 = vmatprep.subr.bf16.mxu0 %v1190
    %3166 = vmatpush1.bf16.msra.mxu0 %v1189
    %3167 = vmatprep.subr.bf16.mxu0 %v1194
    %3168 = vmatpush1.bf16.msra.mxu0 %v1193
    %3169 = vmatprep.mubr.bf16.mxu0 %v3136
    %3170 = vmatmul.mubr.bf16.gmra.mrb[0].mxu0 %v3135
    %v3171 = vpop.f32.mrb[0].mxu0
    %v3172 = vadd.f32 0.0, %v3171
    %v3173 = vpop.f32.mrb[0].mxu0
    %v3174 = vadd.f32 0.0, %v3173
    %v3175 = vpop.f32.mrb[0].mxu0
    %v3176 = vpop.f32.mrb[0].mxu0
    %3177 = vdwg.mxu0
    %3178 = vmatprep.subr.bf16.mxu0 %v1136
    %3179 = vmatpush1.bf16.msra.mxu0 %v1135
    %3180 = vmatprep.subr.bf16.mxu0 %v1140
    %3181 = vmatpush1.bf16.msra.mxu0 %v1139
    %3182 = vmatprep.subr.bf16.mxu0 %v1144
    %3183 = vmatpush1.bf16.msra.mxu0 %v1143
    %3184 = vmatprep.subr.bf16.mxu0 %v1148
    %3185 = vmatpush1.bf16.msra.mxu0 %v1147
    %3186 = vmatprep.subr.bf16.mxu0 %v1152
    %3187 = vmatpush1.bf16.msra.mxu0 %v1151
    %3188 = vmatprep.subr.bf16.mxu0 %v1156
    %3189 = vmatpush1.bf16.msra.mxu0 %v1155
    %3190 = vmatprep.subr.bf16.mxu0 %v1160
    %3191 = vmatpush1.bf16.msra.mxu0 %v1159
    %3192 = vmatprep.subr.bf16.mxu0 %v1164
    %3193 = vmatpush1.bf16.msra.mxu0 %v1163
    %3194 = vmatprep.subr.bf16.mxu0 %v1168
    %3195 = vmatpush1.bf16.msra.mxu0 %v1167
    %3196 = vmatprep.subr.bf16.mxu0 %v1172
    %3197 = vmatpush1.bf16.msra.mxu0 %v1171
    %3198 = vmatprep.subr.bf16.mxu0 %v1176
    %3199 = vmatpush1.bf16.msra.mxu0 %v1175
    %3200 = vmatprep.subr.bf16.mxu0 %v1180
    %3201 = vmatpush1.bf16.msra.mxu0 %v1179
    %3202 = vmatprep.subr.bf16.mxu0 %v1184
    %3203 = vmatpush1.bf16.msra.mxu0 %v1183
    %3204 = vmatprep.subr.bf16.mxu0 %v1188
    %3205 = vmatpush1.bf16.msra.mxu0 %v1187
    %3206 = vmatprep.subr.bf16.mxu0 %v1192
    %3207 = vmatpush1.bf16.msra.mxu0 %v1191
    %3208 = vmatprep.subr.bf16.mxu0 %v1196
    %3209 = vmatpush1.bf16.msra.mxu0 %v1195
    %3210 = vmatprep.mubr.bf16.mxu0 %v3136
    %3211 = vmatmul.mubr.bf16.gmra.mrb[0].mxu0 %v3135
    %v3212 = vpop.f32.mrb[0].mxu0
    %v3213 = vadd.f32 0.0, %v3212
    %v3214 = vpop.f32.mrb[0].mxu0
    %v3215 = vadd.f32 0.0, %v3214
    %v3216 = vpop.f32.mrb[0].mxu0
    %v3217 = vpop.f32.mrb[0].mxu0
    %3218 = vdwg.mxu0
    %v3223 = vcombine.low %v3172, %v3174
    %v3224 = vcombine.low %v3213, %v3215
    %v3226 = vunpack.c.l.s4 1966171168
    %v3227 = vunpack.c.0.s8 %v3226
    %v3228 = vlaneseq
    %v3229 = vshrl.u32 %v3228, 7
    %v3230 = vsub.s32 %v3227, %v3229
    %v3231 = vrot.slane %v3223, %v3230
    %v3233 = vunpack.c.l.s4 1966171168
    %v3234 = vunpack.c.0.s8 %v3233
    %v3235 = vlaneseq
    %v3236 = vshrl.u32 %v3235, 7
    %v3237 = vsub.s32 %v3234, %v3236
    %v3238 = vrot.slane %v3224, %v3237
    %v3239 = vcombine.low %v3231, %v3238
    %v3241 = vunpack.c.l.s4 1966171168
    %v3242 = vunpack.c.0.s8 %v3241
    %v3243 = vlaneseq
    %v3244 = vshrl.u32 %v3243, 7
    %v3245 = vsub.s32 %v3242, %v3244
    %v3246 = vrot.slane %v3239, %v3245
    %v3248 = vadd.f32 %v51, %v3246
    %v3249 = vxor.u32 %v3248, 2147483648
    %v3250 = vmul.f32 %v3249, 1.442695
    %v3251 = vpow.pop %v3250
    %v3252 = vadd.f32 %v3251, 1.0
    %v3253 = vrcp.pop %v3252
    %v3254 = vmul.f32 1.0, %v3253
    %v3256 = vrot.slane %v3248, 3
    %v3258 = vtanh.pop %v3256
    %v3260 = vrot.slane %v3254, 1
    %v3262 = vmul.f32 %v3260, %v3130
    %v3263 = vmul.f32 %v3254, %v3258
    %v3264 = vadd.f32 %v3262, %v3263
    %v3265 = vtanh.pop %v3264
    %v3266 = vrot.slane %v3254, 2
    %v3268 = vmul.f32 %v3266, %v3265
    %v3269 = vpack.c.bf16 %v3268, %v3268
    %v3270 = vld [vmem:[#allocation3 + $0x10] sm:$0xf]
    %v3271 = vld [vmem:[#allocation3 + $0x24] sm:$0xf]
    %v3272 = vld [vmem:[#allocation3 + $0x38] sm:$0xf]
    %v3273 = vld [vmem:[#allocation3 + $0x4c] sm:$0xf]
    %v3274 = vld [vmem:[#allocation3 + $0x60] sm:$0xf]
    %v3275 = vld [vmem:[#allocation3 + $0x74] sm:$0xf]
    %v3276 = vld [vmem:[#allocation3 + $0x88] sm:$0xf]
    %v3277 = vld [vmem:[#allocation3 + $0x9c] sm:$0xf]
    %v3278 = vld [vmem:[#allocation3 + $0xb0] sm:$0xf]
    %v3279 = vld [vmem:[#allocation3 + $0xc4] sm:$0xf]
    %v3280 = vld [vmem:[#allocation3 + $0xd8] sm:$0xf]
    %v3281 = vld [vmem:[#allocation3 + $0xec] sm:$0xf]
    %v3282 = vld [vmem:[#allocation3 + $0x100] sm:$0xf]
    %v3283 = vld [vmem:[#allocation3 + $0x114] sm:$0xf]
    %v3284 = vld [vmem:[#allocation3 + $0x128] sm:$0xf]
    %v3285 = vld [vmem:[#allocation3 + $0x13c] sm:$0xf]
    %v3286 = vld [vmem:[%s3 + $0x2] sm:$0x1]
    %v3303 = vunpack.c.l.b16 %v3270
    %v3304 = vunpack.c.l.b16 %v3271
    %v3305 = vunpack.c.l.b16 %v3272
    %v3306 = vunpack.c.l.b16 %v3273
    %v3307 = vunpack.c.l.b16 %v3274
    %v3308 = vunpack.c.l.b16 %v3275
    %v3309 = vunpack.c.l.b16 %v3276
    %v3310 = vunpack.c.l.b16 %v3277
    %v3311 = vunpack.c.l.b16 %v3278
    %v3312 = vunpack.c.l.b16 %v3279
    %v3313 = vunpack.c.l.b16 %v3280
    %v3314 = vunpack.c.l.b16 %v3281
    %v3315 = vunpack.c.l.b16 %v3282
    %v3316 = vunpack.c.l.b16 %v3283
    %v3317 = vunpack.c.l.b16 %v3284
    %v3318 = vunpack.c.l.b16 %v3285
    %v3319 = vpack.c.b16 %v3304, %v3303
    %v3320 = vpack.c.b16 %v3306, %v3305
    %v3321 = vpack.c.b16 %v3308, %v3307
    %v3322 = vpack.c.b16 %v3310, %v3309
    %v3323 = vpack.c.b16 %v3312, %v3311
    %v3324 = vpack.c.b16 %v3314, %v3313
    %v3325 = vpack.c.b16 %v3316, %v3315
    %v3326 = vpack.c.b16 %v3318, %v3317
    %3335 = vmatprep.subr.bf16.mxu0 0
    %3336 = vmatpush1.bf16.msra.mxu0 %v3319
    %3337 = vmatprep.subr.bf16.mxu0 0
    %3338 = vmatpush1.bf16.msra.mxu0 %v3320
    %3339 = vmatprep.subr.bf16.mxu0 0
    %3340 = vmatpush1.bf16.msra.mxu0 %v3321
    %3341 = vmatprep.subr.bf16.mxu0 0
    %3342 = vmatpush1.bf16.msra.mxu0 %v3322
    %3343 = vmatprep.subr.bf16.mxu0 0
    %3344 = vmatpush1.bf16.msra.mxu0 %v3323
    %3345 = vmatprep.subr.bf16.mxu0 0
    %3346 = vmatpush1.bf16.msra.mxu0 %v3324
    %3347 = vmatprep.subr.bf16.mxu0 0
    %3348 = vmatpush1.bf16.msra.mxu0 %v3325
    %3349 = vmatprep.subr.bf16.mxu0 0
    %3350 = vmatpush1.bf16.msra.mxu0 %v3326
    %3351 = vmatprep.subr.bf16.mxu0 0
    %3352 = vmatpush1.bf16.msra.mxu0 0
    %3353 = vmatprep.subr.bf16.mxu0 0
    %3354 = vmatpush1.bf16.msra.mxu0 0
    %3355 = vmatprep.subr.bf16.mxu0 0
    %3356 = vmatpush1.bf16.msra.mxu0 0
    %3357 = vmatprep.subr.bf16.mxu0 0
    %3358 = vmatpush1.bf16.msra.mxu0 0
    %3359 = vmatprep.subr.bf16.mxu0 0
    %3360 = vmatpush1.bf16.msra.mxu0 0
    %3361 = vmatprep.subr.bf16.mxu0 0
    %3362 = vmatpush1.bf16.msra.mxu0 0
    %3363 = vmatprep.subr.bf16.mxu0 0
    %3364 = vmatpush1.bf16.msra.mxu0 0
    %3365 = vmatprep.subr.bf16.mxu0 0
    %3366 = vmatpush1.bf16.msra.mxu0 0
    %3367 = vmatprep.mubr.bf16.mxu0 0
    %3368 = vmatmul.mubr.bf16.gmra.mrb[0].mxu0 %v3269
    %v3369 = vpop.f32.mrb[0].mxu0
    %v3370 = vadd.f32 %v3286, %v3369
    %v3371 = vpop.f32.mrb[0].mxu0
    %v3372 = vpop.f32.mrb[0].mxu0
    %v3373 = vpop.f32.mrb[0].mxu0
    %3374 = vdwg.mxu0
    %3375 = vst [vmem:[%s5] sm:$0x1] %v3370
    // Predicated region
    $region30: #{lstm_forward.1} parent=1 // pred_check
      _
    $region31: #{lstm_forward.1} parent=1 // pred_check_branch
      %3377 = sbr.rel (0) target = $region33
    $region32: #{lstm_forward.1} parent=1 // pred_region
      _
    $region33: #{lstm_forward.1} parent=1 // pred_fallthru
      _
    // Predicated region
    $region34: #{lstm_forward.1} parent=1 // pred_check
      _
    $region35: #{lstm_forward.1} parent=1 // pred_check_branch
      %3379 = sbr.rel (0) target = $region37
    $region36: #{lstm_forward.1} parent=1 // pred_region
      _
    $region37: #{lstm_forward.1} parent=1 // pred_fallthru
      _
    %3380 = vsyncpa [#allocation4], 1
    %3381 = vsyncpa [#allocation6], 1

</llo_original>
